<compile_context>
chip_gen: v6e
topology: v6e:2x2x1
jax: 0.10.0
libtpu: 0.0.40
codegen_flags: <defaults>
</compile_context>

<pallas_src>
import jax
import jax.numpy as jnp
from jax import lax
from jax.experimental import pallas as pl
from jax.experimental.pallas import tpu as pltpu


def _mlp_kernel(x_ref,
                w1_ref, b1_ref,
                w2_ref, b2_ref,
                w3_ref, b3_ref,
                w4_ref, b4_ref,
                w5t_ref, b5_ref,
                out_ref):
    """One batch-tile of the forward pass; weights are VMEM-resident bf16,
    accumulation is f32 on the MXU, bias+ReLU on the VPU."""
    h = jnp.dot(x_ref[...].astype(jnp.bfloat16), w1_ref[...],
                preferred_element_type=jnp.float32)
    h = jnp.maximum(h + b1_ref[...], 0.0)

    h = jnp.dot(h.astype(jnp.bfloat16), w2_ref[...],
                preferred_element_type=jnp.float32)
    h = jnp.maximum(h + b2_ref[...], 0.0)

    h = jnp.dot(h.astype(jnp.bfloat16), w3_ref[...],
                preferred_element_type=jnp.float32)
    h = jnp.maximum(h + b3_ref[...], 0.0)

    h = jnp.dot(h.astype(jnp.bfloat16), w4_ref[...],
                preferred_element_type=jnp.float32)
    h = jnp.maximum(h + b4_ref[...], 0.0)

    w5t = w5t_ref[...]                      # (out_dim, 32), f32
    if w5t.shape[0] == 1:
        # Value head with a single output: VPU multiply + cross-lane reduce,
        # no padded MXU pass.
        v = jnp.sum(h * w5t, axis=-1, keepdims=True)
    else:
        # General head: h @ w5t.T via dot_general (MXU handles trans_b).
        v = lax.dot_general(h, w5t, (((1,), (1,)), ((), ())),
                            preferred_element_type=jnp.float32)
    out_ref[...] = (v + b5_ref[...]).astype(out_ref.dtype)


def net_forward(x, kparams, *, block_b=128):
    """Pallas forward pass of Net.

    x: (B, state_dim) f32.
    kparams: output of prepare_params() — bf16 hidden weights, f32 biases,
             transposed f32 head weight `w5t` of shape (out_dim, 32).
    """
    B, state_dim = x.shape
    out_dim = kparams["b5"].shape[1]

    # Tile the batch; keep whole-array blocks along every feature dim.
    TB = block_b if (B >= block_b and B % block_b == 0) else B
    grid = (pl.cdiv(B, TB),)

    def _batch_map(i):
        return (i, 0)

    def _const_map(i):
        return (0, 0)

    args = (
        x,
        kparams["w1"], kparams["b1"],
        kparams["w2"], kparams["b2"],
        kparams["w3"], kparams["b3"],
        kparams["w4"], kparams["b4"],
        kparams["w5t"], kparams["b5"],
    )

    in_specs = [pl.BlockSpec((TB, state_dim), _batch_map)]
    for a in args[1:]:
        # Weights / biases: whole array, constant block index -> fetched once,
        # held resident in VMEM across all batch tiles.
        in_specs.append(pl.BlockSpec(a.shape, _const_map))

    out_specs = pl.BlockSpec((TB, out_dim), _batch_map)

    return pl.pallas_call(
        _mlp_kernel,
        out_shape=jax.ShapeDtypeStruct((B, out_dim), jnp.float32),
        grid=grid,
        in_specs=in_specs,
        out_specs=out_specs,
        compiler_params=pltpu.CompilerParams(
            dimension_semantics=("parallel",)),
    )(*args)


def init_params(key, state_dim, output_dim):
    """Deterministic synthetic init mirroring Net.__init__ shapes (f32 master).

    PyTorch stores Linear weight as (out, in); we keep the transposed (in, out)
    layout so the kernel computes y = x @ W + b. Hidden weights ~ N(0, 0.01)
    as in the module.
    """
    dims = [state_dim, 1024, 512, 128, 32, output_dim]
    params = {}
    for i in range(5):
        key, kw, kb = jax.random.split(key, 3)
        fan_in, fan_out = dims[i], dims[i + 1]
        params[f"w{i+1}"] = (0.01 * jax.random.normal(kw, (fan_in, fan_out))
                             ).astype(jnp.float32)
        params[f"b{i+1}"] = (0.01 * jax.random.normal(kb, (1, fan_out))
                             ).astype(jnp.float32)
    return params


def prepare_params(params):
    """Convert f32 master params into the kernel's storage layout:
    bf16 hidden weights (w1..w4), f32 biases, f32 head weight transposed to
    (out_dim, 32) so the kernel never needs an in-kernel transpose."""
    kp = {}
    for i in range(1, 5):
        kp[f"w{i}"] = params[f"w{i}"].astype(jnp.bfloat16)
        kp[f"b{i}"] = params[f"b{i}"].astype(jnp.float32)
    kp["w5t"] = jnp.transpose(params["w5"]).astype(jnp.float32)  # (out_dim, 32)
    kp["b5"] = params["b5"].astype(jnp.float32)
    return kp


def net_forward_ref(x, params):
    """Pure-JAX f32 reference for correctness checking."""
    h = x
    for i in range(1, 5):
        h = jnp.maximum(h @ params[f"w{i}"] + params[f"b{i}"], 0.0)
    return h @ params["w5"] + params["b5"]


if __name__ == "__main__":
    # Small shapes consistent with the module (hidden widths fixed by Net:
    # 1024/512/128/32).  Batch raised to 256 so the batch-tiled grid and
    # VMEM-resident weights actually exercise the intended pipeline.
    BATCH = 256
    STATE_DIM = 256   # args.state_dim (kept small for this synthetic run)
    OUTPUT_DIM = 1    # args.output_dim default

    key = jax.random.PRNGKey(0)
    key, kx = jax.random.split(key)
    x = jax.random.normal(kx, (BATCH, STATE_DIM), dtype=jnp.float32)
    params = init_params(key, STATE_DIM, OUTPUT_DIM)
    kparams = prepare_params(params)

    value = net_forward(x, kparams)
    value = jax.block_until_ready(value)

    ref = net_forward_ref(x, params)
    assert value.shape == (BATCH, OUTPUT_DIM)
    # bf16 weights / activations (f32 accumulation) vs f32 reference:
    # tolerance relaxed accordingly.
    assert jnp.allclose(value, ref, atol=1e-2, rtol=1e-2), (
        float(jnp.max(jnp.abs(value - ref))))

    print("KERNEL_OK")
</pallas_src>

<mosaic_0001>
module attributes {stable_mosaic.version = 11 : i64} {
  func.func @_mlp_kernel(%arg0: i32, %arg1: memref<128x256xf32, #tpu.memory_space<vmem>>, %arg2: memref<256x1024xbf16, #tpu.memory_space<vmem>>, %arg3: memref<1x1024xf32, #tpu.memory_space<vmem>>, %arg4: memref<1024x512xbf16, #tpu.memory_space<vmem>>, %arg5: memref<1x512xf32, #tpu.memory_space<vmem>>, %arg6: memref<512x128xbf16, #tpu.memory_space<vmem>>, %arg7: memref<1x128xf32, #tpu.memory_space<vmem>>, %arg8: memref<128x32xbf16, #tpu.memory_space<vmem>>, %arg9: memref<1x32xf32, #tpu.memory_space<vmem>>, %arg10: memref<1x32xf32, #tpu.memory_space<vmem>>, %arg11: memref<1x1xf32, #tpu.memory_space<vmem>>, %arg12: memref<128x1xf32, #tpu.memory_space<vmem>>) attributes {dimension_semantics = [#tpu.dimension_semantics<parallel>], iteration_bounds = array<i64: 2>, scalar_prefetch = 0 : i64, scratch_operands = 0 : i64, tpu.core_type = #tpu.core_type<tc>, window_params = [{transform_indices = @transform_0, window_bounds = array<i64: 128, 256>}, {pipeline_mode = #tpu.pipeline_mode<synchronous>, transform_indices = @transform_1, window_bounds = array<i64: 256, 1024>}, {pipeline_mode = #tpu.pipeline_mode<synchronous>, transform_indices = @transform_2, window_bounds = array<i64: 1, 1024>}, {pipeline_mode = #tpu.pipeline_mode<synchronous>, transform_indices = @transform_3, window_bounds = array<i64: 1024, 512>}, {pipeline_mode = #tpu.pipeline_mode<synchronous>, transform_indices = @transform_4, window_bounds = array<i64: 1, 512>}, {pipeline_mode = #tpu.pipeline_mode<synchronous>, transform_indices = @transform_5, window_bounds = array<i64: 512, 128>}, {pipeline_mode = #tpu.pipeline_mode<synchronous>, transform_indices = @transform_6, window_bounds = array<i64: 1, 128>}, {pipeline_mode = #tpu.pipeline_mode<synchronous>, transform_indices = @transform_7, window_bounds = array<i64: 128, 32>}, {pipeline_mode = #tpu.pipeline_mode<synchronous>, transform_indices = @transform_8, window_bounds = array<i64: 1, 32>}, {pipeline_mode = #tpu.pipeline_mode<synchronous>, transform_indices = @transform_9, window_bounds = array<i64: 1, 32>}, {pipeline_mode = #tpu.pipeline_mode<synchronous>, transform_indices = @transform_10, window_bounds = array<i64: 1, 1>}, {transform_indices = @transform_11, window_bounds = array<i64: 128, 1>}]} {
    %c0 = arith.constant 0 : index
    %c0_0 = arith.constant 0 : index
    %0 = vector.load %arg1[%c0, %c0_0] : memref<128x256xf32, #tpu.memory_space<vmem>>, vector<128x256xf32>
    %1 = arith.truncf %0 : vector<128x256xf32> to vector<128x256xbf16>
    %c0_1 = arith.constant 0 : index
    %c0_2 = arith.constant 0 : index
    %2 = vector.load %arg2[%c0_1, %c0_2] : memref<256x1024xbf16, #tpu.memory_space<vmem>>, vector<256x1024xbf16>
    %cst = arith.constant dense<0.000000e+00> : vector<128x1024xf32>
    %3 = tpu.matmul %1, %2, %cst {dimension_numbers = #tpu.dot_dimension_numbers<[1], [0], [0], [1], [0, 0, 1, 1], [], []>} : vector<128x256xbf16>, vector<256x1024xbf16>, vector<128x1024xf32> -> vector<128x1024xf32>
    %c0_3 = arith.constant 0 : index
    %c0_4 = arith.constant 0 : index
    %4 = vector.load %arg3[%c0_3, %c0_4] : memref<1x1024xf32, #tpu.memory_space<vmem>>, vector<1x1024xf32>
    %5 = vector.broadcast %4 : vector<1x1024xf32> to vector<128x1024xf32>
    %6 = arith.addf %3, %5 : vector<128x1024xf32>
    %cst_5 = arith.constant 0.000000e+00 : f32
    %7 = vector.broadcast %cst_5 : f32 to vector<128x1024xf32>
    %8 = arith.maximumf %6, %7 : vector<128x1024xf32>
    %9 = arith.truncf %8 : vector<128x1024xf32> to vector<128x1024xbf16>
    %c0_6 = arith.constant 0 : index
    %c0_7 = arith.constant 0 : index
    %10 = vector.load %arg4[%c0_6, %c0_7] : memref<1024x512xbf16, #tpu.memory_space<vmem>>, vector<1024x512xbf16>
    %cst_8 = arith.constant dense<0.000000e+00> : vector<128x512xf32>
    %11 = tpu.matmul %9, %10, %cst_8 {dimension_numbers = #tpu.dot_dimension_numbers<[1], [0], [0], [1], [0, 0, 1, 1], [], []>} : vector<128x1024xbf16>, vector<1024x512xbf16>, vector<128x512xf32> -> vector<128x512xf32>
    %c0_9 = arith.constant 0 : index
    %c0_10 = arith.constant 0 : index
    %12 = vector.load %arg5[%c0_9, %c0_10] : memref<1x512xf32, #tpu.memory_space<vmem>>, vector<1x512xf32>
    %13 = vector.broadcast %12 : vector<1x512xf32> to vector<128x512xf32>
    %14 = arith.addf %11, %13 : vector<128x512xf32>
    %cst_11 = arith.constant 0.000000e+00 : f32
    %15 = vector.broadcast %cst_11 : f32 to vector<128x512xf32>
    %16 = arith.maximumf %14, %15 : vector<128x512xf32>
    %17 = arith.truncf %16 : vector<128x512xf32> to vector<128x512xbf16>
    %c0_12 = arith.constant 0 : index
    %c0_13 = arith.constant 0 : index
    %18 = vector.load %arg6[%c0_12, %c0_13] : memref<512x128xbf16, #tpu.memory_space<vmem>>, vector<512x128xbf16>
    %cst_14 = arith.constant dense<0.000000e+00> : vector<128x128xf32>
    %19 = tpu.matmul %17, %18, %cst_14 {dimension_numbers = #tpu.dot_dimension_numbers<[1], [0], [0], [1], [0, 0, 1, 1], [], []>} : vector<128x512xbf16>, vector<512x128xbf16>, vector<128x128xf32> -> vector<128x128xf32>
    %c0_15 = arith.constant 0 : index
    %c0_16 = arith.constant 0 : index
    %20 = vector.load %arg7[%c0_15, %c0_16] : memref<1x128xf32, #tpu.memory_space<vmem>>, vector<1x128xf32>
    %21 = vector.broadcast %20 : vector<1x128xf32> to vector<128x128xf32>
    %22 = arith.addf %19, %21 : vector<128x128xf32>
    %cst_17 = arith.constant 0.000000e+00 : f32
    %23 = vector.broadcast %cst_17 : f32 to vector<128x128xf32>
    %24 = arith.maximumf %22, %23 : vector<128x128xf32>
    %25 = arith.truncf %24 : vector<128x128xf32> to vector<128x128xbf16>
    %c0_18 = arith.constant 0 : index
    %c0_19 = arith.constant 0 : index
    %26 = vector.load %arg8[%c0_18, %c0_19] : memref<128x32xbf16, #tpu.memory_space<vmem>>, vector<128x32xbf16>
    %cst_20 = arith.constant dense<0.000000e+00> : vector<128x32xf32>
    %27 = tpu.matmul %25, %26, %cst_20 {dimension_numbers = #tpu.dot_dimension_numbers<[1], [0], [0], [1], [0, 0, 1, 1], [], []>} : vector<128x128xbf16>, vector<128x32xbf16>, vector<128x32xf32> -> vector<128x32xf32>
    %c0_21 = arith.constant 0 : index
    %c0_22 = arith.constant 0 : index
    %28 = vector.load %arg9[%c0_21, %c0_22] : memref<1x32xf32, #tpu.memory_space<vmem>>, vector<1x32xf32>
    %29 = vector.broadcast %28 : vector<1x32xf32> to vector<128x32xf32>
    %30 = arith.addf %27, %29 : vector<128x32xf32>
    %cst_23 = arith.constant 0.000000e+00 : f32
    %31 = vector.broadcast %cst_23 : f32 to vector<128x32xf32>
    %32 = arith.maximumf %30, %31 : vector<128x32xf32>
    %c0_24 = arith.constant 0 : index
    %c0_25 = arith.constant 0 : index
    %33 = vector.load %arg10[%c0_24, %c0_25] : memref<1x32xf32, #tpu.memory_space<vmem>>, vector<1x32xf32>
    %34 = vector.broadcast %33 : vector<1x32xf32> to vector<128x32xf32>
    %35 = arith.mulf %32, %34 : vector<128x32xf32>
    %cst_26 = arith.constant dense<0.000000e+00> : vector<128xf32>
    %36 = vector.multi_reduction <add>, %35, %cst_26 [1] : vector<128x32xf32> to vector<128xf32>
    %37 = vector.shape_cast %36 : vector<128xf32> to vector<128x1xf32>
    %c0_27 = arith.constant 0 : index
    %c0_28 = arith.constant 0 : index
    %38 = vector.load %arg11[%c0_27, %c0_28] : memref<1x1xf32, #tpu.memory_space<vmem>>, vector<1x1xf32>
    %39 = vector.broadcast %38 : vector<1x1xf32> to vector<128x1xf32>
    %40 = arith.addf %37, %39 : vector<128x1xf32>
    %c0_29 = arith.constant 0 : index
    %c0_30 = arith.constant 0 : index
    %41 = vector.load %arg12[%c0_29, %c0_30] : memref<128x1xf32, #tpu.memory_space<vmem>>, vector<128x1xf32>
    tpu.vector_store %arg12[%c0_29, %c0_30], %40 {strides = array<i32>} : memref<128x1xf32, #tpu.memory_space<vmem>>, vector<128x1xf32>,
    return
  }
  func.func @transform_0(%arg0: i32) -> (i32, i32) {
    %c0_i32 = arith.constant 0 : i32
    %c0_i32_0 = arith.constant 0 : i32
    return %arg0, %c0_i32 : i32, i32
  }
  func.func @transform_1(%arg0: i32) -> (i32, i32) {
    %c0_i32 = arith.constant 0 : i32
    %c0_i32_0 = arith.constant 0 : i32
    %c0_i32_1 = arith.constant 0 : i32
    return %c0_i32, %c0_i32_0 : i32, i32
  }
  func.func @transform_2(%arg0: i32) -> (i32, i32) {
    %c0_i32 = arith.constant 0 : i32
    %c0_i32_0 = arith.constant 0 : i32
    %c0_i32_1 = arith.constant 0 : i32
    return %c0_i32, %c0_i32_0 : i32, i32
  }
  func.func @transform_3(%arg0: i32) -> (i32, i32) {
    %c0_i32 = arith.constant 0 : i32
    %c0_i32_0 = arith.constant 0 : i32
    %c0_i32_1 = arith.constant 0 : i32
    return %c0_i32, %c0_i32_0 : i32, i32
  }
  func.func @transform_4(%arg0: i32) -> (i32, i32) {
    %c0_i32 = arith.constant 0 : i32
    %c0_i32_0 = arith.constant 0 : i32
    %c0_i32_1 = arith.constant 0 : i32
    return %c0_i32, %c0_i32_0 : i32, i32
  }
  func.func @transform_5(%arg0: i32) -> (i32, i32) {
    %c0_i32 = arith.constant 0 : i32
    %c0_i32_0 = arith.constant 0 : i32
    %c0_i32_1 = arith.constant 0 : i32
    return %c0_i32, %c0_i32_0 : i32, i32
  }
  func.func @transform_6(%arg0: i32) -> (i32, i32) {
    %c0_i32 = arith.constant 0 : i32
    %c0_i32_0 = arith.constant 0 : i32
    %c0_i32_1 = arith.constant 0 : i32
    return %c0_i32, %c0_i32_0 : i32, i32
  }
  func.func @transform_7(%arg0: i32) -> (i32, i32) {
    %c0_i32 = arith.constant 0 : i32
    %c0_i32_0 = arith.constant 0 : i32
    %c0_i32_1 = arith.constant 0 : i32
    return %c0_i32, %c0_i32_0 : i32, i32
  }
  func.func @transform_8(%arg0: i32) -> (i32, i32) {
    %c0_i32 = arith.constant 0 : i32
    %c0_i32_0 = arith.constant 0 : i32
    %c0_i32_1 = arith.constant 0 : i32
    return %c0_i32, %c0_i32_0 : i32, i32
  }
  func.func @transform_9(%arg0: i32) -> (i32, i32) {
    %c0_i32 = arith.constant 0 : i32
    %c0_i32_0 = arith.constant 0 : i32
    %c0_i32_1 = arith.constant 0 : i32
    return %c0_i32, %c0_i32_0 : i32, i32
  }
  func.func @transform_10(%arg0: i32) -> (i32, i32) {
    %c0_i32 = arith.constant 0 : i32
    %c0_i32_0 = arith.constant 0 : i32
    %c0_i32_1 = arith.constant 0 : i32
    return %c0_i32, %c0_i32_0 : i32, i32
  }
  func.func @transform_11(%arg0: i32) -> (i32, i32) {
    %c0_i32 = arith.constant 0 : i32
    %c0_i32_0 = arith.constant 0 : i32
    return %arg0, %c0_i32 : i32, i32
  }
}

</mosaic_0001>

<llo_original>
// kernel: tpu_custom_call.1
$region0: #{tpu_custom_call.1}
  #allocation0 [shape = 'u32[]', space=smem, size = 0x4, offset = 0x4, fixed_abs, tag = 'smem constant byte address 0x4 - core index']
  #allocation1 [shape = 'u32[144,128]{1,0:T(1,128)}', space=vmem, size = 0x12000, scoped, tag = 'internal scratch']
  #allocation2 [shape = 'f32[1,1]{1,0:T(1,128)S(1)}', space=vmem, size = 0x200, scoped, tag = 'scoped memory for tpu_custom_call.1']
  %s0 = inlined_call_operand.hbm [shape: f32[256,256], index: 0, kind: input, shape index: {}]
  %s1 = inlined_call_operand.hbm [shape: bf16[256,1024], index: 1, kind: input, shape index: {}]
  %s2 = inlined_call_operand.vmem [shape: f32[1,1024], index: 2, kind: input, shape index: {}]
  %s3 = inlined_call_operand.hbm [shape: bf16[1024,512], index: 3, kind: input, shape index: {}]
  %s4 = inlined_call_operand.vmem [shape: f32[1,512], index: 4, kind: input, shape index: {}]
  %s5 = inlined_call_operand.hbm [shape: bf16[512,128], index: 5, kind: input, shape index: {}]
  %s6 = inlined_call_operand.vmem [shape: f32[1,128], index: 6, kind: input, shape index: {}]
  %s7 = inlined_call_operand.vmem [shape: bf16[128,32], index: 7, kind: input, shape index: {}]
  %s8 = inlined_call_operand.vmem [shape: f32[1,32], index: 8, kind: input, shape index: {}]
  %s9 = inlined_call_operand.vmem [shape: f32[1,32], index: 9, kind: input, shape index: {}]
  %s10 = inlined_call_operand.<no memory space> [shape: f32[1,1], index: 10, kind: input, shape index: {}]
  %s11 = inlined_call_operand.vmem [shape: f32[256,1], index: 11, kind: output, shape index: {}]
  %s12 = sld [smem:[#allocation0]]
  $region93: #{tpu_custom_call.1} parent=0
    _
  %s14 = ssub.s32 1, %s12
  %s15 = scalar_select 0, %s14, %s12
  %v16 = vstv %s10
  %17 = vst [vmem:[#allocation2] sm:$0x1] %v16
  $region1: #{tpu_custom_call.1} parent=0
    #allocation3 [shape = 'u8[262144]{0}', space=vmem, size = 0x40000, scoped, tag = 'input window, operand 0']
    #allocation4 [shape = 's32[2]{0}', space=sflag, size = 0x8, scoped, tag = 'scoped memory for tpu_custom_call.1']
    #allocation5 [shape = 'u8[524288]{0}', space=vmem, size = 0x80000, scoped, tag = 'input window, operand 1, single buffered']
    #allocation6 [shape = 's32[1]{0}', space=sflag, size = 0x4, scoped, tag = 'scoped memory for tpu_custom_call.1']
    #allocation7 [shape = 'u8[1048576]{0}', space=vmem, size = 0x100000, scoped, tag = 'input window, operand 3, single buffered']
    #allocation8 [shape = 'u8[131072]{0}', space=vmem, size = 0x20000, scoped, tag = 'input window, operand 5, single buffered']
    #allocation9 [shape = 's32[1]{0}', space=sflag, size = 0x4, scoped, tag = 'scoped memory for tpu_custom_call.1']
    %18 = vsyncpa [#allocation4], 0
    %s19 = scalar_lea.sflag [#allocation4], 1
    %20 = vsyncpa %s19, 0
    %21 = vsyncpa [#allocation6], 0
    %22 = vsyncpa [#allocation9], 0
    loop: start=0, step=1, limit=4
    $region2: #{tpu_custom_call.1} parent=1 // loop_pre_header
      _
    $region3: #{tpu_custom_call.1} parent=1 // loop_header
      %s24 = sphi 0, %s28
      %p25 = scmp.ge.s32.totalorder %s24, 4
      %s34 = sphi 0, %s36
      %s37 = sphi 0, %s34
      %s38 = sphi 0, %s37
      %s54 = sphi 0, %s38
      %s58 = sphi 0, %s58
      %s60 = sphi 0, %s58
      %s61 = sphi 0, %s60
      %s75 = sphi 0, %s61
      %s79 = sphi 0, %s79
      %s81 = sphi 0, %s79
      %s82 = sphi 0, %s81
      %s96 = sphi 0, %s82
      %s100 = sphi 0, %s100
      %s102 = sphi 0, %s100
      %s103 = sphi 0, %s102
      %s117 = sphi 0, %s103
      %s121 = sphi 0, %s121
      %s123 = sphi 0, %s121
      %s124 = sphi 0, %s123
      %s138 = sphi 0, %s124
      %s142 = sphi 0, %s142
      %s144 = sphi 0, %s142
      %s145 = sphi 0, %s144
      %s159 = sphi 0, %s145
      %s163 = sphi 0, %s163
      %s165 = sphi 0, %s163
      %s166 = sphi 0, %s165
      %s180 = sphi 0, %s166
      %s184 = sphi 0, %s184
      %s186 = sphi 0, %s184
      %s187 = sphi 0, %s186
      %s201 = sphi 0, %s187
      %s205 = sphi 0, %s205
      %s207 = sphi 0, %s205
      %s208 = sphi 0, %s207
      %s222 = sphi 0, %s208
      %s226 = sphi 0, %s226
      %s228 = sphi 0, %s226
      %s229 = sphi 0, %s228
      %s243 = sphi 0, %s229
      %s247 = sphi 0, %s247
      %s249 = sphi 0, %s247
      %s250 = sphi 0, %s249
      %s264 = sphi 0, %s250
      %s270 = sphi 0, %s272
      %s273 = sphi 0, %s270
      %s274 = sphi 0, %s273
      %s290 = sphi 0, %s274
    $region4: #{tpu_custom_call.1} parent=1 // loop_header_branch
      %27 = sbr.rel (%p25) target = $region8
    $region5: #{tpu_custom_call.1} parent=1 // loop_body
      %s29 = ssub.s32 %s24, 1
      %s30 = ssub.s32 %s24, 2
      %s31 = sadd.s32 %s24, 1
      %s32 = ssub.s32 %s24, %s31
      %p33 = scmp.eq.s32.totalorder %s32, 0
      %s35 = sadd.s32 %s34, 1
      %s36 = scalar_select %p33, %s34, %s35
      %p39 = pneg %p33
      %p40 = scmp.eq.s32.totalorder %s24, 1
      %p41 = por %p39, %p40
      %p42 = scmp.ne.s32.totalorder %s34, %s37
      %p43 = scmp.eq.s32.totalorder %s24, 0
      %p44 = por %p42, %p43
      %p45 = scmp.ne.s32.totalorder %s34, %s37
      %p46 = scmp.eq.s32.totalorder %s29, 1
      %p47 = por %p45, %p46
      %p48 = scmp.ne.s32.totalorder %s37, %s38
      %p49 = scmp.eq.s32.totalorder %s29, 0
      %p50 = por %p48, %p49
      %p51 = scmp.ne.s32.totalorder %s37, %s38
      %p52 = scmp.eq.s32.totalorder %s30, 1
      %p53 = por %p51, %p52
      %p55 = scmp.ne.s32.totalorder %s38, %s54
      %p56 = scmp.eq.s32.totalorder %s30, 0
      %p57 = por %p55, %p56
      %s59 = sadd.s32 %s58, 1
      %p62 = scmp.eq.s32.totalorder %s24, 1
      %p63 = scmp.ne.s32.totalorder %s58, %s60
      %p64 = scmp.eq.s32.totalorder %s24, 0
      %p65 = por %p63, %p64
      %p66 = scmp.ne.s32.totalorder %s58, %s60
      %p67 = scmp.eq.s32.totalorder %s29, 1
      %p68 = por %p66, %p67
      %p69 = scmp.ne.s32.totalorder %s60, %s61
      %p70 = scmp.eq.s32.totalorder %s29, 0
      %p71 = por %p69, %p70
      %p72 = scmp.ne.s32.totalorder %s60, %s61
      %p73 = scmp.eq.s32.totalorder %s30, 1
      %p74 = por %p72, %p73
      %p76 = scmp.ne.s32.totalorder %s61, %s75
      %p77 = scmp.eq.s32.totalorder %s30, 0
      %p78 = por %p76, %p77
      %s80 = sadd.s32 %s79, 1
      %p83 = scmp.eq.s32.totalorder %s24, 1
      %p84 = scmp.ne.s32.totalorder %s79, %s81
      %p85 = scmp.eq.s32.totalorder %s24, 0
      %p86 = por %p84, %p85
      %p87 = scmp.ne.s32.totalorder %s79, %s81
      %p88 = scmp.eq.s32.totalorder %s29, 1
      %p89 = por %p87, %p88
      %p90 = scmp.ne.s32.totalorder %s81, %s82
      %p91 = scmp.eq.s32.totalorder %s29, 0
      %p92 = por %p90, %p91
      %p93 = scmp.ne.s32.totalorder %s81, %s82
      %p94 = scmp.eq.s32.totalorder %s30, 1
      %p95 = por %p93, %p94
      %p97 = scmp.ne.s32.totalorder %s82, %s96
      %p98 = scmp.eq.s32.totalorder %s30, 0
      %p99 = por %p97, %p98
      %s101 = sadd.s32 %s100, 1
      %p104 = scmp.eq.s32.totalorder %s24, 1
      %p105 = scmp.ne.s32.totalorder %s100, %s102
      %p106 = scmp.eq.s32.totalorder %s24, 0
      %p107 = por %p105, %p106
      %p108 = scmp.ne.s32.totalorder %s100, %s102
      %p109 = scmp.eq.s32.totalorder %s29, 1
      %p110 = por %p108, %p109
      %p111 = scmp.ne.s32.totalorder %s102, %s103
      %p112 = scmp.eq.s32.totalorder %s29, 0
      %p113 = por %p111, %p112
      %p114 = scmp.ne.s32.totalorder %s102, %s103
      %p115 = scmp.eq.s32.totalorder %s30, 1
      %p116 = por %p114, %p115
      %p118 = scmp.ne.s32.totalorder %s103, %s117
      %p119 = scmp.eq.s32.totalorder %s30, 0
      %p120 = por %p118, %p119
      %s122 = sadd.s32 %s121, 1
      %p125 = scmp.eq.s32.totalorder %s24, 1
      %p126 = scmp.ne.s32.totalorder %s121, %s123
      %p127 = scmp.eq.s32.totalorder %s24, 0
      %p128 = por %p126, %p127
      %p129 = scmp.ne.s32.totalorder %s121, %s123
      %p130 = scmp.eq.s32.totalorder %s29, 1
      %p131 = por %p129, %p130
      %p132 = scmp.ne.s32.totalorder %s123, %s124
      %p133 = scmp.eq.s32.totalorder %s29, 0
      %p134 = por %p132, %p133
      %p135 = scmp.ne.s32.totalorder %s123, %s124
      %p136 = scmp.eq.s32.totalorder %s30, 1
      %p137 = por %p135, %p136
      %p139 = scmp.ne.s32.totalorder %s124, %s138
      %p140 = scmp.eq.s32.totalorder %s30, 0
      %p141 = por %p139, %p140
      %s143 = sadd.s32 %s142, 1
      %p146 = scmp.eq.s32.totalorder %s24, 1
      %p147 = scmp.ne.s32.totalorder %s142, %s144
      %p148 = scmp.eq.s32.totalorder %s24, 0
      %p149 = por %p147, %p148
      %p150 = scmp.ne.s32.totalorder %s142, %s144
      %p151 = scmp.eq.s32.totalorder %s29, 1
      %p152 = por %p150, %p151
      %p153 = scmp.ne.s32.totalorder %s144, %s145
      %p154 = scmp.eq.s32.totalorder %s29, 0
      %p155 = por %p153, %p154
      %p156 = scmp.ne.s32.totalorder %s144, %s145
      %p157 = scmp.eq.s32.totalorder %s30, 1
      %p158 = por %p156, %p157
      %p160 = scmp.ne.s32.totalorder %s145, %s159
      %p161 = scmp.eq.s32.totalorder %s30, 0
      %p162 = por %p160, %p161
      %s164 = sadd.s32 %s163, 1
      %p167 = scmp.eq.s32.totalorder %s24, 1
      %p168 = scmp.ne.s32.totalorder %s163, %s165
      %p169 = scmp.eq.s32.totalorder %s24, 0
      %p170 = por %p168, %p169
      %p171 = scmp.ne.s32.totalorder %s163, %s165
      %p172 = scmp.eq.s32.totalorder %s29, 1
      %p173 = por %p171, %p172
      %p174 = scmp.ne.s32.totalorder %s165, %s166
      %p175 = scmp.eq.s32.totalorder %s29, 0
      %p176 = por %p174, %p175
      %p177 = scmp.ne.s32.totalorder %s165, %s166
      %p178 = scmp.eq.s32.totalorder %s30, 1
      %p179 = por %p177, %p178
      %p181 = scmp.ne.s32.totalorder %s166, %s180
      %p182 = scmp.eq.s32.totalorder %s30, 0
      %p183 = por %p181, %p182
      %s185 = sadd.s32 %s184, 1
      %p188 = scmp.eq.s32.totalorder %s24, 1
      %p189 = scmp.ne.s32.totalorder %s184, %s186
      %p190 = scmp.eq.s32.totalorder %s24, 0
      %p191 = por %p189, %p190
      %p192 = scmp.ne.s32.totalorder %s184, %s186
      %p193 = scmp.eq.s32.totalorder %s29, 1
      %p194 = por %p192, %p193
      %p195 = scmp.ne.s32.totalorder %s186, %s187
      %p196 = scmp.eq.s32.totalorder %s29, 0
      %p197 = por %p195, %p196
      %p198 = scmp.ne.s32.totalorder %s186, %s187
      %p199 = scmp.eq.s32.totalorder %s30, 1
      %p200 = por %p198, %p199
      %p202 = scmp.ne.s32.totalorder %s187, %s201
      %p203 = scmp.eq.s32.totalorder %s30, 0
      %p204 = por %p202, %p203
      %s206 = sadd.s32 %s205, 1
      %p209 = scmp.eq.s32.totalorder %s24, 1
      %p210 = scmp.ne.s32.totalorder %s205, %s207
      %p211 = scmp.eq.s32.totalorder %s24, 0
      %p212 = por %p210, %p211
      %p213 = scmp.ne.s32.totalorder %s205, %s207
      %p214 = scmp.eq.s32.totalorder %s29, 1
      %p215 = por %p213, %p214
      %p216 = scmp.ne.s32.totalorder %s207, %s208
      %p217 = scmp.eq.s32.totalorder %s29, 0
      %p218 = por %p216, %p217
      %p219 = scmp.ne.s32.totalorder %s207, %s208
      %p220 = scmp.eq.s32.totalorder %s30, 1
      %p221 = por %p219, %p220
      %p223 = scmp.ne.s32.totalorder %s208, %s222
      %p224 = scmp.eq.s32.totalorder %s30, 0
      %p225 = por %p223, %p224
      %s227 = sadd.s32 %s226, 1
      %p230 = scmp.eq.s32.totalorder %s24, 1
      %p231 = scmp.ne.s32.totalorder %s226, %s228
      %p232 = scmp.eq.s32.totalorder %s24, 0
      %p233 = por %p231, %p232
      %p234 = scmp.ne.s32.totalorder %s226, %s228
      %p235 = scmp.eq.s32.totalorder %s29, 1
      %p236 = por %p234, %p235
      %p237 = scmp.ne.s32.totalorder %s228, %s229
      %p238 = scmp.eq.s32.totalorder %s29, 0
      %p239 = por %p237, %p238
      %p240 = scmp.ne.s32.totalorder %s228, %s229
      %p241 = scmp.eq.s32.totalorder %s30, 1
      %p242 = por %p240, %p241
      %p244 = scmp.ne.s32.totalorder %s229, %s243
      %p245 = scmp.eq.s32.totalorder %s30, 0
      %p246 = por %p244, %p245
      %s248 = sadd.s32 %s247, 1
      %p251 = scmp.eq.s32.totalorder %s24, 1
      %p252 = scmp.ne.s32.totalorder %s247, %s249
      %p253 = scmp.eq.s32.totalorder %s24, 0
      %p254 = por %p252, %p253
      %p255 = scmp.ne.s32.totalorder %s247, %s249
      %p256 = scmp.eq.s32.totalorder %s29, 1
      %p257 = por %p255, %p256
      %p258 = scmp.ne.s32.totalorder %s249, %s250
      %p259 = scmp.eq.s32.totalorder %s29, 0
      %p260 = por %p258, %p259
      %p261 = scmp.ne.s32.totalorder %s249, %s250
      %p262 = scmp.eq.s32.totalorder %s30, 1
      %p263 = por %p261, %p262
      %p265 = scmp.ne.s32.totalorder %s250, %s264
      %p266 = scmp.eq.s32.totalorder %s30, 0
      %p267 = por %p265, %p266
      %s268 = ssub.s32 %s24, %s31
      %p269 = scmp.eq.s32.totalorder %s268, 0
      %s271 = sadd.s32 %s270, 1
      %s272 = scalar_select %p269, %s270, %s271
      %p275 = pneg %p269
      %p276 = scmp.eq.s32.totalorder %s24, 1
      %p277 = por %p275, %p276
      %p278 = scmp.ne.s32.totalorder %s270, %s273
      %p279 = scmp.eq.s32.totalorder %s24, 0
      %p280 = por %p278, %p279
      %p281 = scmp.ne.s32.totalorder %s270, %s273
      %p282 = scmp.eq.s32.totalorder %s29, 1
      %p283 = por %p281, %p282
      %p284 = scmp.ne.s32.totalorder %s273, %s274
      %p285 = scmp.eq.s32.totalorder %s29, 0
      %p286 = por %p284, %p285
      %p287 = scmp.ne.s32.totalorder %s273, %s274
      %p288 = scmp.eq.s32.totalorder %s30, 1
      %p289 = por %p287, %p288
      %p291 = scmp.ne.s32.totalorder %s274, %s290
      %p292 = scmp.eq.s32.totalorder %s30, 0
      %p293 = por %p291, %p292
      %p294 = scmp.le.s32.totalorder 1, %s24
      %p295 = scmp.lt.s32.totalorder %s24, 3
      %p296 = pnand %p294, %p295
      %p297 = pneg %p296
      // Predicated region
      $region9: #{tpu_custom_call.1} parent=5 // pred_check
        _
      $region10: #{tpu_custom_call.1} parent=5 // pred_check_branch
        %299 = sbr.rel (%p296) target = $region12
      $region11: #{tpu_custom_call.1} parent=5 // pred_region
        %s300 = ssub.s32 %s24, 1
        // Predicated region
        $region13: #{tpu_custom_call.1} parent=11 // pred_check
          %p301 = pneg %p71
        $region14: #{tpu_custom_call.1} parent=11 // pred_check_branch
          %303 = sbr.rel (%p301) target = $region16
        $region15: #{tpu_custom_call.1} parent=11 // pred_region
          %s305 = ssub.s32 16384, 16384
          %306 = vsyncadd [#allocation6], %s305
          %s307 = sshll.u32 [#allocation5], 4
          %s308 = int_to_ptr.vmem [resolvable:$true] %s307
          %313 = dma.hbm_to_vmem [thread:$0]  %s1, 16384, %s308, [#allocation6], 512, 512, 32
        $region16: #{tpu_custom_call.1} parent=11 // pred_fallthru
          _
        // Predicated region
        $region17: #{tpu_custom_call.1} parent=11 // pred_check
          %p314 = pneg %p92
        $region18: #{tpu_custom_call.1} parent=11 // pred_check_branch
          %316 = sbr.rel (%p314) target = $region20
        $region19: #{tpu_custom_call.1} parent=11 // pred_region
          _
        $region20: #{tpu_custom_call.1} parent=11 // pred_fallthru
          _
        // Predicated region
        $region21: #{tpu_custom_call.1} parent=11 // pred_check
          %p317 = pneg %p113
        $region22: #{tpu_custom_call.1} parent=11 // pred_check_branch
          %319 = sbr.rel (%p317) target = $region24
        $region23: #{tpu_custom_call.1} parent=11 // pred_region
          %s321 = ssub.s32 32768, 32768
          %322 = vsyncadd [#allocation6], %s321
          %s323 = sshll.u32 [#allocation7], 4
          %s324 = int_to_ptr.vmem [resolvable:$true] %s323
          %329 = dma.hbm_to_vmem [thread:$0]  %s3, 32768, %s324, [#allocation6], 256, 256, 16
        $region24: #{tpu_custom_call.1} parent=11 // pred_fallthru
          _
        // Predicated region
        $region25: #{tpu_custom_call.1} parent=11 // pred_check
          %p330 = pneg %p134
        $region26: #{tpu_custom_call.1} parent=11 // pred_check_branch
          %332 = sbr.rel (%p330) target = $region28
        $region27: #{tpu_custom_call.1} parent=11 // pred_region
          _
        $region28: #{tpu_custom_call.1} parent=11 // pred_fallthru
          _
        // Predicated region
        $region29: #{tpu_custom_call.1} parent=11 // pred_check
          %p333 = pneg %p155
        $region30: #{tpu_custom_call.1} parent=11 // pred_check_branch
          %335 = sbr.rel (%p333) target = $region32
        $region31: #{tpu_custom_call.1} parent=11 // pred_region
          %s337 = ssub.s32 4096, 4096
          %338 = vsyncadd [#allocation9], %s337
          %s339 = sshll.u32 [#allocation8], 4
          %s340 = int_to_ptr.vmem [resolvable:$true] %s339
          %345 = dma.hbm_to_vmem [thread:$0]  %s5, 4096, %s340, [#allocation9], 64, 64, 4
        $region32: #{tpu_custom_call.1} parent=11 // pred_fallthru
          _
        // Predicated region
        $region33: #{tpu_custom_call.1} parent=11 // pred_check
          %p346 = pneg %p176
        $region34: #{tpu_custom_call.1} parent=11 // pred_check_branch
          %348 = sbr.rel (%p346) target = $region36
        $region35: #{tpu_custom_call.1} parent=11 // pred_region
          _
        $region36: #{tpu_custom_call.1} parent=11 // pred_fallthru
          _
        // Predicated region
        $region37: #{tpu_custom_call.1} parent=11 // pred_check
          %p349 = pneg %p197
        $region38: #{tpu_custom_call.1} parent=11 // pred_check_branch
          %351 = sbr.rel (%p349) target = $region40
        $region39: #{tpu_custom_call.1} parent=11 // pred_region
          _
        $region40: #{tpu_custom_call.1} parent=11 // pred_fallthru
          _
        // Predicated region
        $region41: #{tpu_custom_call.1} parent=11 // pred_check
          %p352 = pneg %p218
        $region42: #{tpu_custom_call.1} parent=11 // pred_check_branch
          %354 = sbr.rel (%p352) target = $region44
        $region43: #{tpu_custom_call.1} parent=11 // pred_region
          _
        $region44: #{tpu_custom_call.1} parent=11 // pred_fallthru
          _
        // Predicated region
        $region45: #{tpu_custom_call.1} parent=11 // pred_check
          %p355 = pneg %p239
        $region46: #{tpu_custom_call.1} parent=11 // pred_check_branch
          %357 = sbr.rel (%p355) target = $region48
        $region47: #{tpu_custom_call.1} parent=11 // pred_region
          _
        $region48: #{tpu_custom_call.1} parent=11 // pred_fallthru
          _
        // Predicated region
        $region49: #{tpu_custom_call.1} parent=11 // pred_check
          %p358 = pneg %p260
        $region50: #{tpu_custom_call.1} parent=11 // pred_check_branch
          %360 = sbr.rel (%p358) target = $region52
        $region51: #{tpu_custom_call.1} parent=11 // pred_region
          _
        $region52: #{tpu_custom_call.1} parent=11 // pred_fallthru
          _
      $region12: #{tpu_custom_call.1} parent=5 // pred_fallthru
        _
      %p361 = scmp.lt.s32.totalorder %s24, 2
      // Predicated region
      $region53: #{tpu_custom_call.1} parent=5 // pred_check
        %p362 = pneg %p361
      $region54: #{tpu_custom_call.1} parent=5 // pred_check_branch
        %364 = sbr.rel (%p362) target = $region56
      $region55: #{tpu_custom_call.1} parent=5 // pred_region
        // Predicated region
        $region57: #{tpu_custom_call.1} parent=55 // pred_check
          %p365 = pneg %p44
        $region58: #{tpu_custom_call.1} parent=55 // pred_check_branch
          %367 = sbr.rel (%p365) target = $region60
        $region59: #{tpu_custom_call.1} parent=55 // pred_region
          %s368 = sand.u32 %s34, 1
          %s369 = scalar_lea.sflag [#allocation4], %s368
          %s370 = sand.u32 %s34, 1
          %s371 = smul.addr %s370, 256
          %s372 = scalar_lea.vmem [#allocation3], %s371
          %s373 = smul.u32 16, %s24
          %s375 = ssub.s32 4096, 4096
          %376 = vsyncadd %s369, %s375
          %s377 = smul.addr %s373, 2
          %s378 = smul.addr %s377, 128
          %s379 = scalar_lea.hbm %s0, %s378
          %s380 = sshll.u32 %s372, 4
          %s381 = int_to_ptr.vmem [resolvable:$true] %s380
          %386 = dma.hbm_to_vmem [thread:$0]  %s379, 4096, %s381, %s369, 256, 256, 16
        $region60: #{tpu_custom_call.1} parent=55 // pred_fallthru
          _
      $region56: #{tpu_custom_call.1} parent=5 // pred_fallthru
        _
      %p387 = scmp.le.s32.totalorder 1, %s24
      %p388 = scmp.lt.s32.totalorder %s24, 3
      %p389 = pnand %p387, %p388
      %p390 = pneg %p389
      // Predicated region
      $region61: #{tpu_custom_call.1} parent=5 // pred_check
        _
      $region62: #{tpu_custom_call.1} parent=5 // pred_check_branch
        %392 = sbr.rel (%p389) target = $region64
      $region63: #{tpu_custom_call.1} parent=5 // pred_region
        %s393 = ssub.s32 %s24, 1
        %s394 = sand.u32 %s37, 1
        %s395 = scalar_lea.sflag [#allocation4], %s394
        %s396 = sand.u32 %s37, 1
        %s397 = smul.addr %s396, 256
        %s398 = scalar_lea.vmem [#allocation3], %s397
        // Predicated region
        $region65: #{tpu_custom_call.1} parent=63 // pred_check
          %p399 = pneg %p50
        $region66: #{tpu_custom_call.1} parent=63 // pred_check_branch
          %401 = sbr.rel (%p399) target = $region68
        $region67: #{tpu_custom_call.1} parent=63 // pred_region
          %402 = dma.done %s395, 4096
        $region68: #{tpu_custom_call.1} parent=63 // pred_fallthru
          _
        // Predicated region
        $region69: #{tpu_custom_call.1} parent=63 // pred_check
          %p403 = pneg %p71
        $region70: #{tpu_custom_call.1} parent=63 // pred_check_branch
          %405 = sbr.rel (%p403) target = $region72
        $region71: #{tpu_custom_call.1} parent=63 // pred_region
          %406 = dma.done [#allocation6], 16384
        $region72: #{tpu_custom_call.1} parent=63 // pred_fallthru
          _
        // Predicated region
        $region73: #{tpu_custom_call.1} parent=63 // pred_check
          %p407 = pneg %p113
        $region74: #{tpu_custom_call.1} parent=63 // pred_check_branch
          %409 = sbr.rel (%p407) target = $region76
        $region75: #{tpu_custom_call.1} parent=63 // pred_region
          %410 = dma.done [#allocation6], 32768
        $region76: #{tpu_custom_call.1} parent=63 // pred_fallthru
          _
        // Predicated region
        $region77: #{tpu_custom_call.1} parent=63 // pred_check
          %p411 = pneg %p155
        $region78: #{tpu_custom_call.1} parent=63 // pred_check_branch
          %413 = sbr.rel (%p411) target = $region80
        $region79: #{tpu_custom_call.1} parent=63 // pred_region
          %414 = dma.done [#allocation9], 4096
        $region80: #{tpu_custom_call.1} parent=63 // pred_fallthru
          _
        %s415 = sand.u32 %s37, 1
        %s416 = scalar_lea.sflag [#allocation4], %s415
        %s417 = sand.u32 %s37, 1
        %s418 = smul.addr %s417, 256
        %s419 = scalar_lea.vmem [#allocation3], %s418
        %p420 = pneg %p50
        %p421 = pneg %p47
        %p422 = pneg %p71
        %p423 = pneg %p68
        %p424 = pneg %p92
        %p425 = pneg %p89
        %p426 = pneg %p113
        %p427 = pneg %p110
        %p428 = pneg %p134
        %p429 = pneg %p131
        %p430 = pneg %p155
        %p431 = pneg %p152
        %p432 = pneg %p176
        %p433 = pneg %p173
        %p434 = pneg %p197
        %p435 = pneg %p194
        %p436 = pneg %p218
        %p437 = pneg %p215
        %p438 = pneg %p239
        %p439 = pneg %p236
        %p440 = pneg %p260
        %p441 = pneg %p257
        %p442 = pneg %p286
        %p443 = pneg %p283
        %s444 = smul.u32 16, %s29
        %p445 = scmp.lt.s32.totalorder %s444, 31
        %s446 = scalar_select %p445, %s444, 31
        %s447 = smul.addr %s446, 8
        %s448 = scalar_lea.vmem %s11, %s447
        %s449 = smul.u32 16, %s29
        %s450 = smul.u32 16, %s29
        %p451 = scmp.lt.s32.totalorder %s450, 31
        %s452 = scalar_select %p451, %s450, 31
        %s453 = smul.addr %s452, 8
        %s454 = scalar_lea.vmem %s11, %s453
        %s455 = smul.u32 16, %s29
        %v457 = vld [vmem:[%s398] sm:$0xff]
        %v458 = vld [vmem:[%s398 + $0x8] sm:$0xff]
        %v459 = vld [vmem:[%s398 + $0x10] sm:$0xff]
        %v460 = vld [vmem:[%s398 + $0x18] sm:$0xff]
        %v461 = vld [vmem:[%s398 + $0x20] sm:$0xff]
        %v462 = vld [vmem:[%s398 + $0x28] sm:$0xff]
        %v463 = vld [vmem:[%s398 + $0x30] sm:$0xff]
        %v464 = vld [vmem:[%s398 + $0x38] sm:$0xff]
        %v465 = vld [vmem:[%s398 + $0x40] sm:$0xff]
        %v466 = vld [vmem:[%s398 + $0x48] sm:$0xff]
        %v467 = vld [vmem:[%s398 + $0x50] sm:$0xff]
        %v468 = vld [vmem:[%s398 + $0x58] sm:$0xff]
        %v469 = vld [vmem:[%s398 + $0x60] sm:$0xff]
        %v470 = vld [vmem:[%s398 + $0x68] sm:$0xff]
        %v471 = vld [vmem:[%s398 + $0x70] sm:$0xff]
        %v472 = vld [vmem:[%s398 + $0x78] sm:$0xff]
        %v473 = vld [vmem:[%s398 + $0x80] sm:$0xff]
        %v474 = vld [vmem:[%s398 + $0x88] sm:$0xff]
        %v475 = vld [vmem:[%s398 + $0x90] sm:$0xff]
        %v476 = vld [vmem:[%s398 + $0x98] sm:$0xff]
        %v477 = vld [vmem:[%s398 + $0xa0] sm:$0xff]
        %v478 = vld [vmem:[%s398 + $0xa8] sm:$0xff]
        %v479 = vld [vmem:[%s398 + $0xb0] sm:$0xff]
        %v480 = vld [vmem:[%s398 + $0xb8] sm:$0xff]
        %v481 = vld [vmem:[%s398 + $0xc0] sm:$0xff]
        %v482 = vld [vmem:[%s398 + $0xc8] sm:$0xff]
        %v483 = vld [vmem:[%s398 + $0xd0] sm:$0xff]
        %v484 = vld [vmem:[%s398 + $0xd8] sm:$0xff]
        %v485 = vld [vmem:[%s398 + $0xe0] sm:$0xff]
        %v486 = vld [vmem:[%s398 + $0xe8] sm:$0xff]
        %v487 = vld [vmem:[%s398 + $0xf0] sm:$0xff]
        %v488 = vld [vmem:[%s398 + $0xf8] sm:$0xff]
        %v489 = vpack.c.bf16 %v459, %v457
        %v490 = vpack.c.bf16 %v460, %v458
        %v491 = vpack.c.bf16 %v463, %v461
        %v492 = vpack.c.bf16 %v464, %v462
        %v493 = vpack.c.bf16 %v467, %v465
        %v494 = vpack.c.bf16 %v468, %v466
        %v495 = vpack.c.bf16 %v471, %v469
        %v496 = vpack.c.bf16 %v472, %v470
        %v497 = vpack.c.bf16 %v475, %v473
        %v498 = vpack.c.bf16 %v476, %v474
        %v499 = vpack.c.bf16 %v479, %v477
        %v500 = vpack.c.bf16 %v480, %v478
        %v501 = vpack.c.bf16 %v483, %v481
        %v502 = vpack.c.bf16 %v484, %v482
        %v503 = vpack.c.bf16 %v487, %v485
        %v504 = vpack.c.bf16 %v488, %v486
        %v505 = vld [vmem:[#allocation5] sm:$0xff]
        %v506 = vld [vmem:[#allocation5 + $0x8] sm:$0xff]
        %v507 = vld [vmem:[#allocation5 + $0x10] sm:$0xff]
        %v508 = vld [vmem:[#allocation5 + $0x18] sm:$0xff]
        %v509 = vld [vmem:[#allocation5 + $0x20] sm:$0xff]
        %v510 = vld [vmem:[#allocation5 + $0x28] sm:$0xff]
        %v511 = vld [vmem:[#allocation5 + $0x30] sm:$0xff]
        %v512 = vld [vmem:[#allocation5 + $0x38] sm:$0xff]
        %v513 = vld [vmem:[#allocation5 + $0x40] sm:$0xff]
        %v514 = vld [vmem:[#allocation5 + $0x48] sm:$0xff]
        %v515 = vld [vmem:[#allocation5 + $0x50] sm:$0xff]
        %v516 = vld [vmem:[#allocation5 + $0x58] sm:$0xff]
        %v517 = vld [vmem:[#allocation5 + $0x60] sm:$0xff]
        %v518 = vld [vmem:[#allocation5 + $0x68] sm:$0xff]
        %v519 = vld [vmem:[#allocation5 + $0x70] sm:$0xff]
        %v520 = vld [vmem:[#allocation5 + $0x78] sm:$0xff]
        %v521 = vld [vmem:[#allocation5 + $0x80] sm:$0xff]
        %v522 = vld [vmem:[#allocation5 + $0x88] sm:$0xff]
        %v523 = vld [vmem:[#allocation5 + $0x90] sm:$0xff]
        %v524 = vld [vmem:[#allocation5 + $0x98] sm:$0xff]
        %v525 = vld [vmem:[#allocation5 + $0xa0] sm:$0xff]
        %v526 = vld [vmem:[#allocation5 + $0xa8] sm:$0xff]
        %v527 = vld [vmem:[#allocation5 + $0xb0] sm:$0xff]
        %v528 = vld [vmem:[#allocation5 + $0xb8] sm:$0xff]
        %v529 = vld [vmem:[#allocation5 + $0xc0] sm:$0xff]
        %v530 = vld [vmem:[#allocation5 + $0xc8] sm:$0xff]
        %v531 = vld [vmem:[#allocation5 + $0xd0] sm:$0xff]
        %v532 = vld [vmem:[#allocation5 + $0xd8] sm:$0xff]
        %v533 = vld [vmem:[#allocation5 + $0xe0] sm:$0xff]
        %v534 = vld [vmem:[#allocation5 + $0xe8] sm:$0xff]
        %v535 = vld [vmem:[#allocation5 + $0xf0] sm:$0xff]
        %v536 = vld [vmem:[#allocation5 + $0xf8] sm:$0xff]
        %v537 = vld [vmem:[#allocation5 + $0x100] sm:$0xff]
        %v538 = vld [vmem:[#allocation5 + $0x108] sm:$0xff]
        %v539 = vld [vmem:[#allocation5 + $0x110] sm:$0xff]
        %v540 = vld [vmem:[#allocation5 + $0x118] sm:$0xff]
        %v541 = vld [vmem:[#allocation5 + $0x120] sm:$0xff]
        %v542 = vld [vmem:[#allocation5 + $0x128] sm:$0xff]
        %v543 = vld [vmem:[#allocation5 + $0x130] sm:$0xff]
        %v544 = vld [vmem:[#allocation5 + $0x138] sm:$0xff]
        %v545 = vld [vmem:[#allocation5 + $0x140] sm:$0xff]
        %v546 = vld [vmem:[#allocation5 + $0x148] sm:$0xff]
        %v547 = vld [vmem:[#allocation5 + $0x150] sm:$0xff]
        %v548 = vld [vmem:[#allocation5 + $0x158] sm:$0xff]
        %v549 = vld [vmem:[#allocation5 + $0x160] sm:$0xff]
        %v550 = vld [vmem:[#allocation5 + $0x168] sm:$0xff]
        %v551 = vld [vmem:[#allocation5 + $0x170] sm:$0xff]
        %v552 = vld [vmem:[#allocation5 + $0x178] sm:$0xff]
        %v553 = vld [vmem:[#allocation5 + $0x180] sm:$0xff]
        %v554 = vld [vmem:[#allocation5 + $0x188] sm:$0xff]
        %v555 = vld [vmem:[#allocation5 + $0x190] sm:$0xff]
        %v556 = vld [vmem:[#allocation5 + $0x198] sm:$0xff]
        %v557 = vld [vmem:[#allocation5 + $0x1a0] sm:$0xff]
        %v558 = vld [vmem:[#allocation5 + $0x1a8] sm:$0xff]
        %v559 = vld [vmem:[#allocation5 + $0x1b0] sm:$0xff]
        %v560 = vld [vmem:[#allocation5 + $0x1b8] sm:$0xff]
        %v561 = vld [vmem:[#allocation5 + $0x1c0] sm:$0xff]
        %v562 = vld [vmem:[#allocation5 + $0x1c8] sm:$0xff]
        %v563 = vld [vmem:[#allocation5 + $0x1d0] sm:$0xff]
        %v564 = vld [vmem:[#allocation5 + $0x1d8] sm:$0xff]
        %v565 = vld [vmem:[#allocation5 + $0x1e0] sm:$0xff]
        %v566 = vld [vmem:[#allocation5 + $0x1e8] sm:$0xff]
        %v567 = vld [vmem:[#allocation5 + $0x1f0] sm:$0xff]
        %v568 = vld [vmem:[#allocation5 + $0x1f8] sm:$0xff]
        %v569 = vld [vmem:[#allocation5 + $0x200] sm:$0xff]
        %v570 = vld [vmem:[#allocation5 + $0x208] sm:$0xff]
        %v571 = vld [vmem:[#allocation5 + $0x210] sm:$0xff]
        %v572 = vld [vmem:[#allocation5 + $0x218] sm:$0xff]
        %v573 = vld [vmem:[#allocation5 + $0x220] sm:$0xff]
        %v574 = vld [vmem:[#allocation5 + $0x228] sm:$0xff]
        %v575 = vld [vmem:[#allocation5 + $0x230] sm:$0xff]
        %v576 = vld [vmem:[#allocation5 + $0x238] sm:$0xff]
        %v577 = vld [vmem:[#allocation5 + $0x240] sm:$0xff]
        %v578 = vld [vmem:[#allocation5 + $0x248] sm:$0xff]
        %v579 = vld [vmem:[#allocation5 + $0x250] sm:$0xff]
        %v580 = vld [vmem:[#allocation5 + $0x258] sm:$0xff]
        %v581 = vld [vmem:[#allocation5 + $0x260] sm:$0xff]
        %v582 = vld [vmem:[#allocation5 + $0x268] sm:$0xff]
        %v583 = vld [vmem:[#allocation5 + $0x270] sm:$0xff]
        %v584 = vld [vmem:[#allocation5 + $0x278] sm:$0xff]
        %v585 = vld [vmem:[#allocation5 + $0x280] sm:$0xff]
        %v586 = vld [vmem:[#allocation5 + $0x288] sm:$0xff]
        %v587 = vld [vmem:[#allocation5 + $0x290] sm:$0xff]
        %v588 = vld [vmem:[#allocation5 + $0x298] sm:$0xff]
        %v589 = vld [vmem:[#allocation5 + $0x2a0] sm:$0xff]
        %v590 = vld [vmem:[#allocation5 + $0x2a8] sm:$0xff]
        %v591 = vld [vmem:[#allocation5 + $0x2b0] sm:$0xff]
        %v592 = vld [vmem:[#allocation5 + $0x2b8] sm:$0xff]
        %v593 = vld [vmem:[#allocation5 + $0x2c0] sm:$0xff]
        %v594 = vld [vmem:[#allocation5 + $0x2c8] sm:$0xff]
        %v595 = vld [vmem:[#allocation5 + $0x2d0] sm:$0xff]
        %v596 = vld [vmem:[#allocation5 + $0x2d8] sm:$0xff]
        %v597 = vld [vmem:[#allocation5 + $0x2e0] sm:$0xff]
        %v598 = vld [vmem:[#allocation5 + $0x2e8] sm:$0xff]
        %v599 = vld [vmem:[#allocation5 + $0x2f0] sm:$0xff]
        %v600 = vld [vmem:[#allocation5 + $0x2f8] sm:$0xff]
        %v601 = vld [vmem:[#allocation5 + $0x300] sm:$0xff]
        %v602 = vld [vmem:[#allocation5 + $0x308] sm:$0xff]
        %v603 = vld [vmem:[#allocation5 + $0x310] sm:$0xff]
        %v604 = vld [vmem:[#allocation5 + $0x318] sm:$0xff]
        %v605 = vld [vmem:[#allocation5 + $0x320] sm:$0xff]
        %v606 = vld [vmem:[#allocation5 + $0x328] sm:$0xff]
        %v607 = vld [vmem:[#allocation5 + $0x330] sm:$0xff]
        %v608 = vld [vmem:[#allocation5 + $0x338] sm:$0xff]
        %v609 = vld [vmem:[#allocation5 + $0x340] sm:$0xff]
        %v610 = vld [vmem:[#allocation5 + $0x348] sm:$0xff]
        %v611 = vld [vmem:[#allocation5 + $0x350] sm:$0xff]
        %v612 = vld [vmem:[#allocation5 + $0x358] sm:$0xff]
        %v613 = vld [vmem:[#allocation5 + $0x360] sm:$0xff]
        %v614 = vld [vmem:[#allocation5 + $0x368] sm:$0xff]
        %v615 = vld [vmem:[#allocation5 + $0x370] sm:$0xff]
        %v616 = vld [vmem:[#allocation5 + $0x378] sm:$0xff]
        %v617 = vld [vmem:[#allocation5 + $0x380] sm:$0xff]
        %v618 = vld [vmem:[#allocation5 + $0x388] sm:$0xff]
        %v619 = vld [vmem:[#allocation5 + $0x390] sm:$0xff]
        %v620 = vld [vmem:[#allocation5 + $0x398] sm:$0xff]
        %v621 = vld [vmem:[#allocation5 + $0x3a0] sm:$0xff]
        %v622 = vld [vmem:[#allocation5 + $0x3a8] sm:$0xff]
        %v623 = vld [vmem:[#allocation5 + $0x3b0] sm:$0xff]
        %v624 = vld [vmem:[#allocation5 + $0x3b8] sm:$0xff]
        %v625 = vld [vmem:[#allocation5 + $0x3c0] sm:$0xff]
        %v626 = vld [vmem:[#allocation5 + $0x3c8] sm:$0xff]
        %v627 = vld [vmem:[#allocation5 + $0x3d0] sm:$0xff]
        %v628 = vld [vmem:[#allocation5 + $0x3d8] sm:$0xff]
        %v629 = vld [vmem:[#allocation5 + $0x3e0] sm:$0xff]
        %v630 = vld [vmem:[#allocation5 + $0x3e8] sm:$0xff]
        %v631 = vld [vmem:[#allocation5 + $0x3f0] sm:$0xff]
        %v632 = vld [vmem:[#allocation5 + $0x3f8] sm:$0xff]
        %v633 = vld [vmem:[%s2] sm:$0xff]
        %v635 = vlaneseq
        %v636 = vshrl.u32 %v635, 7
        %v637 = vsub.s32 0, %v636
        %v638 = vrot.slane %v633, %v637
        %v639 = vlaneseq
        %v640 = vshrl.u32 %v639, 7
        %v641 = vsub.s32 1, %v640
        %v642 = vrot.slane %v633, %v641
        %v643 = vlaneseq
        %v644 = vshrl.u32 %v643, 7
        %v645 = vsub.s32 2, %v644
        %v646 = vrot.slane %v633, %v645
        %v647 = vlaneseq
        %v648 = vshrl.u32 %v647, 7
        %v649 = vsub.s32 3, %v648
        %v650 = vrot.slane %v633, %v649
        %v651 = vlaneseq
        %v652 = vshrl.u32 %v651, 7
        %v653 = vsub.s32 4, %v652
        %v654 = vrot.slane %v633, %v653
        %v655 = vlaneseq
        %v656 = vshrl.u32 %v655, 7
        %v657 = vsub.s32 5, %v656
        %v658 = vrot.slane %v633, %v657
        %v659 = vlaneseq
        %v660 = vshrl.u32 %v659, 7
        %v661 = vsub.s32 6, %v660
        %v662 = vrot.slane %v633, %v661
        %v663 = vlaneseq
        %v664 = vshrl.u32 %v663, 7
        %v665 = vsub.s32 7, %v664
        %v666 = vrot.slane %v633, %v665
        %v803 = vunpack.c.l.b16 %v505
        %v804 = vunpack.c.h.b16 %v505
        %v805 = vunpack.c.l.b16 %v506
        %v806 = vunpack.c.h.b16 %v506
        %v807 = vunpack.c.l.b16 %v507
        %v808 = vunpack.c.h.b16 %v507
        %v809 = vunpack.c.l.b16 %v508
        %v810 = vunpack.c.h.b16 %v508
        %v811 = vunpack.c.l.b16 %v509
        %v812 = vunpack.c.h.b16 %v509
        %v813 = vunpack.c.l.b16 %v510
        %v814 = vunpack.c.h.b16 %v510
        %v815 = vunpack.c.l.b16 %v511
        %v816 = vunpack.c.h.b16 %v511
        %v817 = vunpack.c.l.b16 %v512
        %v818 = vunpack.c.h.b16 %v512
        %v819 = vunpack.c.l.b16 %v513
        %v820 = vunpack.c.h.b16 %v513
        %v821 = vunpack.c.l.b16 %v514
        %v822 = vunpack.c.h.b16 %v514
        %v823 = vunpack.c.l.b16 %v515
        %v824 = vunpack.c.h.b16 %v515
        %v825 = vunpack.c.l.b16 %v516
        %v826 = vunpack.c.h.b16 %v516
        %v827 = vunpack.c.l.b16 %v517
        %v828 = vunpack.c.h.b16 %v517
        %v829 = vunpack.c.l.b16 %v518
        %v830 = vunpack.c.h.b16 %v518
        %v831 = vunpack.c.l.b16 %v519
        %v832 = vunpack.c.h.b16 %v519
        %v833 = vunpack.c.l.b16 %v520
        %v834 = vunpack.c.h.b16 %v520
        %v835 = vunpack.c.l.b16 %v521
        %v836 = vunpack.c.h.b16 %v521
        %v837 = vunpack.c.l.b16 %v522
        %v838 = vunpack.c.h.b16 %v522
        %v839 = vunpack.c.l.b16 %v523
        %v840 = vunpack.c.h.b16 %v523
        %v841 = vunpack.c.l.b16 %v524
        %v842 = vunpack.c.h.b16 %v524
        %v843 = vunpack.c.l.b16 %v525
        %v844 = vunpack.c.h.b16 %v525
        %v845 = vunpack.c.l.b16 %v526
        %v846 = vunpack.c.h.b16 %v526
        %v847 = vunpack.c.l.b16 %v527
        %v848 = vunpack.c.h.b16 %v527
        %v849 = vunpack.c.l.b16 %v528
        %v850 = vunpack.c.h.b16 %v528
        %v851 = vunpack.c.l.b16 %v529
        %v852 = vunpack.c.h.b16 %v529
        %v853 = vunpack.c.l.b16 %v530
        %v854 = vunpack.c.h.b16 %v530
        %v855 = vunpack.c.l.b16 %v531
        %v856 = vunpack.c.h.b16 %v531
        %v857 = vunpack.c.l.b16 %v532
        %v858 = vunpack.c.h.b16 %v532
        %v859 = vunpack.c.l.b16 %v533
        %v860 = vunpack.c.h.b16 %v533
        %v861 = vunpack.c.l.b16 %v534
        %v862 = vunpack.c.h.b16 %v534
        %v863 = vunpack.c.l.b16 %v535
        %v864 = vunpack.c.h.b16 %v535
        %v865 = vunpack.c.l.b16 %v536
        %v866 = vunpack.c.h.b16 %v536
        %v867 = vunpack.c.l.b16 %v537
        %v868 = vunpack.c.h.b16 %v537
        %v869 = vunpack.c.l.b16 %v538
        %v870 = vunpack.c.h.b16 %v538
        %v871 = vunpack.c.l.b16 %v539
        %v872 = vunpack.c.h.b16 %v539
        %v873 = vunpack.c.l.b16 %v540
        %v874 = vunpack.c.h.b16 %v540
        %v875 = vunpack.c.l.b16 %v541
        %v876 = vunpack.c.h.b16 %v541
        %v877 = vunpack.c.l.b16 %v542
        %v878 = vunpack.c.h.b16 %v542
        %v879 = vunpack.c.l.b16 %v543
        %v880 = vunpack.c.h.b16 %v543
        %v881 = vunpack.c.l.b16 %v544
        %v882 = vunpack.c.h.b16 %v544
        %v883 = vunpack.c.l.b16 %v545
        %v884 = vunpack.c.h.b16 %v545
        %v885 = vunpack.c.l.b16 %v546
        %v886 = vunpack.c.h.b16 %v546
        %v887 = vunpack.c.l.b16 %v547
        %v888 = vunpack.c.h.b16 %v547
        %v889 = vunpack.c.l.b16 %v548
        %v890 = vunpack.c.h.b16 %v548
        %v891 = vunpack.c.l.b16 %v549
        %v892 = vunpack.c.h.b16 %v549
        %v893 = vunpack.c.l.b16 %v550
        %v894 = vunpack.c.h.b16 %v550
        %v895 = vunpack.c.l.b16 %v551
        %v896 = vunpack.c.h.b16 %v551
        %v897 = vunpack.c.l.b16 %v552
        %v898 = vunpack.c.h.b16 %v552
        %v899 = vunpack.c.l.b16 %v553
        %v900 = vunpack.c.h.b16 %v553
        %v901 = vunpack.c.l.b16 %v554
        %v902 = vunpack.c.h.b16 %v554
        %v903 = vunpack.c.l.b16 %v555
        %v904 = vunpack.c.h.b16 %v555
        %v905 = vunpack.c.l.b16 %v556
        %v906 = vunpack.c.h.b16 %v556
        %v907 = vunpack.c.l.b16 %v557
        %v908 = vunpack.c.h.b16 %v557
        %v909 = vunpack.c.l.b16 %v558
        %v910 = vunpack.c.h.b16 %v558
        %v911 = vunpack.c.l.b16 %v559
        %v912 = vunpack.c.h.b16 %v559
        %v913 = vunpack.c.l.b16 %v560
        %v914 = vunpack.c.h.b16 %v560
        %v915 = vunpack.c.l.b16 %v561
        %v916 = vunpack.c.h.b16 %v561
        %v917 = vunpack.c.l.b16 %v562
        %v918 = vunpack.c.h.b16 %v562
        %v919 = vunpack.c.l.b16 %v563
        %v920 = vunpack.c.h.b16 %v563
        %v921 = vunpack.c.l.b16 %v564
        %v922 = vunpack.c.h.b16 %v564
        %v923 = vunpack.c.l.b16 %v565
        %v924 = vunpack.c.h.b16 %v565
        %v925 = vunpack.c.l.b16 %v566
        %v926 = vunpack.c.h.b16 %v566
        %v927 = vunpack.c.l.b16 %v567
        %v928 = vunpack.c.h.b16 %v567
        %v929 = vunpack.c.l.b16 %v568
        %v930 = vunpack.c.h.b16 %v568
        %v931 = vunpack.c.l.b16 %v569
        %v932 = vunpack.c.h.b16 %v569
        %v933 = vunpack.c.l.b16 %v570
        %v934 = vunpack.c.h.b16 %v570
        %v935 = vunpack.c.l.b16 %v571
        %v936 = vunpack.c.h.b16 %v571
        %v937 = vunpack.c.l.b16 %v572
        %v938 = vunpack.c.h.b16 %v572
        %v939 = vunpack.c.l.b16 %v573
        %v940 = vunpack.c.h.b16 %v573
        %v941 = vunpack.c.l.b16 %v574
        %v942 = vunpack.c.h.b16 %v574
        %v943 = vunpack.c.l.b16 %v575
        %v944 = vunpack.c.h.b16 %v575
        %v945 = vunpack.c.l.b16 %v576
        %v946 = vunpack.c.h.b16 %v576
        %v947 = vunpack.c.l.b16 %v577
        %v948 = vunpack.c.h.b16 %v577
        %v949 = vunpack.c.l.b16 %v578
        %v950 = vunpack.c.h.b16 %v578
        %v951 = vunpack.c.l.b16 %v579
        %v952 = vunpack.c.h.b16 %v579
        %v953 = vunpack.c.l.b16 %v580
        %v954 = vunpack.c.h.b16 %v580
        %v955 = vunpack.c.l.b16 %v581
        %v956 = vunpack.c.h.b16 %v581
        %v957 = vunpack.c.l.b16 %v582
        %v958 = vunpack.c.h.b16 %v582
        %v959 = vunpack.c.l.b16 %v583
        %v960 = vunpack.c.h.b16 %v583
        %v961 = vunpack.c.l.b16 %v584
        %v962 = vunpack.c.h.b16 %v584
        %v963 = vunpack.c.l.b16 %v585
        %v964 = vunpack.c.h.b16 %v585
        %v965 = vunpack.c.l.b16 %v586
        %v966 = vunpack.c.h.b16 %v586
        %v967 = vunpack.c.l.b16 %v587
        %v968 = vunpack.c.h.b16 %v587
        %v969 = vunpack.c.l.b16 %v588
        %v970 = vunpack.c.h.b16 %v588
        %v971 = vunpack.c.l.b16 %v589
        %v972 = vunpack.c.h.b16 %v589
        %v973 = vunpack.c.l.b16 %v590
        %v974 = vunpack.c.h.b16 %v590
        %v975 = vunpack.c.l.b16 %v591
        %v976 = vunpack.c.h.b16 %v591
        %v977 = vunpack.c.l.b16 %v592
        %v978 = vunpack.c.h.b16 %v592
        %v979 = vunpack.c.l.b16 %v593
        %v980 = vunpack.c.h.b16 %v593
        %v981 = vunpack.c.l.b16 %v594
        %v982 = vunpack.c.h.b16 %v594
        %v983 = vunpack.c.l.b16 %v595
        %v984 = vunpack.c.h.b16 %v595
        %v985 = vunpack.c.l.b16 %v596
        %v986 = vunpack.c.h.b16 %v596
        %v987 = vunpack.c.l.b16 %v597
        %v988 = vunpack.c.h.b16 %v597
        %v989 = vunpack.c.l.b16 %v598
        %v990 = vunpack.c.h.b16 %v598
        %v991 = vunpack.c.l.b16 %v599
        %v992 = vunpack.c.h.b16 %v599
        %v993 = vunpack.c.l.b16 %v600
        %v994 = vunpack.c.h.b16 %v600
        %v995 = vunpack.c.l.b16 %v601
        %v996 = vunpack.c.h.b16 %v601
        %v997 = vunpack.c.l.b16 %v602
        %v998 = vunpack.c.h.b16 %v602
        %v999 = vunpack.c.l.b16 %v603
        %v1000 = vunpack.c.h.b16 %v603
        %v1001 = vunpack.c.l.b16 %v604
        %v1002 = vunpack.c.h.b16 %v604
        %v1003 = vunpack.c.l.b16 %v605
        %v1004 = vunpack.c.h.b16 %v605
        %v1005 = vunpack.c.l.b16 %v606
        %v1006 = vunpack.c.h.b16 %v606
        %v1007 = vunpack.c.l.b16 %v607
        %v1008 = vunpack.c.h.b16 %v607
        %v1009 = vunpack.c.l.b16 %v608
        %v1010 = vunpack.c.h.b16 %v608
        %v1011 = vunpack.c.l.b16 %v609
        %v1012 = vunpack.c.h.b16 %v609
        %v1013 = vunpack.c.l.b16 %v610
        %v1014 = vunpack.c.h.b16 %v610
        %v1015 = vunpack.c.l.b16 %v611
        %v1016 = vunpack.c.h.b16 %v611
        %v1017 = vunpack.c.l.b16 %v612
        %v1018 = vunpack.c.h.b16 %v612
        %v1019 = vunpack.c.l.b16 %v613
        %v1020 = vunpack.c.h.b16 %v613
        %v1021 = vunpack.c.l.b16 %v614
        %v1022 = vunpack.c.h.b16 %v614
        %v1023 = vunpack.c.l.b16 %v615
        %v1024 = vunpack.c.h.b16 %v615
        %v1025 = vunpack.c.l.b16 %v616
        %v1026 = vunpack.c.h.b16 %v616
        %v1027 = vunpack.c.l.b16 %v617
        %v1028 = vunpack.c.h.b16 %v617
        %v1029 = vunpack.c.l.b16 %v618
        %v1030 = vunpack.c.h.b16 %v618
        %v1031 = vunpack.c.l.b16 %v619
        %v1032 = vunpack.c.h.b16 %v619
        %v1033 = vunpack.c.l.b16 %v620
        %v1034 = vunpack.c.h.b16 %v620
        %v1035 = vunpack.c.l.b16 %v621
        %v1036 = vunpack.c.h.b16 %v621
        %v1037 = vunpack.c.l.b16 %v622
        %v1038 = vunpack.c.h.b16 %v622
        %v1039 = vunpack.c.l.b16 %v623
        %v1040 = vunpack.c.h.b16 %v623
        %v1041 = vunpack.c.l.b16 %v624
        %v1042 = vunpack.c.h.b16 %v624
        %v1043 = vunpack.c.l.b16 %v625
        %v1044 = vunpack.c.h.b16 %v625
        %v1045 = vunpack.c.l.b16 %v626
        %v1046 = vunpack.c.h.b16 %v626
        %v1047 = vunpack.c.l.b16 %v627
        %v1048 = vunpack.c.h.b16 %v627
        %v1049 = vunpack.c.l.b16 %v628
        %v1050 = vunpack.c.h.b16 %v628
        %v1051 = vunpack.c.l.b16 %v629
        %v1052 = vunpack.c.h.b16 %v629
        %v1053 = vunpack.c.l.b16 %v630
        %v1054 = vunpack.c.h.b16 %v630
        %v1055 = vunpack.c.l.b16 %v631
        %v1056 = vunpack.c.h.b16 %v631
        %v1057 = vunpack.c.l.b16 %v632
        %v1058 = vunpack.c.h.b16 %v632
        %v1059 = vpack.c.b16 %v811, %v803
        %v1060 = vpack.c.b16 %v812, %v804
        %v1061 = vpack.c.b16 %v813, %v805
        %v1062 = vpack.c.b16 %v814, %v806
        %v1063 = vpack.c.b16 %v815, %v807
        %v1064 = vpack.c.b16 %v816, %v808
        %v1065 = vpack.c.b16 %v817, %v809
        %v1066 = vpack.c.b16 %v818, %v810
        %v1067 = vpack.c.b16 %v827, %v819
        %v1068 = vpack.c.b16 %v828, %v820
        %v1069 = vpack.c.b16 %v829, %v821
        %v1070 = vpack.c.b16 %v830, %v822
        %v1071 = vpack.c.b16 %v831, %v823
        %v1072 = vpack.c.b16 %v832, %v824
        %v1073 = vpack.c.b16 %v833, %v825
        %v1074 = vpack.c.b16 %v834, %v826
        %v1075 = vpack.c.b16 %v843, %v835
        %v1076 = vpack.c.b16 %v844, %v836
        %v1077 = vpack.c.b16 %v845, %v837
        %v1078 = vpack.c.b16 %v846, %v838
        %v1079 = vpack.c.b16 %v847, %v839
        %v1080 = vpack.c.b16 %v848, %v840
        %v1081 = vpack.c.b16 %v849, %v841
        %v1082 = vpack.c.b16 %v850, %v842
        %v1083 = vpack.c.b16 %v859, %v851
        %v1084 = vpack.c.b16 %v860, %v852
        %v1085 = vpack.c.b16 %v861, %v853
        %v1086 = vpack.c.b16 %v862, %v854
        %v1087 = vpack.c.b16 %v863, %v855
        %v1088 = vpack.c.b16 %v864, %v856
        %v1089 = vpack.c.b16 %v865, %v857
        %v1090 = vpack.c.b16 %v866, %v858
        %v1091 = vpack.c.b16 %v875, %v867
        %v1092 = vpack.c.b16 %v876, %v868
        %v1093 = vpack.c.b16 %v877, %v869
        %v1094 = vpack.c.b16 %v878, %v870
        %v1095 = vpack.c.b16 %v879, %v871
        %v1096 = vpack.c.b16 %v880, %v872
        %v1097 = vpack.c.b16 %v881, %v873
        %v1098 = vpack.c.b16 %v882, %v874
        %v1099 = vpack.c.b16 %v891, %v883
        %v1100 = vpack.c.b16 %v892, %v884
        %v1101 = vpack.c.b16 %v893, %v885
        %v1102 = vpack.c.b16 %v894, %v886
        %v1103 = vpack.c.b16 %v895, %v887
        %v1104 = vpack.c.b16 %v896, %v888
        %v1105 = vpack.c.b16 %v897, %v889
        %v1106 = vpack.c.b16 %v898, %v890
        %v1107 = vpack.c.b16 %v907, %v899
        %v1108 = vpack.c.b16 %v908, %v900
        %v1109 = vpack.c.b16 %v909, %v901
        %v1110 = vpack.c.b16 %v910, %v902
        %v1111 = vpack.c.b16 %v911, %v903
        %v1112 = vpack.c.b16 %v912, %v904
        %v1113 = vpack.c.b16 %v913, %v905
        %v1114 = vpack.c.b16 %v914, %v906
        %v1115 = vpack.c.b16 %v923, %v915
        %v1116 = vpack.c.b16 %v924, %v916
        %v1117 = vpack.c.b16 %v925, %v917
        %v1118 = vpack.c.b16 %v926, %v918
        %v1119 = vpack.c.b16 %v927, %v919
        %v1120 = vpack.c.b16 %v928, %v920
        %v1121 = vpack.c.b16 %v929, %v921
        %v1122 = vpack.c.b16 %v930, %v922
        %v1123 = vpack.c.b16 %v939, %v931
        %v1124 = vpack.c.b16 %v940, %v932
        %v1125 = vpack.c.b16 %v941, %v933
        %v1126 = vpack.c.b16 %v942, %v934
        %v1127 = vpack.c.b16 %v943, %v935
        %v1128 = vpack.c.b16 %v944, %v936
        %v1129 = vpack.c.b16 %v945, %v937
        %v1130 = vpack.c.b16 %v946, %v938
        %v1131 = vpack.c.b16 %v955, %v947
        %v1132 = vpack.c.b16 %v956, %v948
        %v1133 = vpack.c.b16 %v957, %v949
        %v1134 = vpack.c.b16 %v958, %v950
        %v1135 = vpack.c.b16 %v959, %v951
        %v1136 = vpack.c.b16 %v960, %v952
        %v1137 = vpack.c.b16 %v961, %v953
        %v1138 = vpack.c.b16 %v962, %v954
        %v1139 = vpack.c.b16 %v971, %v963
        %v1140 = vpack.c.b16 %v972, %v964
        %v1141 = vpack.c.b16 %v973, %v965
        %v1142 = vpack.c.b16 %v974, %v966
        %v1143 = vpack.c.b16 %v975, %v967
        %v1144 = vpack.c.b16 %v976, %v968
        %v1145 = vpack.c.b16 %v977, %v969
        %v1146 = vpack.c.b16 %v978, %v970
        %v1147 = vpack.c.b16 %v987, %v979
        %v1148 = vpack.c.b16 %v988, %v980
        %v1149 = vpack.c.b16 %v989, %v981
        %v1150 = vpack.c.b16 %v990, %v982
        %v1151 = vpack.c.b16 %v991, %v983
        %v1152 = vpack.c.b16 %v992, %v984
        %v1153 = vpack.c.b16 %v993, %v985
        %v1154 = vpack.c.b16 %v994, %v986
        %v1155 = vpack.c.b16 %v1003, %v995
        %v1156 = vpack.c.b16 %v1004, %v996
        %v1157 = vpack.c.b16 %v1005, %v997
        %v1158 = vpack.c.b16 %v1006, %v998
        %v1159 = vpack.c.b16 %v1007, %v999
        %v1160 = vpack.c.b16 %v1008, %v1000
        %v1161 = vpack.c.b16 %v1009, %v1001
        %v1162 = vpack.c.b16 %v1010, %v1002
        %v1163 = vpack.c.b16 %v1019, %v1011
        %v1164 = vpack.c.b16 %v1020, %v1012
        %v1165 = vpack.c.b16 %v1021, %v1013
        %v1166 = vpack.c.b16 %v1022, %v1014
        %v1167 = vpack.c.b16 %v1023, %v1015
        %v1168 = vpack.c.b16 %v1024, %v1016
        %v1169 = vpack.c.b16 %v1025, %v1017
        %v1170 = vpack.c.b16 %v1026, %v1018
        %v1171 = vpack.c.b16 %v1035, %v1027
        %v1172 = vpack.c.b16 %v1036, %v1028
        %v1173 = vpack.c.b16 %v1037, %v1029
        %v1174 = vpack.c.b16 %v1038, %v1030
        %v1175 = vpack.c.b16 %v1039, %v1031
        %v1176 = vpack.c.b16 %v1040, %v1032
        %v1177 = vpack.c.b16 %v1041, %v1033
        %v1178 = vpack.c.b16 %v1042, %v1034
        %v1179 = vpack.c.b16 %v1051, %v1043
        %v1180 = vpack.c.b16 %v1052, %v1044
        %v1181 = vpack.c.b16 %v1053, %v1045
        %v1182 = vpack.c.b16 %v1054, %v1046
        %v1183 = vpack.c.b16 %v1055, %v1047
        %v1184 = vpack.c.b16 %v1056, %v1048
        %v1185 = vpack.c.b16 %v1057, %v1049
        %v1186 = vpack.c.b16 %v1058, %v1050
        %1315 = vmatprep.subr.bf16.mxu0 %v1116
        %1316 = vmatpush1.bf16.msra.mxu0 %v1115
        %1317 = vmatprep.subr.bf16.mxu0 %v1108
        %1318 = vmatpush1.bf16.msra.mxu0 %v1107
        %1319 = vmatprep.subr.bf16.mxu0 %v1100
        %1320 = vmatpush1.bf16.msra.mxu0 %v1099
        %1321 = vmatprep.subr.bf16.mxu0 %v1092
        %1322 = vmatpush1.bf16.msra.mxu0 %v1091
        %1323 = vmatprep.subr.bf16.mxu0 %v1084
        %1324 = vmatpush1.bf16.msra.mxu0 %v1083
        %1325 = vmatprep.subr.bf16.mxu0 %v1076
        %1326 = vmatpush1.bf16.msra.mxu0 %v1075
        %1327 = vmatprep.subr.bf16.mxu0 %v1068
        %1328 = vmatpush1.bf16.msra.mxu0 %v1067
        %1329 = vmatprep.subr.bf16.mxu0 %v1060
        %1330 = vmatpush1.bf16.msra.mxu0 %v1059
        %1331 = vmatprep.subr.bf16.mxu0 %v1180
        %1332 = vmatpush2.bf16.msra.mxu0 %v1179
        %1333 = vmatprep.subr.bf16.mxu0 %v1172
        %1334 = vmatpush2.bf16.msra.mxu0 %v1171
        %1335 = vmatprep.subr.bf16.mxu0 %v1164
        %1336 = vmatpush2.bf16.msra.mxu0 %v1163
        %1337 = vmatprep.subr.bf16.mxu0 %v1156
        %1338 = vmatpush2.bf16.msra.mxu0 %v1155
        %1339 = vmatprep.subr.bf16.mxu0 %v1148
        %1340 = vmatpush2.bf16.msra.mxu0 %v1147
        %1341 = vmatprep.subr.bf16.mxu0 %v1140
        %1342 = vmatpush2.bf16.msra.mxu0 %v1139
        %1343 = vmatprep.subr.bf16.mxu0 %v1132
        %1344 = vmatpush2.bf16.msra.mxu0 %v1131
        %1345 = vmatprep.subr.bf16.mxu0 %v1124
        %1346 = vmatpush2.bf16.msra.mxu0 %v1123
        %1347 = vmatprep.mubr.bf16.mxu0 %v490
        %1348 = vmatmul.mubr.bf16.gmra.mxu0 %v489
        %v1349 = vpop.f32.mrf.mxu0
        %v1350 = vadd.f32 %v638, %v1349
        %v1351 = vpop.f32.mrf.mxu0
        %v1352 = vadd.f32 %v642, %v1351
        %v1353 = vpop.f32.mrf.mxu0
        %v1354 = vadd.f32 %v638, %v1353
        %v1355 = vpop.f32.mrf.mxu0
        %v1356 = vadd.f32 %v642, %v1355
        %1357 = vmatprep.mubr.bf16.mxu0 %v492
        %1358 = vmatmul.mubr.bf16.gmra.mxu0 %v491
        %v1359 = vpop.f32.mrf.mxu0
        %v1360 = vadd.f32 %v638, %v1359
        %v1361 = vpop.f32.mrf.mxu0
        %v1362 = vadd.f32 %v642, %v1361
        %v1363 = vpop.f32.mrf.mxu0
        %v1364 = vadd.f32 %v638, %v1363
        %v1365 = vpop.f32.mrf.mxu0
        %v1366 = vadd.f32 %v642, %v1365
        %1367 = vmatprep.mubr.bf16.mxu0 %v494
        %1368 = vmatmul.mubr.bf16.gmra.mxu0 %v493
        %v1369 = vpop.f32.mrf.mxu0
        %v1370 = vadd.f32 %v638, %v1369
        %v1371 = vpop.f32.mrf.mxu0
        %v1372 = vadd.f32 %v642, %v1371
        %v1373 = vpop.f32.mrf.mxu0
        %v1374 = vadd.f32 %v638, %v1373
        %v1375 = vpop.f32.mrf.mxu0
        %v1376 = vadd.f32 %v642, %v1375
        %1377 = vmatprep.mubr.bf16.mxu0 %v496
        %1378 = vmatmul.mubr.bf16.gmra.mxu0 %v495
        %v1379 = vpop.f32.mrf.mxu0
        %v1380 = vadd.f32 %v638, %v1379
        %v1381 = vpop.f32.mrf.mxu0
        %v1382 = vadd.f32 %v642, %v1381
        %v1383 = vpop.f32.mrf.mxu0
        %v1384 = vadd.f32 %v638, %v1383
        %v1385 = vpop.f32.mrf.mxu0
        %v1386 = vadd.f32 %v642, %v1385
        %1387 = vmatprep.mubr.bf16.mxu0 %v498
        %1388 = vmatmul.mubr.bf16.gmra.mxu0 %v497
        %v1389 = vpop.f32.mrf.mxu0
        %v1390 = vadd.f32 %v638, %v1389
        %v1391 = vpop.f32.mrf.mxu0
        %v1392 = vadd.f32 %v642, %v1391
        %v1393 = vpop.f32.mrf.mxu0
        %v1394 = vadd.f32 %v638, %v1393
        %v1395 = vpop.f32.mrf.mxu0
        %v1396 = vadd.f32 %v642, %v1395
        %1397 = vmatprep.mubr.bf16.mxu0 %v500
        %1398 = vmatmul.mubr.bf16.gmra.mxu0 %v499
        %v1399 = vpop.f32.mrf.mxu0
        %v1400 = vadd.f32 %v638, %v1399
        %v1401 = vpop.f32.mrf.mxu0
        %v1402 = vadd.f32 %v642, %v1401
        %v1403 = vpop.f32.mrf.mxu0
        %v1404 = vadd.f32 %v638, %v1403
        %v1405 = vpop.f32.mrf.mxu0
        %v1406 = vadd.f32 %v642, %v1405
        %1407 = vmatprep.mubr.bf16.mxu0 %v502
        %1408 = vmatmul.mubr.bf16.gmra.mxu0 %v501
        %v1409 = vpop.f32.mrf.mxu0
        %v1410 = vadd.f32 %v638, %v1409
        %v1411 = vpop.f32.mrf.mxu0
        %v1412 = vadd.f32 %v642, %v1411
        %v1413 = vpop.f32.mrf.mxu0
        %v1414 = vadd.f32 %v638, %v1413
        %v1415 = vpop.f32.mrf.mxu0
        %v1416 = vadd.f32 %v642, %v1415
        %1417 = vmatprep.mubr.bf16.mxu0 %v504
        %1418 = vmatmul.mubr.bf16.gmra.mxu0 %v503
        %v1419 = vpop.f32.mrf.mxu0
        %v1420 = vadd.f32 %v638, %v1419
        %v1421 = vpop.f32.mrf.mxu0
        %v1422 = vadd.f32 %v642, %v1421
        %v1423 = vpop.f32.mrf.mxu0
        %v1424 = vadd.f32 %v638, %v1423
        %v1425 = vpop.f32.mrf.mxu0
        %v1426 = vadd.f32 %v642, %v1425
        %1427 = vdwg.mxu0
        %1428 = vmatprep.subr.bf16.mxu0 %v1118
        %1429 = vmatpush1.bf16.msra.mxu0 %v1117
        %1430 = vmatprep.subr.bf16.mxu0 %v1110
        %1431 = vmatpush1.bf16.msra.mxu0 %v1109
        %1432 = vmatprep.subr.bf16.mxu0 %v1102
        %1433 = vmatpush1.bf16.msra.mxu0 %v1101
        %1434 = vmatprep.subr.bf16.mxu0 %v1094
        %1435 = vmatpush1.bf16.msra.mxu0 %v1093
        %1436 = vmatprep.subr.bf16.mxu0 %v1086
        %1437 = vmatpush1.bf16.msra.mxu0 %v1085
        %1438 = vmatprep.subr.bf16.mxu0 %v1078
        %1439 = vmatpush1.bf16.msra.mxu0 %v1077
        %1440 = vmatprep.subr.bf16.mxu0 %v1070
        %1441 = vmatpush1.bf16.msra.mxu0 %v1069
        %1442 = vmatprep.subr.bf16.mxu0 %v1062
        %1443 = vmatpush1.bf16.msra.mxu0 %v1061
        %1444 = vmatprep.subr.bf16.mxu0 %v1182
        %1445 = vmatpush2.bf16.msra.mxu0 %v1181
        %1446 = vmatprep.subr.bf16.mxu0 %v1174
        %1447 = vmatpush2.bf16.msra.mxu0 %v1173
        %1448 = vmatprep.subr.bf16.mxu0 %v1166
        %1449 = vmatpush2.bf16.msra.mxu0 %v1165
        %1450 = vmatprep.subr.bf16.mxu0 %v1158
        %1451 = vmatpush2.bf16.msra.mxu0 %v1157
        %1452 = vmatprep.subr.bf16.mxu0 %v1150
        %1453 = vmatpush2.bf16.msra.mxu0 %v1149
        %1454 = vmatprep.subr.bf16.mxu0 %v1142
        %1455 = vmatpush2.bf16.msra.mxu0 %v1141
        %1456 = vmatprep.subr.bf16.mxu0 %v1134
        %1457 = vmatpush2.bf16.msra.mxu0 %v1133
        %1458 = vmatprep.subr.bf16.mxu0 %v1126
        %1459 = vmatpush2.bf16.msra.mxu0 %v1125
        %1460 = vmatprep.mubr.bf16.mxu0 %v490
        %1461 = vmatmul.mubr.bf16.gmra.mxu0 %v489
        %v1462 = vpop.f32.mrf.mxu0
        %v1463 = vadd.f32 %v646, %v1462
        %v1464 = vpop.f32.mrf.mxu0
        %v1465 = vadd.f32 %v650, %v1464
        %v1466 = vpop.f32.mrf.mxu0
        %v1467 = vadd.f32 %v646, %v1466
        %v1468 = vpop.f32.mrf.mxu0
        %v1469 = vadd.f32 %v650, %v1468
        %1470 = vmatprep.mubr.bf16.mxu0 %v492
        %1471 = vmatmul.mubr.bf16.gmra.mxu0 %v491
        %v1472 = vpop.f32.mrf.mxu0
        %v1473 = vadd.f32 %v646, %v1472
        %v1474 = vpop.f32.mrf.mxu0
        %v1475 = vadd.f32 %v650, %v1474
        %v1476 = vpop.f32.mrf.mxu0
        %v1477 = vadd.f32 %v646, %v1476
        %v1478 = vpop.f32.mrf.mxu0
        %v1479 = vadd.f32 %v650, %v1478
        %1480 = vmatprep.mubr.bf16.mxu0 %v494
        %1481 = vmatmul.mubr.bf16.gmra.mxu0 %v493
        %v1482 = vpop.f32.mrf.mxu0
        %v1483 = vadd.f32 %v646, %v1482
        %v1484 = vpop.f32.mrf.mxu0
        %v1485 = vadd.f32 %v650, %v1484
        %v1486 = vpop.f32.mrf.mxu0
        %v1487 = vadd.f32 %v646, %v1486
        %v1488 = vpop.f32.mrf.mxu0
        %v1489 = vadd.f32 %v650, %v1488
        %1490 = vmatprep.mubr.bf16.mxu0 %v496
        %1491 = vmatmul.mubr.bf16.gmra.mxu0 %v495
        %v1492 = vpop.f32.mrf.mxu0
        %v1493 = vadd.f32 %v646, %v1492
        %v1494 = vpop.f32.mrf.mxu0
        %v1495 = vadd.f32 %v650, %v1494
        %v1496 = vpop.f32.mrf.mxu0
        %v1497 = vadd.f32 %v646, %v1496
        %v1498 = vpop.f32.mrf.mxu0
        %v1499 = vadd.f32 %v650, %v1498
        %1500 = vmatprep.mubr.bf16.mxu0 %v498
        %1501 = vmatmul.mubr.bf16.gmra.mxu0 %v497
        %v1502 = vpop.f32.mrf.mxu0
        %v1503 = vadd.f32 %v646, %v1502
        %v1504 = vpop.f32.mrf.mxu0
        %v1505 = vadd.f32 %v650, %v1504
        %v1506 = vpop.f32.mrf.mxu0
        %v1507 = vadd.f32 %v646, %v1506
        %v1508 = vpop.f32.mrf.mxu0
        %v1509 = vadd.f32 %v650, %v1508
        %1510 = vmatprep.mubr.bf16.mxu0 %v500
        %1511 = vmatmul.mubr.bf16.gmra.mxu0 %v499
        %v1512 = vpop.f32.mrf.mxu0
        %v1513 = vadd.f32 %v646, %v1512
        %v1514 = vpop.f32.mrf.mxu0
        %v1515 = vadd.f32 %v650, %v1514
        %v1516 = vpop.f32.mrf.mxu0
        %v1517 = vadd.f32 %v646, %v1516
        %v1518 = vpop.f32.mrf.mxu0
        %v1519 = vadd.f32 %v650, %v1518
        %1520 = vmatprep.mubr.bf16.mxu0 %v502
        %1521 = vmatmul.mubr.bf16.gmra.mxu0 %v501
        %v1522 = vpop.f32.mrf.mxu0
        %v1523 = vadd.f32 %v646, %v1522
        %v1524 = vpop.f32.mrf.mxu0
        %v1525 = vadd.f32 %v650, %v1524
        %v1526 = vpop.f32.mrf.mxu0
        %v1527 = vadd.f32 %v646, %v1526
        %v1528 = vpop.f32.mrf.mxu0
        %v1529 = vadd.f32 %v650, %v1528
        %1530 = vmatprep.mubr.bf16.mxu0 %v504
        %1531 = vmatmul.mubr.bf16.gmra.mxu0 %v503
        %v1532 = vpop.f32.mrf.mxu0
        %v1533 = vadd.f32 %v646, %v1532
        %v1534 = vpop.f32.mrf.mxu0
        %v1535 = vadd.f32 %v650, %v1534
        %v1536 = vpop.f32.mrf.mxu0
        %v1537 = vadd.f32 %v646, %v1536
        %v1538 = vpop.f32.mrf.mxu0
        %v1539 = vadd.f32 %v650, %v1538
        %1540 = vdwg.mxu0
        %1541 = vmatprep.subr.bf16.mxu0 %v1120
        %1542 = vmatpush1.bf16.msra.mxu0 %v1119
        %1543 = vmatprep.subr.bf16.mxu0 %v1112
        %1544 = vmatpush1.bf16.msra.mxu0 %v1111
        %1545 = vmatprep.subr.bf16.mxu0 %v1104
        %1546 = vmatpush1.bf16.msra.mxu0 %v1103
        %1547 = vmatprep.subr.bf16.mxu0 %v1096
        %1548 = vmatpush1.bf16.msra.mxu0 %v1095
        %1549 = vmatprep.subr.bf16.mxu0 %v1088
        %1550 = vmatpush1.bf16.msra.mxu0 %v1087
        %1551 = vmatprep.subr.bf16.mxu0 %v1080
        %1552 = vmatpush1.bf16.msra.mxu0 %v1079
        %1553 = vmatprep.subr.bf16.mxu0 %v1072
        %1554 = vmatpush1.bf16.msra.mxu0 %v1071
        %1555 = vmatprep.subr.bf16.mxu0 %v1064
        %1556 = vmatpush1.bf16.msra.mxu0 %v1063
        %1557 = vmatprep.subr.bf16.mxu0 %v1184
        %1558 = vmatpush2.bf16.msra.mxu0 %v1183
        %1559 = vmatprep.subr.bf16.mxu0 %v1176
        %1560 = vmatpush2.bf16.msra.mxu0 %v1175
        %1561 = vmatprep.subr.bf16.mxu0 %v1168
        %1562 = vmatpush2.bf16.msra.mxu0 %v1167
        %1563 = vmatprep.subr.bf16.mxu0 %v1160
        %1564 = vmatpush2.bf16.msra.mxu0 %v1159
        %1565 = vmatprep.subr.bf16.mxu0 %v1152
        %1566 = vmatpush2.bf16.msra.mxu0 %v1151
        %1567 = vmatprep.subr.bf16.mxu0 %v1144
        %1568 = vmatpush2.bf16.msra.mxu0 %v1143
        %1569 = vmatprep.subr.bf16.mxu0 %v1136
        %1570 = vmatpush2.bf16.msra.mxu0 %v1135
        %1571 = vmatprep.subr.bf16.mxu0 %v1128
        %1572 = vmatpush2.bf16.msra.mxu0 %v1127
        %1573 = vmatprep.mubr.bf16.mxu0 %v490
        %1574 = vmatmul.mubr.bf16.gmra.mxu0 %v489
        %v1575 = vpop.f32.mrf.mxu0
        %v1576 = vadd.f32 %v654, %v1575
        %v1577 = vpop.f32.mrf.mxu0
        %v1578 = vadd.f32 %v658, %v1577
        %v1579 = vpop.f32.mrf.mxu0
        %v1580 = vadd.f32 %v654, %v1579
        %v1581 = vpop.f32.mrf.mxu0
        %v1582 = vadd.f32 %v658, %v1581
        %1583 = vmatprep.mubr.bf16.mxu0 %v492
        %1584 = vmatmul.mubr.bf16.gmra.mxu0 %v491
        %v1585 = vpop.f32.mrf.mxu0
        %v1586 = vadd.f32 %v654, %v1585
        %v1587 = vpop.f32.mrf.mxu0
        %v1588 = vadd.f32 %v658, %v1587
        %v1589 = vpop.f32.mrf.mxu0
        %v1590 = vadd.f32 %v654, %v1589
        %v1591 = vpop.f32.mrf.mxu0
        %v1592 = vadd.f32 %v658, %v1591
        %1593 = vmatprep.mubr.bf16.mxu0 %v494
        %1594 = vmatmul.mubr.bf16.gmra.mxu0 %v493
        %v1595 = vpop.f32.mrf.mxu0
        %v1596 = vadd.f32 %v654, %v1595
        %v1597 = vpop.f32.mrf.mxu0
        %v1598 = vadd.f32 %v658, %v1597
        %v1599 = vpop.f32.mrf.mxu0
        %v1600 = vadd.f32 %v654, %v1599
        %v1601 = vpop.f32.mrf.mxu0
        %v1602 = vadd.f32 %v658, %v1601
        %1603 = vmatprep.mubr.bf16.mxu0 %v496
        %1604 = vmatmul.mubr.bf16.gmra.mxu0 %v495
        %v1605 = vpop.f32.mrf.mxu0
        %v1606 = vadd.f32 %v654, %v1605
        %v1607 = vpop.f32.mrf.mxu0
        %v1608 = vadd.f32 %v658, %v1607
        %v1609 = vpop.f32.mrf.mxu0
        %v1610 = vadd.f32 %v654, %v1609
        %v1611 = vpop.f32.mrf.mxu0
        %v1612 = vadd.f32 %v658, %v1611
        %1613 = vmatprep.mubr.bf16.mxu0 %v498
        %1614 = vmatmul.mubr.bf16.gmra.mxu0 %v497
        %v1615 = vpop.f32.mrf.mxu0
        %v1616 = vadd.f32 %v654, %v1615
        %v1617 = vpop.f32.mrf.mxu0
        %v1618 = vadd.f32 %v658, %v1617
        %v1619 = vpop.f32.mrf.mxu0
        %v1620 = vadd.f32 %v654, %v1619
        %v1621 = vpop.f32.mrf.mxu0
        %v1622 = vadd.f32 %v658, %v1621
        %1623 = vmatprep.mubr.bf16.mxu0 %v500
        %1624 = vmatmul.mubr.bf16.gmra.mxu0 %v499
        %v1625 = vpop.f32.mrf.mxu0
        %v1626 = vadd.f32 %v654, %v1625
        %v1627 = vpop.f32.mrf.mxu0
        %v1628 = vadd.f32 %v658, %v1627
        %v1629 = vpop.f32.mrf.mxu0
        %v1630 = vadd.f32 %v654, %v1629
        %v1631 = vpop.f32.mrf.mxu0
        %v1632 = vadd.f32 %v658, %v1631
        %1633 = vmatprep.mubr.bf16.mxu0 %v502
        %1634 = vmatmul.mubr.bf16.gmra.mxu0 %v501
        %v1635 = vpop.f32.mrf.mxu0
        %v1636 = vadd.f32 %v654, %v1635
        %v1637 = vpop.f32.mrf.mxu0
        %v1638 = vadd.f32 %v658, %v1637
        %v1639 = vpop.f32.mrf.mxu0
        %v1640 = vadd.f32 %v654, %v1639
        %v1641 = vpop.f32.mrf.mxu0
        %v1642 = vadd.f32 %v658, %v1641
        %1643 = vmatprep.mubr.bf16.mxu0 %v504
        %1644 = vmatmul.mubr.bf16.gmra.mxu0 %v503
        %v1645 = vpop.f32.mrf.mxu0
        %v1646 = vadd.f32 %v654, %v1645
        %v1647 = vpop.f32.mrf.mxu0
        %v1648 = vadd.f32 %v658, %v1647
        %v1649 = vpop.f32.mrf.mxu0
        %v1650 = vadd.f32 %v654, %v1649
        %v1651 = vpop.f32.mrf.mxu0
        %v1652 = vadd.f32 %v658, %v1651
        %1653 = vdwg.mxu0
        %1654 = vmatprep.subr.bf16.mxu0 %v1122
        %1655 = vmatpush1.bf16.msra.mxu0 %v1121
        %1656 = vmatprep.subr.bf16.mxu0 %v1114
        %1657 = vmatpush1.bf16.msra.mxu0 %v1113
        %1658 = vmatprep.subr.bf16.mxu0 %v1106
        %1659 = vmatpush1.bf16.msra.mxu0 %v1105
        %1660 = vmatprep.subr.bf16.mxu0 %v1098
        %1661 = vmatpush1.bf16.msra.mxu0 %v1097
        %1662 = vmatprep.subr.bf16.mxu0 %v1090
        %1663 = vmatpush1.bf16.msra.mxu0 %v1089
        %1664 = vmatprep.subr.bf16.mxu0 %v1082
        %1665 = vmatpush1.bf16.msra.mxu0 %v1081
        %1666 = vmatprep.subr.bf16.mxu0 %v1074
        %1667 = vmatpush1.bf16.msra.mxu0 %v1073
        %1668 = vmatprep.subr.bf16.mxu0 %v1066
        %1669 = vmatpush1.bf16.msra.mxu0 %v1065
        %1670 = vmatprep.subr.bf16.mxu0 %v1186
        %1671 = vmatpush2.bf16.msra.mxu0 %v1185
        %1672 = vmatprep.subr.bf16.mxu0 %v1178
        %1673 = vmatpush2.bf16.msra.mxu0 %v1177
        %1674 = vmatprep.subr.bf16.mxu0 %v1170
        %1675 = vmatpush2.bf16.msra.mxu0 %v1169
        %1676 = vmatprep.subr.bf16.mxu0 %v1162
        %1677 = vmatpush2.bf16.msra.mxu0 %v1161
        %1678 = vmatprep.subr.bf16.mxu0 %v1154
        %1679 = vmatpush2.bf16.msra.mxu0 %v1153
        %1680 = vmatprep.subr.bf16.mxu0 %v1146
        %1681 = vmatpush2.bf16.msra.mxu0 %v1145
        %1682 = vmatprep.subr.bf16.mxu0 %v1138
        %1683 = vmatpush2.bf16.msra.mxu0 %v1137
        %1684 = vmatprep.subr.bf16.mxu0 %v1130
        %1685 = vmatpush2.bf16.msra.mxu0 %v1129
        %1686 = vmatprep.mubr.bf16.mxu0 %v490
        %1687 = vmatmul.mubr.bf16.gmra.mxu0 %v489
        %v1688 = vpop.f32.mrf.mxu0
        %v1689 = vadd.f32 %v662, %v1688
        %v1690 = vpop.f32.mrf.mxu0
        %v1691 = vadd.f32 %v666, %v1690
        %v1692 = vpop.f32.mrf.mxu0
        %v1693 = vadd.f32 %v662, %v1692
        %v1694 = vpop.f32.mrf.mxu0
        %v1695 = vadd.f32 %v666, %v1694
        %1696 = vmatprep.mubr.bf16.mxu0 %v492
        %1697 = vmatmul.mubr.bf16.gmra.mxu0 %v491
        %v1698 = vpop.f32.mrf.mxu0
        %v1699 = vadd.f32 %v662, %v1698
        %v1700 = vpop.f32.mrf.mxu0
        %v1701 = vadd.f32 %v666, %v1700
        %v1702 = vpop.f32.mrf.mxu0
        %v1703 = vadd.f32 %v662, %v1702
        %v1704 = vpop.f32.mrf.mxu0
        %v1705 = vadd.f32 %v666, %v1704
        %1706 = vmatprep.mubr.bf16.mxu0 %v494
        %1707 = vmatmul.mubr.bf16.gmra.mxu0 %v493
        %v1708 = vpop.f32.mrf.mxu0
        %v1709 = vadd.f32 %v662, %v1708
        %v1710 = vpop.f32.mrf.mxu0
        %v1711 = vadd.f32 %v666, %v1710
        %v1712 = vpop.f32.mrf.mxu0
        %v1713 = vadd.f32 %v662, %v1712
        %v1714 = vpop.f32.mrf.mxu0
        %v1715 = vadd.f32 %v666, %v1714
        %1716 = vmatprep.mubr.bf16.mxu0 %v496
        %1717 = vmatmul.mubr.bf16.gmra.mxu0 %v495
        %v1718 = vpop.f32.mrf.mxu0
        %v1719 = vadd.f32 %v662, %v1718
        %v1720 = vpop.f32.mrf.mxu0
        %v1721 = vadd.f32 %v666, %v1720
        %v1722 = vpop.f32.mrf.mxu0
        %v1723 = vadd.f32 %v662, %v1722
        %v1724 = vpop.f32.mrf.mxu0
        %v1725 = vadd.f32 %v666, %v1724
        %1726 = vmatprep.mubr.bf16.mxu0 %v498
        %1727 = vmatmul.mubr.bf16.gmra.mxu0 %v497
        %v1728 = vpop.f32.mrf.mxu0
        %v1729 = vadd.f32 %v662, %v1728
        %v1730 = vpop.f32.mrf.mxu0
        %v1731 = vadd.f32 %v666, %v1730
        %v1732 = vpop.f32.mrf.mxu0
        %v1733 = vadd.f32 %v662, %v1732
        %v1734 = vpop.f32.mrf.mxu0
        %v1735 = vadd.f32 %v666, %v1734
        %1736 = vmatprep.mubr.bf16.mxu0 %v500
        %1737 = vmatmul.mubr.bf16.gmra.mxu0 %v499
        %v1738 = vpop.f32.mrf.mxu0
        %v1739 = vadd.f32 %v662, %v1738
        %v1740 = vpop.f32.mrf.mxu0
        %v1741 = vadd.f32 %v666, %v1740
        %v1742 = vpop.f32.mrf.mxu0
        %v1743 = vadd.f32 %v662, %v1742
        %v1744 = vpop.f32.mrf.mxu0
        %v1745 = vadd.f32 %v666, %v1744
        %1746 = vmatprep.mubr.bf16.mxu0 %v502
        %1747 = vmatmul.mubr.bf16.gmra.mxu0 %v501
        %v1748 = vpop.f32.mrf.mxu0
        %v1749 = vadd.f32 %v662, %v1748
        %v1750 = vpop.f32.mrf.mxu0
        %v1751 = vadd.f32 %v666, %v1750
        %v1752 = vpop.f32.mrf.mxu0
        %v1753 = vadd.f32 %v662, %v1752
        %v1754 = vpop.f32.mrf.mxu0
        %v1755 = vadd.f32 %v666, %v1754
        %1756 = vmatprep.mubr.bf16.mxu0 %v504
        %1757 = vmatmul.mubr.bf16.gmra.mxu0 %v503
        %v1758 = vpop.f32.mrf.mxu0
        %v1759 = vadd.f32 %v662, %v1758
        %v1760 = vpop.f32.mrf.mxu0
        %v1761 = vadd.f32 %v666, %v1760
        %v1762 = vpop.f32.mrf.mxu0
        %v1763 = vadd.f32 %v662, %v1762
        %v1764 = vpop.f32.mrf.mxu0
        %v1765 = vadd.f32 %v666, %v1764
        %1766 = vdwg.mxu0
        %v1767 = vmax.f32 %v1350, 0.0
        %v1768 = vmax.f32 %v1352, 0.0
        %v1769 = vmax.f32 %v1463, 0.0
        %v1770 = vmax.f32 %v1465, 0.0
        %v1771 = vmax.f32 %v1576, 0.0
        %v1772 = vmax.f32 %v1578, 0.0
        %v1773 = vmax.f32 %v1689, 0.0
        %v1774 = vmax.f32 %v1691, 0.0
        %v1775 = vmax.f32 %v1354, 0.0
        %v1776 = vmax.f32 %v1356, 0.0
        %v1777 = vmax.f32 %v1467, 0.0
        %v1778 = vmax.f32 %v1469, 0.0
        %v1779 = vmax.f32 %v1580, 0.0
        %v1780 = vmax.f32 %v1582, 0.0
        %v1781 = vmax.f32 %v1693, 0.0
        %v1782 = vmax.f32 %v1695, 0.0
        %v1783 = vmax.f32 %v1360, 0.0
        %v1784 = vmax.f32 %v1362, 0.0
        %v1785 = vmax.f32 %v1473, 0.0
        %v1786 = vmax.f32 %v1475, 0.0
        %v1787 = vmax.f32 %v1586, 0.0
        %v1788 = vmax.f32 %v1588, 0.0
        %v1789 = vmax.f32 %v1699, 0.0
        %v1790 = vmax.f32 %v1701, 0.0
        %v1791 = vmax.f32 %v1364, 0.0
        %v1792 = vmax.f32 %v1366, 0.0
        %v1793 = vmax.f32 %v1477, 0.0
        %v1794 = vmax.f32 %v1479, 0.0
        %v1795 = vmax.f32 %v1590, 0.0
        %v1796 = vmax.f32 %v1592, 0.0
        %v1797 = vmax.f32 %v1703, 0.0
        %v1798 = vmax.f32 %v1705, 0.0
        %v1799 = vmax.f32 %v1370, 0.0
        %v1800 = vmax.f32 %v1372, 0.0
        %v1801 = vmax.f32 %v1483, 0.0
        %v1802 = vmax.f32 %v1485, 0.0
        %v1803 = vmax.f32 %v1596, 0.0
        %v1804 = vmax.f32 %v1598, 0.0
        %v1805 = vmax.f32 %v1709, 0.0
        %v1806 = vmax.f32 %v1711, 0.0
        %v1807 = vmax.f32 %v1374, 0.0
        %v1808 = vmax.f32 %v1376, 0.0
        %v1809 = vmax.f32 %v1487, 0.0
        %v1810 = vmax.f32 %v1489, 0.0
        %v1811 = vmax.f32 %v1600, 0.0
        %v1812 = vmax.f32 %v1602, 0.0
        %v1813 = vmax.f32 %v1713, 0.0
        %v1814 = vmax.f32 %v1715, 0.0
        %v1815 = vmax.f32 %v1380, 0.0
        %v1816 = vmax.f32 %v1382, 0.0
        %v1817 = vmax.f32 %v1493, 0.0
        %v1818 = vmax.f32 %v1495, 0.0
        %v1819 = vmax.f32 %v1606, 0.0
        %v1820 = vmax.f32 %v1608, 0.0
        %v1821 = vmax.f32 %v1719, 0.0
        %v1822 = vmax.f32 %v1721, 0.0
        %v1823 = vmax.f32 %v1384, 0.0
        %v1824 = vmax.f32 %v1386, 0.0
        %v1825 = vmax.f32 %v1497, 0.0
        %v1826 = vmax.f32 %v1499, 0.0
        %v1827 = vmax.f32 %v1610, 0.0
        %v1828 = vmax.f32 %v1612, 0.0
        %v1829 = vmax.f32 %v1723, 0.0
        %v1830 = vmax.f32 %v1725, 0.0
        %v1831 = vmax.f32 %v1390, 0.0
        %v1832 = vmax.f32 %v1392, 0.0
        %v1833 = vmax.f32 %v1503, 0.0
        %v1834 = vmax.f32 %v1505, 0.0
        %v1835 = vmax.f32 %v1616, 0.0
        %v1836 = vmax.f32 %v1618, 0.0
        %v1837 = vmax.f32 %v1729, 0.0
        %v1838 = vmax.f32 %v1731, 0.0
        %v1839 = vmax.f32 %v1394, 0.0
        %v1840 = vmax.f32 %v1396, 0.0
        %v1841 = vmax.f32 %v1507, 0.0
        %v1842 = vmax.f32 %v1509, 0.0
        %v1843 = vmax.f32 %v1620, 0.0
        %v1844 = vmax.f32 %v1622, 0.0
        %v1845 = vmax.f32 %v1733, 0.0
        %v1846 = vmax.f32 %v1735, 0.0
        %v1847 = vmax.f32 %v1400, 0.0
        %v1848 = vmax.f32 %v1402, 0.0
        %v1849 = vmax.f32 %v1513, 0.0
        %v1850 = vmax.f32 %v1515, 0.0
        %v1851 = vmax.f32 %v1626, 0.0
        %v1852 = vmax.f32 %v1628, 0.0
        %v1853 = vmax.f32 %v1739, 0.0
        %v1854 = vmax.f32 %v1741, 0.0
        %v1855 = vmax.f32 %v1404, 0.0
        %v1856 = vmax.f32 %v1406, 0.0
        %v1857 = vmax.f32 %v1517, 0.0
        %v1858 = vmax.f32 %v1519, 0.0
        %v1859 = vmax.f32 %v1630, 0.0
        %v1860 = vmax.f32 %v1632, 0.0
        %v1861 = vmax.f32 %v1743, 0.0
        %v1862 = vmax.f32 %v1745, 0.0
        %v1863 = vmax.f32 %v1410, 0.0
        %v1864 = vmax.f32 %v1412, 0.0
        %v1865 = vmax.f32 %v1523, 0.0
        %v1866 = vmax.f32 %v1525, 0.0
        %v1867 = vmax.f32 %v1636, 0.0
        %v1868 = vmax.f32 %v1638, 0.0
        %v1869 = vmax.f32 %v1749, 0.0
        %v1870 = vmax.f32 %v1751, 0.0
        %v1871 = vmax.f32 %v1414, 0.0
        %v1872 = vmax.f32 %v1416, 0.0
        %v1873 = vmax.f32 %v1527, 0.0
        %v1874 = vmax.f32 %v1529, 0.0
        %v1875 = vmax.f32 %v1640, 0.0
        %v1876 = vmax.f32 %v1642, 0.0
        %v1877 = vmax.f32 %v1753, 0.0
        %v1878 = vmax.f32 %v1755, 0.0
        %v1879 = vmax.f32 %v1420, 0.0
        %v1880 = vmax.f32 %v1422, 0.0
        %v1881 = vmax.f32 %v1533, 0.0
        %v1882 = vmax.f32 %v1535, 0.0
        %v1883 = vmax.f32 %v1646, 0.0
        %v1884 = vmax.f32 %v1648, 0.0
        %v1885 = vmax.f32 %v1759, 0.0
        %v1886 = vmax.f32 %v1761, 0.0
        %v1887 = vmax.f32 %v1424, 0.0
        %v1888 = vmax.f32 %v1426, 0.0
        %v1889 = vmax.f32 %v1537, 0.0
        %v1890 = vmax.f32 %v1539, 0.0
        %v1891 = vmax.f32 %v1650, 0.0
        %v1892 = vmax.f32 %v1652, 0.0
        %v1893 = vmax.f32 %v1763, 0.0
        %v1894 = vmax.f32 %v1765, 0.0
        %v1895 = vpack.c.bf16 %v1775, %v1767
        %v1896 = vpack.c.bf16 %v1776, %v1768
        %v1897 = vpack.c.bf16 %v1777, %v1769
        %v1898 = vpack.c.bf16 %v1778, %v1770
        %v1899 = vpack.c.bf16 %v1779, %v1771
        %v1900 = vpack.c.bf16 %v1780, %v1772
        %v1901 = vpack.c.bf16 %v1781, %v1773
        %v1902 = vpack.c.bf16 %v1782, %v1774
        %v1903 = vpack.c.bf16 %v1791, %v1783
        %v1904 = vpack.c.bf16 %v1792, %v1784
        %v1905 = vpack.c.bf16 %v1793, %v1785
        %v1906 = vpack.c.bf16 %v1794, %v1786
        %v1907 = vpack.c.bf16 %v1795, %v1787
        %v1908 = vpack.c.bf16 %v1796, %v1788
        %v1909 = vpack.c.bf16 %v1797, %v1789
        %v1910 = vpack.c.bf16 %v1798, %v1790
        %v1911 = vpack.c.bf16 %v1807, %v1799
        %v1912 = vpack.c.bf16 %v1808, %v1800
        %v1913 = vpack.c.bf16 %v1809, %v1801
        %v1914 = vpack.c.bf16 %v1810, %v1802
        %v1915 = vpack.c.bf16 %v1811, %v1803
        %v1916 = vpack.c.bf16 %v1812, %v1804
        %v1917 = vpack.c.bf16 %v1813, %v1805
        %v1918 = vpack.c.bf16 %v1814, %v1806
        %v1919 = vpack.c.bf16 %v1823, %v1815
        %v1920 = vpack.c.bf16 %v1824, %v1816
        %v1921 = vpack.c.bf16 %v1825, %v1817
        %v1922 = vpack.c.bf16 %v1826, %v1818
        %v1923 = vpack.c.bf16 %v1827, %v1819
        %v1924 = vpack.c.bf16 %v1828, %v1820
        %v1925 = vpack.c.bf16 %v1829, %v1821
        %v1926 = vpack.c.bf16 %v1830, %v1822
        %v1927 = vpack.c.bf16 %v1839, %v1831
        %v1928 = vpack.c.bf16 %v1840, %v1832
        %v1929 = vpack.c.bf16 %v1841, %v1833
        %v1930 = vpack.c.bf16 %v1842, %v1834
        %v1931 = vpack.c.bf16 %v1843, %v1835
        %v1932 = vpack.c.bf16 %v1844, %v1836
        %v1933 = vpack.c.bf16 %v1845, %v1837
        %v1934 = vpack.c.bf16 %v1846, %v1838
        %v1935 = vpack.c.bf16 %v1855, %v1847
        %v1936 = vpack.c.bf16 %v1856, %v1848
        %v1937 = vpack.c.bf16 %v1857, %v1849
        %v1938 = vpack.c.bf16 %v1858, %v1850
        %v1939 = vpack.c.bf16 %v1859, %v1851
        %v1940 = vpack.c.bf16 %v1860, %v1852
        %v1941 = vpack.c.bf16 %v1861, %v1853
        %v1942 = vpack.c.bf16 %v1862, %v1854
        %v1943 = vpack.c.bf16 %v1871, %v1863
        %v1944 = vpack.c.bf16 %v1872, %v1864
        %v1945 = vpack.c.bf16 %v1873, %v1865
        %v1946 = vpack.c.bf16 %v1874, %v1866
        %v1947 = vpack.c.bf16 %v1875, %v1867
        %v1948 = vpack.c.bf16 %v1876, %v1868
        %v1949 = vpack.c.bf16 %v1877, %v1869
        %v1950 = vpack.c.bf16 %v1878, %v1870
        %v1951 = vpack.c.bf16 %v1887, %v1879
        %v1952 = vpack.c.bf16 %v1888, %v1880
        %v1953 = vpack.c.bf16 %v1889, %v1881
        %v1954 = vpack.c.bf16 %v1890, %v1882
        %v1955 = vpack.c.bf16 %v1891, %v1883
        %v1956 = vpack.c.bf16 %v1892, %v1884
        %v1957 = vpack.c.bf16 %v1893, %v1885
        %v1958 = vpack.c.bf16 %v1894, %v1886
        %v1959 = vld [vmem:[#allocation7] sm:$0xff]
        %v1960 = vld [vmem:[#allocation7 + $0x8] sm:$0xff]
        %v1961 = vld [vmem:[#allocation7 + $0x10] sm:$0xff]
        %v1962 = vld [vmem:[#allocation7 + $0x18] sm:$0xff]
        %v1963 = vld [vmem:[#allocation7 + $0x20] sm:$0xff]
        %v1964 = vld [vmem:[#allocation7 + $0x28] sm:$0xff]
        %v1965 = vld [vmem:[#allocation7 + $0x30] sm:$0xff]
        %v1966 = vld [vmem:[#allocation7 + $0x38] sm:$0xff]
        %v1967 = vld [vmem:[#allocation7 + $0x40] sm:$0xff]
        %v1968 = vld [vmem:[#allocation7 + $0x48] sm:$0xff]
        %v1969 = vld [vmem:[#allocation7 + $0x50] sm:$0xff]
        %v1970 = vld [vmem:[#allocation7 + $0x58] sm:$0xff]
        %v1971 = vld [vmem:[#allocation7 + $0x60] sm:$0xff]
        %v1972 = vld [vmem:[#allocation7 + $0x68] sm:$0xff]
        %v1973 = vld [vmem:[#allocation7 + $0x70] sm:$0xff]
        %v1974 = vld [vmem:[#allocation7 + $0x78] sm:$0xff]
        %v1975 = vld [vmem:[#allocation7 + $0x80] sm:$0xff]
        %v1976 = vld [vmem:[#allocation7 + $0x88] sm:$0xff]
        %v1977 = vld [vmem:[#allocation7 + $0x90] sm:$0xff]
        %v1978 = vld [vmem:[#allocation7 + $0x98] sm:$0xff]
        %v1979 = vld [vmem:[#allocation7 + $0xa0] sm:$0xff]
        %v1980 = vld [vmem:[#allocation7 + $0xa8] sm:$0xff]
        %v1981 = vld [vmem:[#allocation7 + $0xb0] sm:$0xff]
        %v1982 = vld [vmem:[#allocation7 + $0xb8] sm:$0xff]
        %v1983 = vld [vmem:[#allocation7 + $0xc0] sm:$0xff]
        %v1984 = vld [vmem:[#allocation7 + $0xc8] sm:$0xff]
        %v1985 = vld [vmem:[#allocation7 + $0xd0] sm:$0xff]
        %v1986 = vld [vmem:[#allocation7 + $0xd8] sm:$0xff]
        %v1987 = vld [vmem:[#allocation7 + $0xe0] sm:$0xff]
        %v1988 = vld [vmem:[#allocation7 + $0xe8] sm:$0xff]
        %v1989 = vld [vmem:[#allocation7 + $0xf0] sm:$0xff]
        %v1990 = vld [vmem:[#allocation7 + $0xf8] sm:$0xff]
        %v1991 = vld [vmem:[#allocation7 + $0x100] sm:$0xff]
        %v1992 = vld [vmem:[#allocation7 + $0x108] sm:$0xff]
        %v1993 = vld [vmem:[#allocation7 + $0x110] sm:$0xff]
        %v1994 = vld [vmem:[#allocation7 + $0x118] sm:$0xff]
        %v1995 = vld [vmem:[#allocation7 + $0x120] sm:$0xff]
        %v1996 = vld [vmem:[#allocation7 + $0x128] sm:$0xff]
        %v1997 = vld [vmem:[#allocation7 + $0x130] sm:$0xff]
        %v1998 = vld [vmem:[#allocation7 + $0x138] sm:$0xff]
        %v1999 = vld [vmem:[#allocation7 + $0x140] sm:$0xff]
        %v2000 = vld [vmem:[#allocation7 + $0x148] sm:$0xff]
        %v2001 = vld [vmem:[#allocation7 + $0x150] sm:$0xff]
        %v2002 = vld [vmem:[#allocation7 + $0x158] sm:$0xff]
        %v2003 = vld [vmem:[#allocation7 + $0x160] sm:$0xff]
        %v2004 = vld [vmem:[#allocation7 + $0x168] sm:$0xff]
        %v2005 = vld [vmem:[#allocation7 + $0x170] sm:$0xff]
        %v2006 = vld [vmem:[#allocation7 + $0x178] sm:$0xff]
        %v2007 = vld [vmem:[#allocation7 + $0x180] sm:$0xff]
        %v2008 = vld [vmem:[#allocation7 + $0x188] sm:$0xff]
        %v2009 = vld [vmem:[#allocation7 + $0x190] sm:$0xff]
        %v2010 = vld [vmem:[#allocation7 + $0x198] sm:$0xff]
        %v2011 = vld [vmem:[#allocation7 + $0x1a0] sm:$0xff]
        %v2012 = vld [vmem:[#allocation7 + $0x1a8] sm:$0xff]
        %v2013 = vld [vmem:[#allocation7 + $0x1b0] sm:$0xff]
        %v2014 = vld [vmem:[#allocation7 + $0x1b8] sm:$0xff]
        %v2015 = vld [vmem:[#allocation7 + $0x1c0] sm:$0xff]
        %v2016 = vld [vmem:[#allocation7 + $0x1c8] sm:$0xff]
        %v2017 = vld [vmem:[#allocation7 + $0x1d0] sm:$0xff]
        %v2018 = vld [vmem:[#allocation7 + $0x1d8] sm:$0xff]
        %v2019 = vld [vmem:[#allocation7 + $0x1e0] sm:$0xff]
        %v2020 = vld [vmem:[#allocation7 + $0x1e8] sm:$0xff]
        %v2021 = vld [vmem:[#allocation7 + $0x1f0] sm:$0xff]
        %v2022 = vld [vmem:[#allocation7 + $0x1f8] sm:$0xff]
        %v2023 = vld [vmem:[#allocation7 + $0x200] sm:$0xff]
        %v2024 = vld [vmem:[#allocation7 + $0x208] sm:$0xff]
        %v2025 = vld [vmem:[#allocation7 + $0x210] sm:$0xff]
        %v2026 = vld [vmem:[#allocation7 + $0x218] sm:$0xff]
        %v2027 = vld [vmem:[#allocation7 + $0x220] sm:$0xff]
        %v2028 = vld [vmem:[#allocation7 + $0x228] sm:$0xff]
        %v2029 = vld [vmem:[#allocation7 + $0x230] sm:$0xff]
        %v2030 = vld [vmem:[#allocation7 + $0x238] sm:$0xff]
        %v2031 = vld [vmem:[#allocation7 + $0x240] sm:$0xff]
        %v2032 = vld [vmem:[#allocation7 + $0x248] sm:$0xff]
        %v2033 = vld [vmem:[#allocation7 + $0x250] sm:$0xff]
        %v2034 = vld [vmem:[#allocation7 + $0x258] sm:$0xff]
        %v2035 = vld [vmem:[#allocation7 + $0x260] sm:$0xff]
        %v2036 = vld [vmem:[#allocation7 + $0x268] sm:$0xff]
        %v2037 = vld [vmem:[#allocation7 + $0x270] sm:$0xff]
        %v2038 = vld [vmem:[#allocation7 + $0x278] sm:$0xff]
        %v2039 = vld [vmem:[#allocation7 + $0x280] sm:$0xff]
        %v2040 = vld [vmem:[#allocation7 + $0x288] sm:$0xff]
        %v2041 = vld [vmem:[#allocation7 + $0x290] sm:$0xff]
        %v2042 = vld [vmem:[#allocation7 + $0x298] sm:$0xff]
        %v2043 = vld [vmem:[#allocation7 + $0x2a0] sm:$0xff]
        %v2044 = vld [vmem:[#allocation7 + $0x2a8] sm:$0xff]
        %v2045 = vld [vmem:[#allocation7 + $0x2b0] sm:$0xff]
        %v2046 = vld [vmem:[#allocation7 + $0x2b8] sm:$0xff]
        %v2047 = vld [vmem:[#allocation7 + $0x2c0] sm:$0xff]
        %v2048 = vld [vmem:[#allocation7 + $0x2c8] sm:$0xff]
        %v2049 = vld [vmem:[#allocation7 + $0x2d0] sm:$0xff]
        %v2050 = vld [vmem:[#allocation7 + $0x2d8] sm:$0xff]
        %v2051 = vld [vmem:[#allocation7 + $0x2e0] sm:$0xff]
        %v2052 = vld [vmem:[#allocation7 + $0x2e8] sm:$0xff]
        %v2053 = vld [vmem:[#allocation7 + $0x2f0] sm:$0xff]
        %v2054 = vld [vmem:[#allocation7 + $0x2f8] sm:$0xff]
        %v2055 = vld [vmem:[#allocation7 + $0x300] sm:$0xff]
        %v2056 = vld [vmem:[#allocation7 + $0x308] sm:$0xff]
        %v2057 = vld [vmem:[#allocation7 + $0x310] sm:$0xff]
        %v2058 = vld [vmem:[#allocation7 + $0x318] sm:$0xff]
        %v2059 = vld [vmem:[#allocation7 + $0x320] sm:$0xff]
        %v2060 = vld [vmem:[#allocation7 + $0x328] sm:$0xff]
        %v2061 = vld [vmem:[#allocation7 + $0x330] sm:$0xff]
        %v2062 = vld [vmem:[#allocation7 + $0x338] sm:$0xff]
        %v2063 = vld [vmem:[#allocation7 + $0x340] sm:$0xff]
        %v2064 = vld [vmem:[#allocation7 + $0x348] sm:$0xff]
        %v2065 = vld [vmem:[#allocation7 + $0x350] sm:$0xff]
        %v2066 = vld [vmem:[#allocation7 + $0x358] sm:$0xff]
        %v2067 = vld [vmem:[#allocation7 + $0x360] sm:$0xff]
        %v2068 = vld [vmem:[#allocation7 + $0x368] sm:$0xff]
        %v2069 = vld [vmem:[#allocation7 + $0x370] sm:$0xff]
        %v2070 = vld [vmem:[#allocation7 + $0x378] sm:$0xff]
        %v2071 = vld [vmem:[#allocation7 + $0x380] sm:$0xff]
        %v2072 = vld [vmem:[#allocation7 + $0x388] sm:$0xff]
        %v2073 = vld [vmem:[#allocation7 + $0x390] sm:$0xff]
        %v2074 = vld [vmem:[#allocation7 + $0x398] sm:$0xff]
        %v2075 = vld [vmem:[#allocation7 + $0x3a0] sm:$0xff]
        %v2076 = vld [vmem:[#allocation7 + $0x3a8] sm:$0xff]
        %v2077 = vld [vmem:[#allocation7 + $0x3b0] sm:$0xff]
        %v2078 = vld [vmem:[#allocation7 + $0x3b8] sm:$0xff]
        %v2079 = vld [vmem:[#allocation7 + $0x3c0] sm:$0xff]
        %v2080 = vld [vmem:[#allocation7 + $0x3c8] sm:$0xff]
        %v2081 = vld [vmem:[#allocation7 + $0x3d0] sm:$0xff]
        %v2082 = vld [vmem:[#allocation7 + $0x3d8] sm:$0xff]
        %v2083 = vld [vmem:[#allocation7 + $0x3e0] sm:$0xff]
        %v2084 = vld [vmem:[#allocation7 + $0x3e8] sm:$0xff]
        %v2085 = vld [vmem:[#allocation7 + $0x3f0] sm:$0xff]
        %v2086 = vld [vmem:[#allocation7 + $0x3f8] sm:$0xff]
        %v2087 = vld [vmem:[#allocation7 + $0x400] sm:$0xff]
        %v2088 = vld [vmem:[#allocation7 + $0x408] sm:$0xff]
        %v2089 = vld [vmem:[#allocation7 + $0x410] sm:$0xff]
        %v2090 = vld [vmem:[#allocation7 + $0x418] sm:$0xff]
        %v2091 = vld [vmem:[#allocation7 + $0x420] sm:$0xff]
        %v2092 = vld [vmem:[#allocation7 + $0x428] sm:$0xff]
        %v2093 = vld [vmem:[#allocation7 + $0x430] sm:$0xff]
        %v2094 = vld [vmem:[#allocation7 + $0x438] sm:$0xff]
        %v2095 = vld [vmem:[#allocation7 + $0x440] sm:$0xff]
        %v2096 = vld [vmem:[#allocation7 + $0x448] sm:$0xff]
        %v2097 = vld [vmem:[#allocation7 + $0x450] sm:$0xff]
        %v2098 = vld [vmem:[#allocation7 + $0x458] sm:$0xff]
        %v2099 = vld [vmem:[#allocation7 + $0x460] sm:$0xff]
        %v2100 = vld [vmem:[#allocation7 + $0x468] sm:$0xff]
        %v2101 = vld [vmem:[#allocation7 + $0x470] sm:$0xff]
        %v2102 = vld [vmem:[#allocation7 + $0x478] sm:$0xff]
        %v2103 = vld [vmem:[#allocation7 + $0x480] sm:$0xff]
        %v2104 = vld [vmem:[#allocation7 + $0x488] sm:$0xff]
        %v2105 = vld [vmem:[#allocation7 + $0x490] sm:$0xff]
        %v2106 = vld [vmem:[#allocation7 + $0x498] sm:$0xff]
        %v2107 = vld [vmem:[#allocation7 + $0x4a0] sm:$0xff]
        %v2108 = vld [vmem:[#allocation7 + $0x4a8] sm:$0xff]
        %v2109 = vld [vmem:[#allocation7 + $0x4b0] sm:$0xff]
        %v2110 = vld [vmem:[#allocation7 + $0x4b8] sm:$0xff]
        %v2111 = vld [vmem:[#allocation7 + $0x4c0] sm:$0xff]
        %v2112 = vld [vmem:[#allocation7 + $0x4c8] sm:$0xff]
        %v2113 = vld [vmem:[#allocation7 + $0x4d0] sm:$0xff]
        %v2114 = vld [vmem:[#allocation7 + $0x4d8] sm:$0xff]
        %v2115 = vld [vmem:[#allocation7 + $0x4e0] sm:$0xff]
        %v2116 = vld [vmem:[#allocation7 + $0x4e8] sm:$0xff]
        %v2117 = vld [vmem:[#allocation7 + $0x4f0] sm:$0xff]
        %v2118 = vld [vmem:[#allocation7 + $0x4f8] sm:$0xff]
        %v2119 = vld [vmem:[#allocation7 + $0x500] sm:$0xff]
        %v2120 = vld [vmem:[#allocation7 + $0x508] sm:$0xff]
        %v2121 = vld [vmem:[#allocation7 + $0x510] sm:$0xff]
        %v2122 = vld [vmem:[#allocation7 + $0x518] sm:$0xff]
        %v2123 = vld [vmem:[#allocation7 + $0x520] sm:$0xff]
        %v2124 = vld [vmem:[#allocation7 + $0x528] sm:$0xff]
        %v2125 = vld [vmem:[#allocation7 + $0x530] sm:$0xff]
        %v2126 = vld [vmem:[#allocation7 + $0x538] sm:$0xff]
        %v2127 = vld [vmem:[#allocation7 + $0x540] sm:$0xff]
        %v2128 = vld [vmem:[#allocation7 + $0x548] sm:$0xff]
        %v2129 = vld [vmem:[#allocation7 + $0x550] sm:$0xff]
        %v2130 = vld [vmem:[#allocation7 + $0x558] sm:$0xff]
        %v2131 = vld [vmem:[#allocation7 + $0x560] sm:$0xff]
        %v2132 = vld [vmem:[#allocation7 + $0x568] sm:$0xff]
        %v2133 = vld [vmem:[#allocation7 + $0x570] sm:$0xff]
        %v2134 = vld [vmem:[#allocation7 + $0x578] sm:$0xff]
        %v2135 = vld [vmem:[#allocation7 + $0x580] sm:$0xff]
        %v2136 = vld [vmem:[#allocation7 + $0x588] sm:$0xff]
        %v2137 = vld [vmem:[#allocation7 + $0x590] sm:$0xff]
        %v2138 = vld [vmem:[#allocation7 + $0x598] sm:$0xff]
        %v2139 = vld [vmem:[#allocation7 + $0x5a0] sm:$0xff]
        %v2140 = vld [vmem:[#allocation7 + $0x5a8] sm:$0xff]
        %v2141 = vld [vmem:[#allocation7 + $0x5b0] sm:$0xff]
        %v2142 = vld [vmem:[#allocation7 + $0x5b8] sm:$0xff]
        %v2143 = vld [vmem:[#allocation7 + $0x5c0] sm:$0xff]
        %v2144 = vld [vmem:[#allocation7 + $0x5c8] sm:$0xff]
        %v2145 = vld [vmem:[#allocation7 + $0x5d0] sm:$0xff]
        %v2146 = vld [vmem:[#allocation7 + $0x5d8] sm:$0xff]
        %v2147 = vld [vmem:[#allocation7 + $0x5e0] sm:$0xff]
        %v2148 = vld [vmem:[#allocation7 + $0x5e8] sm:$0xff]
        %v2149 = vld [vmem:[#allocation7 + $0x5f0] sm:$0xff]
        %v2150 = vld [vmem:[#allocation7 + $0x5f8] sm:$0xff]
        %v2151 = vld [vmem:[#allocation7 + $0x600] sm:$0xff]
        %v2152 = vld [vmem:[#allocation7 + $0x608] sm:$0xff]
        %v2153 = vld [vmem:[#allocation7 + $0x610] sm:$0xff]
        %v2154 = vld [vmem:[#allocation7 + $0x618] sm:$0xff]
        %v2155 = vld [vmem:[#allocation7 + $0x620] sm:$0xff]
        %v2156 = vld [vmem:[#allocation7 + $0x628] sm:$0xff]
        %v2157 = vld [vmem:[#allocation7 + $0x630] sm:$0xff]
        %v2158 = vld [vmem:[#allocation7 + $0x638] sm:$0xff]
        %v2159 = vld [vmem:[#allocation7 + $0x640] sm:$0xff]
        %v2160 = vld [vmem:[#allocation7 + $0x648] sm:$0xff]
        %v2161 = vld [vmem:[#allocation7 + $0x650] sm:$0xff]
        %v2162 = vld [vmem:[#allocation7 + $0x658] sm:$0xff]
        %v2163 = vld [vmem:[#allocation7 + $0x660] sm:$0xff]
        %v2164 = vld [vmem:[#allocation7 + $0x668] sm:$0xff]
        %v2165 = vld [vmem:[#allocation7 + $0x670] sm:$0xff]
        %v2166 = vld [vmem:[#allocation7 + $0x678] sm:$0xff]
        %v2167 = vld [vmem:[#allocation7 + $0x680] sm:$0xff]
        %v2168 = vld [vmem:[#allocation7 + $0x688] sm:$0xff]
        %v2169 = vld [vmem:[#allocation7 + $0x690] sm:$0xff]
        %v2170 = vld [vmem:[#allocation7 + $0x698] sm:$0xff]
        %v2171 = vld [vmem:[#allocation7 + $0x6a0] sm:$0xff]
        %v2172 = vld [vmem:[#allocation7 + $0x6a8] sm:$0xff]
        %v2173 = vld [vmem:[#allocation7 + $0x6b0] sm:$0xff]
        %v2174 = vld [vmem:[#allocation7 + $0x6b8] sm:$0xff]
        %v2175 = vld [vmem:[#allocation7 + $0x6c0] sm:$0xff]
        %v2176 = vld [vmem:[#allocation7 + $0x6c8] sm:$0xff]
        %v2177 = vld [vmem:[#allocation7 + $0x6d0] sm:$0xff]
        %v2178 = vld [vmem:[#allocation7 + $0x6d8] sm:$0xff]
        %v2179 = vld [vmem:[#allocation7 + $0x6e0] sm:$0xff]
        %v2180 = vld [vmem:[#allocation7 + $0x6e8] sm:$0xff]
        %v2181 = vld [vmem:[#allocation7 + $0x6f0] sm:$0xff]
        %v2182 = vld [vmem:[#allocation7 + $0x6f8] sm:$0xff]
        %v2183 = vld [vmem:[#allocation7 + $0x700] sm:$0xff]
        %v2184 = vld [vmem:[#allocation7 + $0x708] sm:$0xff]
        %v2185 = vld [vmem:[#allocation7 + $0x710] sm:$0xff]
        %v2186 = vld [vmem:[#allocation7 + $0x718] sm:$0xff]
        %v2187 = vld [vmem:[#allocation7 + $0x720] sm:$0xff]
        %v2188 = vld [vmem:[#allocation7 + $0x728] sm:$0xff]
        %v2189 = vld [vmem:[#allocation7 + $0x730] sm:$0xff]
        %v2190 = vld [vmem:[#allocation7 + $0x738] sm:$0xff]
        %v2191 = vld [vmem:[#allocation7 + $0x740] sm:$0xff]
        %v2192 = vld [vmem:[#allocation7 + $0x748] sm:$0xff]
        %v2193 = vld [vmem:[#allocation7 + $0x750] sm:$0xff]
        %v2194 = vld [vmem:[#allocation7 + $0x758] sm:$0xff]
        %v2195 = vld [vmem:[#allocation7 + $0x760] sm:$0xff]
        %v2196 = vld [vmem:[#allocation7 + $0x768] sm:$0xff]
        %v2197 = vld [vmem:[#allocation7 + $0x770] sm:$0xff]
        %v2198 = vld [vmem:[#allocation7 + $0x778] sm:$0xff]
        %v2199 = vld [vmem:[#allocation7 + $0x780] sm:$0xff]
        %v2200 = vld [vmem:[#allocation7 + $0x788] sm:$0xff]
        %v2201 = vld [vmem:[#allocation7 + $0x790] sm:$0xff]
        %v2202 = vld [vmem:[#allocation7 + $0x798] sm:$0xff]
        %v2203 = vld [vmem:[#allocation7 + $0x7a0] sm:$0xff]
        %v2204 = vld [vmem:[#allocation7 + $0x7a8] sm:$0xff]
        %v2205 = vld [vmem:[#allocation7 + $0x7b0] sm:$0xff]
        %v2206 = vld [vmem:[#allocation7 + $0x7b8] sm:$0xff]
        %v2207 = vld [vmem:[#allocation7 + $0x7c0] sm:$0xff]
        %v2208 = vld [vmem:[#allocation7 + $0x7c8] sm:$0xff]
        %v2209 = vld [vmem:[#allocation7 + $0x7d0] sm:$0xff]
        %v2210 = vld [vmem:[#allocation7 + $0x7d8] sm:$0xff]
        %v2211 = vld [vmem:[#allocation7 + $0x7e0] sm:$0xff]
        %v2212 = vld [vmem:[#allocation7 + $0x7e8] sm:$0xff]
        %v2213 = vld [vmem:[#allocation7 + $0x7f0] sm:$0xff]
        %v2214 = vld [vmem:[#allocation7 + $0x7f8] sm:$0xff]
        %v2215 = vld [vmem:[%s4] sm:$0xf]
        %v2217 = vlaneseq
        %v2218 = vshrl.u32 %v2217, 7
        %v2219 = vsub.s32 0, %v2218
        %v2220 = vrot.slane %v2215, %v2219
        %v2221 = vlaneseq
        %v2222 = vshrl.u32 %v2221, 7
        %v2223 = vsub.s32 1, %v2222
        %v2224 = vrot.slane %v2215, %v2223
        %v2225 = vlaneseq
        %v2226 = vshrl.u32 %v2225, 7
        %v2227 = vsub.s32 2, %v2226
        %v2228 = vrot.slane %v2215, %v2227
        %v2229 = vlaneseq
        %v2230 = vshrl.u32 %v2229, 7
        %v2231 = vsub.s32 3, %v2230
        %v2232 = vrot.slane %v2215, %v2231
        %v2493 = vunpack.c.l.b16 %v1959
        %v2494 = vunpack.c.h.b16 %v1959
        %v2495 = vunpack.c.l.b16 %v1960
        %v2496 = vunpack.c.h.b16 %v1960
        %v2497 = vunpack.c.l.b16 %v1961
        %v2498 = vunpack.c.h.b16 %v1961
        %v2499 = vunpack.c.l.b16 %v1962
        %v2500 = vunpack.c.h.b16 %v1962
        %v2501 = vunpack.c.l.b16 %v1963
        %v2502 = vunpack.c.h.b16 %v1963
        %v2503 = vunpack.c.l.b16 %v1964
        %v2504 = vunpack.c.h.b16 %v1964
        %v2505 = vunpack.c.l.b16 %v1965
        %v2506 = vunpack.c.h.b16 %v1965
        %v2507 = vunpack.c.l.b16 %v1966
        %v2508 = vunpack.c.h.b16 %v1966
        %v2509 = vunpack.c.l.b16 %v1967
        %v2510 = vunpack.c.h.b16 %v1967
        %v2511 = vunpack.c.l.b16 %v1968
        %v2512 = vunpack.c.h.b16 %v1968
        %v2513 = vunpack.c.l.b16 %v1969
        %v2514 = vunpack.c.h.b16 %v1969
        %v2515 = vunpack.c.l.b16 %v1970
        %v2516 = vunpack.c.h.b16 %v1970
        %v2517 = vunpack.c.l.b16 %v1971
        %v2518 = vunpack.c.h.b16 %v1971
        %v2519 = vunpack.c.l.b16 %v1972
        %v2520 = vunpack.c.h.b16 %v1972
        %v2521 = vunpack.c.l.b16 %v1973
        %v2522 = vunpack.c.h.b16 %v1973
        %v2523 = vunpack.c.l.b16 %v1974
        %v2524 = vunpack.c.h.b16 %v1974
        %v2525 = vunpack.c.l.b16 %v1975
        %v2526 = vunpack.c.h.b16 %v1975
        %v2527 = vunpack.c.l.b16 %v1976
        %v2528 = vunpack.c.h.b16 %v1976
        %v2529 = vunpack.c.l.b16 %v1977
        %v2530 = vunpack.c.h.b16 %v1977
        %v2531 = vunpack.c.l.b16 %v1978
        %v2532 = vunpack.c.h.b16 %v1978
        %v2533 = vunpack.c.l.b16 %v1979
        %v2534 = vunpack.c.h.b16 %v1979
        %v2535 = vunpack.c.l.b16 %v1980
        %v2536 = vunpack.c.h.b16 %v1980
        %v2537 = vunpack.c.l.b16 %v1981
        %v2538 = vunpack.c.h.b16 %v1981
        %v2539 = vunpack.c.l.b16 %v1982
        %v2540 = vunpack.c.h.b16 %v1982
        %v2541 = vunpack.c.l.b16 %v1983
        %v2542 = vunpack.c.h.b16 %v1983
        %v2543 = vunpack.c.l.b16 %v1984
        %v2544 = vunpack.c.h.b16 %v1984
        %v2545 = vunpack.c.l.b16 %v1985
        %v2546 = vunpack.c.h.b16 %v1985
        %v2547 = vunpack.c.l.b16 %v1986
        %v2548 = vunpack.c.h.b16 %v1986
        %v2549 = vunpack.c.l.b16 %v1987
        %v2550 = vunpack.c.h.b16 %v1987
        %v2551 = vunpack.c.l.b16 %v1988
        %v2552 = vunpack.c.h.b16 %v1988
        %v2553 = vunpack.c.l.b16 %v1989
        %v2554 = vunpack.c.h.b16 %v1989
        %v2555 = vunpack.c.l.b16 %v1990
        %v2556 = vunpack.c.h.b16 %v1990
        %v2557 = vunpack.c.l.b16 %v1991
        %v2558 = vunpack.c.h.b16 %v1991
        %v2559 = vunpack.c.l.b16 %v1992
        %v2560 = vunpack.c.h.b16 %v1992
        %v2561 = vunpack.c.l.b16 %v1993
        %v2562 = vunpack.c.h.b16 %v1993
        %v2563 = vunpack.c.l.b16 %v1994
        %v2564 = vunpack.c.h.b16 %v1994
        %v2565 = vunpack.c.l.b16 %v1995
        %v2566 = vunpack.c.h.b16 %v1995
        %v2567 = vunpack.c.l.b16 %v1996
        %v2568 = vunpack.c.h.b16 %v1996
        %v2569 = vunpack.c.l.b16 %v1997
        %v2570 = vunpack.c.h.b16 %v1997
        %v2571 = vunpack.c.l.b16 %v1998
        %v2572 = vunpack.c.h.b16 %v1998
        %v2573 = vunpack.c.l.b16 %v1999
        %v2574 = vunpack.c.h.b16 %v1999
        %v2575 = vunpack.c.l.b16 %v2000
        %v2576 = vunpack.c.h.b16 %v2000
        %v2577 = vunpack.c.l.b16 %v2001
        %v2578 = vunpack.c.h.b16 %v2001
        %v2579 = vunpack.c.l.b16 %v2002
        %v2580 = vunpack.c.h.b16 %v2002
        %v2581 = vunpack.c.l.b16 %v2003
        %v2582 = vunpack.c.h.b16 %v2003
        %v2583 = vunpack.c.l.b16 %v2004
        %v2584 = vunpack.c.h.b16 %v2004
        %v2585 = vunpack.c.l.b16 %v2005
        %v2586 = vunpack.c.h.b16 %v2005
        %v2587 = vunpack.c.l.b16 %v2006
        %v2588 = vunpack.c.h.b16 %v2006
        %v2589 = vunpack.c.l.b16 %v2007
        %v2590 = vunpack.c.h.b16 %v2007
        %v2591 = vunpack.c.l.b16 %v2008
        %v2592 = vunpack.c.h.b16 %v2008
        %v2593 = vunpack.c.l.b16 %v2009
        %v2594 = vunpack.c.h.b16 %v2009
        %v2595 = vunpack.c.l.b16 %v2010
        %v2596 = vunpack.c.h.b16 %v2010
        %v2597 = vunpack.c.l.b16 %v2011
        %v2598 = vunpack.c.h.b16 %v2011
        %v2599 = vunpack.c.l.b16 %v2012
        %v2600 = vunpack.c.h.b16 %v2012
        %v2601 = vunpack.c.l.b16 %v2013
        %v2602 = vunpack.c.h.b16 %v2013
        %v2603 = vunpack.c.l.b16 %v2014
        %v2604 = vunpack.c.h.b16 %v2014
        %v2605 = vunpack.c.l.b16 %v2015
        %v2606 = vunpack.c.h.b16 %v2015
        %v2607 = vunpack.c.l.b16 %v2016
        %v2608 = vunpack.c.h.b16 %v2016
        %v2609 = vunpack.c.l.b16 %v2017
        %v2610 = vunpack.c.h.b16 %v2017
        %v2611 = vunpack.c.l.b16 %v2018
        %v2612 = vunpack.c.h.b16 %v2018
        %v2613 = vunpack.c.l.b16 %v2019
        %v2614 = vunpack.c.h.b16 %v2019
        %v2615 = vunpack.c.l.b16 %v2020
        %v2616 = vunpack.c.h.b16 %v2020
        %v2617 = vunpack.c.l.b16 %v2021
        %v2618 = vunpack.c.h.b16 %v2021
        %v2619 = vunpack.c.l.b16 %v2022
        %v2620 = vunpack.c.h.b16 %v2022
        %v2621 = vunpack.c.l.b16 %v2023
        %v2622 = vunpack.c.h.b16 %v2023
        %v2623 = vunpack.c.l.b16 %v2024
        %v2624 = vunpack.c.h.b16 %v2024
        %v2625 = vunpack.c.l.b16 %v2025
        %v2626 = vunpack.c.h.b16 %v2025
        %v2627 = vunpack.c.l.b16 %v2026
        %v2628 = vunpack.c.h.b16 %v2026
        %v2629 = vunpack.c.l.b16 %v2027
        %v2630 = vunpack.c.h.b16 %v2027
        %v2631 = vunpack.c.l.b16 %v2028
        %v2632 = vunpack.c.h.b16 %v2028
        %v2633 = vunpack.c.l.b16 %v2029
        %v2634 = vunpack.c.h.b16 %v2029
        %v2635 = vunpack.c.l.b16 %v2030
        %v2636 = vunpack.c.h.b16 %v2030
        %v2637 = vunpack.c.l.b16 %v2031
        %v2638 = vunpack.c.h.b16 %v2031
        %v2639 = vunpack.c.l.b16 %v2032
        %v2640 = vunpack.c.h.b16 %v2032
        %v2641 = vunpack.c.l.b16 %v2033
        %v2642 = vunpack.c.h.b16 %v2033
        %v2643 = vunpack.c.l.b16 %v2034
        %v2644 = vunpack.c.h.b16 %v2034
        %v2645 = vunpack.c.l.b16 %v2035
        %v2646 = vunpack.c.h.b16 %v2035
        %v2647 = vunpack.c.l.b16 %v2036
        %v2648 = vunpack.c.h.b16 %v2036
        %v2649 = vunpack.c.l.b16 %v2037
        %v2650 = vunpack.c.h.b16 %v2037
        %v2651 = vunpack.c.l.b16 %v2038
        %v2652 = vunpack.c.h.b16 %v2038
        %v2653 = vunpack.c.l.b16 %v2039
        %v2654 = vunpack.c.h.b16 %v2039
        %v2655 = vunpack.c.l.b16 %v2040
        %v2656 = vunpack.c.h.b16 %v2040
        %v2657 = vunpack.c.l.b16 %v2041
        %v2658 = vunpack.c.h.b16 %v2041
        %v2659 = vunpack.c.l.b16 %v2042
        %v2660 = vunpack.c.h.b16 %v2042
        %v2661 = vunpack.c.l.b16 %v2043
        %v2662 = vunpack.c.h.b16 %v2043
        %v2663 = vunpack.c.l.b16 %v2044
        %v2664 = vunpack.c.h.b16 %v2044
        %v2665 = vunpack.c.l.b16 %v2045
        %v2666 = vunpack.c.h.b16 %v2045
        %v2667 = vunpack.c.l.b16 %v2046
        %v2668 = vunpack.c.h.b16 %v2046
        %v2669 = vunpack.c.l.b16 %v2047
        %v2670 = vunpack.c.h.b16 %v2047
        %v2671 = vunpack.c.l.b16 %v2048
        %v2672 = vunpack.c.h.b16 %v2048
        %v2673 = vunpack.c.l.b16 %v2049
        %v2674 = vunpack.c.h.b16 %v2049
        %v2675 = vunpack.c.l.b16 %v2050
        %v2676 = vunpack.c.h.b16 %v2050
        %v2677 = vunpack.c.l.b16 %v2051
        %v2678 = vunpack.c.h.b16 %v2051
        %v2679 = vunpack.c.l.b16 %v2052
        %v2680 = vunpack.c.h.b16 %v2052
        %v2681 = vunpack.c.l.b16 %v2053
        %v2682 = vunpack.c.h.b16 %v2053
        %v2683 = vunpack.c.l.b16 %v2054
        %v2684 = vunpack.c.h.b16 %v2054
        %v2685 = vunpack.c.l.b16 %v2055
        %v2686 = vunpack.c.h.b16 %v2055
        %v2687 = vunpack.c.l.b16 %v2056
        %v2688 = vunpack.c.h.b16 %v2056
        %v2689 = vunpack.c.l.b16 %v2057
        %v2690 = vunpack.c.h.b16 %v2057
        %v2691 = vunpack.c.l.b16 %v2058
        %v2692 = vunpack.c.h.b16 %v2058
        %v2693 = vunpack.c.l.b16 %v2059
        %v2694 = vunpack.c.h.b16 %v2059
        %v2695 = vunpack.c.l.b16 %v2060
        %v2696 = vunpack.c.h.b16 %v2060
        %v2697 = vunpack.c.l.b16 %v2061
        %v2698 = vunpack.c.h.b16 %v2061
        %v2699 = vunpack.c.l.b16 %v2062
        %v2700 = vunpack.c.h.b16 %v2062
        %v2701 = vunpack.c.l.b16 %v2063
        %v2702 = vunpack.c.h.b16 %v2063
        %v2703 = vunpack.c.l.b16 %v2064
        %v2704 = vunpack.c.h.b16 %v2064
        %v2705 = vunpack.c.l.b16 %v2065
        %v2706 = vunpack.c.h.b16 %v2065
        %v2707 = vunpack.c.l.b16 %v2066
        %v2708 = vunpack.c.h.b16 %v2066
        %v2709 = vunpack.c.l.b16 %v2067
        %v2710 = vunpack.c.h.b16 %v2067
        %v2711 = vunpack.c.l.b16 %v2068
        %v2712 = vunpack.c.h.b16 %v2068
        %v2713 = vunpack.c.l.b16 %v2069
        %v2714 = vunpack.c.h.b16 %v2069
        %v2715 = vunpack.c.l.b16 %v2070
        %v2716 = vunpack.c.h.b16 %v2070
        %v2717 = vunpack.c.l.b16 %v2071
        %v2718 = vunpack.c.h.b16 %v2071
        %v2719 = vunpack.c.l.b16 %v2072
        %v2720 = vunpack.c.h.b16 %v2072
        %v2721 = vunpack.c.l.b16 %v2073
        %v2722 = vunpack.c.h.b16 %v2073
        %v2723 = vunpack.c.l.b16 %v2074
        %v2724 = vunpack.c.h.b16 %v2074
        %v2725 = vunpack.c.l.b16 %v2075
        %v2726 = vunpack.c.h.b16 %v2075
        %v2727 = vunpack.c.l.b16 %v2076
        %v2728 = vunpack.c.h.b16 %v2076
        %v2729 = vunpack.c.l.b16 %v2077
        %v2730 = vunpack.c.h.b16 %v2077
        %v2731 = vunpack.c.l.b16 %v2078
        %v2732 = vunpack.c.h.b16 %v2078
        %v2733 = vunpack.c.l.b16 %v2079
        %v2734 = vunpack.c.h.b16 %v2079
        %v2735 = vunpack.c.l.b16 %v2080
        %v2736 = vunpack.c.h.b16 %v2080
        %v2737 = vunpack.c.l.b16 %v2081
        %v2738 = vunpack.c.h.b16 %v2081
        %v2739 = vunpack.c.l.b16 %v2082
        %v2740 = vunpack.c.h.b16 %v2082
        %v2741 = vunpack.c.l.b16 %v2083
        %v2742 = vunpack.c.h.b16 %v2083
        %v2743 = vunpack.c.l.b16 %v2084
        %v2744 = vunpack.c.h.b16 %v2084
        %v2745 = vunpack.c.l.b16 %v2085
        %v2746 = vunpack.c.h.b16 %v2085
        %v2747 = vunpack.c.l.b16 %v2086
        %v2748 = vunpack.c.h.b16 %v2086
        %v2749 = vunpack.c.l.b16 %v2087
        %v2750 = vunpack.c.h.b16 %v2087
        %v2751 = vunpack.c.l.b16 %v2088
        %v2752 = vunpack.c.h.b16 %v2088
        %v2753 = vunpack.c.l.b16 %v2089
        %v2754 = vunpack.c.h.b16 %v2089
        %v2755 = vunpack.c.l.b16 %v2090
        %v2756 = vunpack.c.h.b16 %v2090
        %v2757 = vunpack.c.l.b16 %v2091
        %v2758 = vunpack.c.h.b16 %v2091
        %v2759 = vunpack.c.l.b16 %v2092
        %v2760 = vunpack.c.h.b16 %v2092
        %v2761 = vunpack.c.l.b16 %v2093
        %v2762 = vunpack.c.h.b16 %v2093
        %v2763 = vunpack.c.l.b16 %v2094
        %v2764 = vunpack.c.h.b16 %v2094
        %v2765 = vunpack.c.l.b16 %v2095
        %v2766 = vunpack.c.h.b16 %v2095
        %v2767 = vunpack.c.l.b16 %v2096
        %v2768 = vunpack.c.h.b16 %v2096
        %v2769 = vunpack.c.l.b16 %v2097
        %v2770 = vunpack.c.h.b16 %v2097
        %v2771 = vunpack.c.l.b16 %v2098
        %v2772 = vunpack.c.h.b16 %v2098
        %v2773 = vunpack.c.l.b16 %v2099
        %v2774 = vunpack.c.h.b16 %v2099
        %v2775 = vunpack.c.l.b16 %v2100
        %v2776 = vunpack.c.h.b16 %v2100
        %v2777 = vunpack.c.l.b16 %v2101
        %v2778 = vunpack.c.h.b16 %v2101
        %v2779 = vunpack.c.l.b16 %v2102
        %v2780 = vunpack.c.h.b16 %v2102
        %v2781 = vunpack.c.l.b16 %v2103
        %v2782 = vunpack.c.h.b16 %v2103
        %v2783 = vunpack.c.l.b16 %v2104
        %v2784 = vunpack.c.h.b16 %v2104
        %v2785 = vunpack.c.l.b16 %v2105
        %v2786 = vunpack.c.h.b16 %v2105
        %v2787 = vunpack.c.l.b16 %v2106
        %v2788 = vunpack.c.h.b16 %v2106
        %v2789 = vunpack.c.l.b16 %v2107
        %v2790 = vunpack.c.h.b16 %v2107
        %v2791 = vunpack.c.l.b16 %v2108
        %v2792 = vunpack.c.h.b16 %v2108
        %v2793 = vunpack.c.l.b16 %v2109
        %v2794 = vunpack.c.h.b16 %v2109
        %v2795 = vunpack.c.l.b16 %v2110
        %v2796 = vunpack.c.h.b16 %v2110
        %v2797 = vunpack.c.l.b16 %v2111
        %v2798 = vunpack.c.h.b16 %v2111
        %v2799 = vunpack.c.l.b16 %v2112
        %v2800 = vunpack.c.h.b16 %v2112
        %v2801 = vunpack.c.l.b16 %v2113
        %v2802 = vunpack.c.h.b16 %v2113
        %v2803 = vunpack.c.l.b16 %v2114
        %v2804 = vunpack.c.h.b16 %v2114
        %v2805 = vunpack.c.l.b16 %v2115
        %v2806 = vunpack.c.h.b16 %v2115
        %v2807 = vunpack.c.l.b16 %v2116
        %v2808 = vunpack.c.h.b16 %v2116
        %v2809 = vunpack.c.l.b16 %v2117
        %v2810 = vunpack.c.h.b16 %v2117
        %v2811 = vunpack.c.l.b16 %v2118
        %v2812 = vunpack.c.h.b16 %v2118
        %v2813 = vunpack.c.l.b16 %v2119
        %v2814 = vunpack.c.h.b16 %v2119
        %v2815 = vunpack.c.l.b16 %v2120
        %v2816 = vunpack.c.h.b16 %v2120
        %v2817 = vunpack.c.l.b16 %v2121
        %v2818 = vunpack.c.h.b16 %v2121
        %v2819 = vunpack.c.l.b16 %v2122
        %v2820 = vunpack.c.h.b16 %v2122
        %v2821 = vunpack.c.l.b16 %v2123
        %v2822 = vunpack.c.h.b16 %v2123
        %v2823 = vunpack.c.l.b16 %v2124
        %v2824 = vunpack.c.h.b16 %v2124
        %v2825 = vunpack.c.l.b16 %v2125
        %v2826 = vunpack.c.h.b16 %v2125
        %v2827 = vunpack.c.l.b16 %v2126
        %v2828 = vunpack.c.h.b16 %v2126
        %v2829 = vunpack.c.l.b16 %v2127
        %v2830 = vunpack.c.h.b16 %v2127
        %v2831 = vunpack.c.l.b16 %v2128
        %v2832 = vunpack.c.h.b16 %v2128
        %v2833 = vunpack.c.l.b16 %v2129
        %v2834 = vunpack.c.h.b16 %v2129
        %v2835 = vunpack.c.l.b16 %v2130
        %v2836 = vunpack.c.h.b16 %v2130
        %v2837 = vunpack.c.l.b16 %v2131
        %v2838 = vunpack.c.h.b16 %v2131
        %v2839 = vunpack.c.l.b16 %v2132
        %v2840 = vunpack.c.h.b16 %v2132
        %v2841 = vunpack.c.l.b16 %v2133
        %v2842 = vunpack.c.h.b16 %v2133
        %v2843 = vunpack.c.l.b16 %v2134
        %v2844 = vunpack.c.h.b16 %v2134
        %v2845 = vunpack.c.l.b16 %v2135
        %v2846 = vunpack.c.h.b16 %v2135
        %v2847 = vunpack.c.l.b16 %v2136
        %v2848 = vunpack.c.h.b16 %v2136
        %v2849 = vunpack.c.l.b16 %v2137
        %v2850 = vunpack.c.h.b16 %v2137
        %v2851 = vunpack.c.l.b16 %v2138
        %v2852 = vunpack.c.h.b16 %v2138
        %v2853 = vunpack.c.l.b16 %v2139
        %v2854 = vunpack.c.h.b16 %v2139
        %v2855 = vunpack.c.l.b16 %v2140
        %v2856 = vunpack.c.h.b16 %v2140
        %v2857 = vunpack.c.l.b16 %v2141
        %v2858 = vunpack.c.h.b16 %v2141
        %v2859 = vunpack.c.l.b16 %v2142
        %v2860 = vunpack.c.h.b16 %v2142
        %v2861 = vunpack.c.l.b16 %v2143
        %v2862 = vunpack.c.h.b16 %v2143
        %v2863 = vunpack.c.l.b16 %v2144
        %v2864 = vunpack.c.h.b16 %v2144
        %v2865 = vunpack.c.l.b16 %v2145
        %v2866 = vunpack.c.h.b16 %v2145
        %v2867 = vunpack.c.l.b16 %v2146
        %v2868 = vunpack.c.h.b16 %v2146
        %v2869 = vunpack.c.l.b16 %v2147
        %v2870 = vunpack.c.h.b16 %v2147
        %v2871 = vunpack.c.l.b16 %v2148
        %v2872 = vunpack.c.h.b16 %v2148
        %v2873 = vunpack.c.l.b16 %v2149
        %v2874 = vunpack.c.h.b16 %v2149
        %v2875 = vunpack.c.l.b16 %v2150
        %v2876 = vunpack.c.h.b16 %v2150
        %v2877 = vunpack.c.l.b16 %v2151
        %v2878 = vunpack.c.h.b16 %v2151
        %v2879 = vunpack.c.l.b16 %v2152
        %v2880 = vunpack.c.h.b16 %v2152
        %v2881 = vunpack.c.l.b16 %v2153
        %v2882 = vunpack.c.h.b16 %v2153
        %v2883 = vunpack.c.l.b16 %v2154
        %v2884 = vunpack.c.h.b16 %v2154
        %v2885 = vunpack.c.l.b16 %v2155
        %v2886 = vunpack.c.h.b16 %v2155
        %v2887 = vunpack.c.l.b16 %v2156
        %v2888 = vunpack.c.h.b16 %v2156
        %v2889 = vunpack.c.l.b16 %v2157
        %v2890 = vunpack.c.h.b16 %v2157
        %v2891 = vunpack.c.l.b16 %v2158
        %v2892 = vunpack.c.h.b16 %v2158
        %v2893 = vunpack.c.l.b16 %v2159
        %v2894 = vunpack.c.h.b16 %v2159
        %v2895 = vunpack.c.l.b16 %v2160
        %v2896 = vunpack.c.h.b16 %v2160
        %v2897 = vunpack.c.l.b16 %v2161
        %v2898 = vunpack.c.h.b16 %v2161
        %v2899 = vunpack.c.l.b16 %v2162
        %v2900 = vunpack.c.h.b16 %v2162
        %v2901 = vunpack.c.l.b16 %v2163
        %v2902 = vunpack.c.h.b16 %v2163
        %v2903 = vunpack.c.l.b16 %v2164
        %v2904 = vunpack.c.h.b16 %v2164
        %v2905 = vunpack.c.l.b16 %v2165
        %v2906 = vunpack.c.h.b16 %v2165
        %v2907 = vunpack.c.l.b16 %v2166
        %v2908 = vunpack.c.h.b16 %v2166
        %v2909 = vunpack.c.l.b16 %v2167
        %v2910 = vunpack.c.h.b16 %v2167
        %v2911 = vunpack.c.l.b16 %v2168
        %v2912 = vunpack.c.h.b16 %v2168
        %v2913 = vunpack.c.l.b16 %v2169
        %v2914 = vunpack.c.h.b16 %v2169
        %v2915 = vunpack.c.l.b16 %v2170
        %v2916 = vunpack.c.h.b16 %v2170
        %v2917 = vunpack.c.l.b16 %v2171
        %v2918 = vunpack.c.h.b16 %v2171
        %v2919 = vunpack.c.l.b16 %v2172
        %v2920 = vunpack.c.h.b16 %v2172
        %v2921 = vunpack.c.l.b16 %v2173
        %v2922 = vunpack.c.h.b16 %v2173
        %v2923 = vunpack.c.l.b16 %v2174
        %v2924 = vunpack.c.h.b16 %v2174
        %v2925 = vunpack.c.l.b16 %v2175
        %v2926 = vunpack.c.h.b16 %v2175
        %v2927 = vunpack.c.l.b16 %v2176
        %v2928 = vunpack.c.h.b16 %v2176
        %v2929 = vunpack.c.l.b16 %v2177
        %v2930 = vunpack.c.h.b16 %v2177
        %v2931 = vunpack.c.l.b16 %v2178
        %v2932 = vunpack.c.h.b16 %v2178
        %v2933 = vunpack.c.l.b16 %v2179
        %v2934 = vunpack.c.h.b16 %v2179
        %v2935 = vunpack.c.l.b16 %v2180
        %v2936 = vunpack.c.h.b16 %v2180
        %v2937 = vunpack.c.l.b16 %v2181
        %v2938 = vunpack.c.h.b16 %v2181
        %v2939 = vunpack.c.l.b16 %v2182
        %v2940 = vunpack.c.h.b16 %v2182
        %v2941 = vunpack.c.l.b16 %v2183
        %v2942 = vunpack.c.h.b16 %v2183
        %v2943 = vunpack.c.l.b16 %v2184
        %v2944 = vunpack.c.h.b16 %v2184
        %v2945 = vunpack.c.l.b16 %v2185
        %v2946 = vunpack.c.h.b16 %v2185
        %v2947 = vunpack.c.l.b16 %v2186
        %v2948 = vunpack.c.h.b16 %v2186
        %v2949 = vunpack.c.l.b16 %v2187
        %v2950 = vunpack.c.h.b16 %v2187
        %v2951 = vunpack.c.l.b16 %v2188
        %v2952 = vunpack.c.h.b16 %v2188
        %v2953 = vunpack.c.l.b16 %v2189
        %v2954 = vunpack.c.h.b16 %v2189
        %v2955 = vunpack.c.l.b16 %v2190
        %v2956 = vunpack.c.h.b16 %v2190
        %v2957 = vunpack.c.l.b16 %v2191
        %v2958 = vunpack.c.h.b16 %v2191
        %v2959 = vunpack.c.l.b16 %v2192
        %v2960 = vunpack.c.h.b16 %v2192
        %v2961 = vunpack.c.l.b16 %v2193
        %v2962 = vunpack.c.h.b16 %v2193
        %v2963 = vunpack.c.l.b16 %v2194
        %v2964 = vunpack.c.h.b16 %v2194
        %v2965 = vunpack.c.l.b16 %v2195
        %v2966 = vunpack.c.h.b16 %v2195
        %v2967 = vunpack.c.l.b16 %v2196
        %v2968 = vunpack.c.h.b16 %v2196
        %v2969 = vunpack.c.l.b16 %v2197
        %v2970 = vunpack.c.h.b16 %v2197
        %v2971 = vunpack.c.l.b16 %v2198
        %v2972 = vunpack.c.h.b16 %v2198
        %v2973 = vunpack.c.l.b16 %v2199
        %v2974 = vunpack.c.h.b16 %v2199
        %v2975 = vunpack.c.l.b16 %v2200
        %v2976 = vunpack.c.h.b16 %v2200
        %v2977 = vunpack.c.l.b16 %v2201
        %v2978 = vunpack.c.h.b16 %v2201
        %v2979 = vunpack.c.l.b16 %v2202
        %v2980 = vunpack.c.h.b16 %v2202
        %v2981 = vunpack.c.l.b16 %v2203
        %v2982 = vunpack.c.h.b16 %v2203
        %v2983 = vunpack.c.l.b16 %v2204
        %v2984 = vunpack.c.h.b16 %v2204
        %v2985 = vunpack.c.l.b16 %v2205
        %v2986 = vunpack.c.h.b16 %v2205
        %v2987 = vunpack.c.l.b16 %v2206
        %v2988 = vunpack.c.h.b16 %v2206
        %v2989 = vunpack.c.l.b16 %v2207
        %v2990 = vunpack.c.h.b16 %v2207
        %v2991 = vunpack.c.l.b16 %v2208
        %v2992 = vunpack.c.h.b16 %v2208
        %v2993 = vunpack.c.l.b16 %v2209
        %v2994 = vunpack.c.h.b16 %v2209
        %v2995 = vunpack.c.l.b16 %v2210
        %v2996 = vunpack.c.h.b16 %v2210
        %v2997 = vunpack.c.l.b16 %v2211
        %v2998 = vunpack.c.h.b16 %v2211
        %v2999 = vunpack.c.l.b16 %v2212
        %v3000 = vunpack.c.h.b16 %v2212
        %v3001 = vunpack.c.l.b16 %v2213
        %v3002 = vunpack.c.h.b16 %v2213
        %v3003 = vunpack.c.l.b16 %v2214
        %v3004 = vunpack.c.h.b16 %v2214
        %v3005 = vpack.c.b16 %v2497, %v2493
        %v3006 = vpack.c.b16 %v2498, %v2494
        %v3007 = vpack.c.b16 %v2499, %v2495
        %v3008 = vpack.c.b16 %v2500, %v2496
        %v3009 = vpack.c.b16 %v2505, %v2501
        %v3010 = vpack.c.b16 %v2506, %v2502
        %v3011 = vpack.c.b16 %v2507, %v2503
        %v3012 = vpack.c.b16 %v2508, %v2504
        %v3013 = vpack.c.b16 %v2513, %v2509
        %v3014 = vpack.c.b16 %v2514, %v2510
        %v3015 = vpack.c.b16 %v2515, %v2511
        %v3016 = vpack.c.b16 %v2516, %v2512
        %v3017 = vpack.c.b16 %v2521, %v2517
        %v3018 = vpack.c.b16 %v2522, %v2518
        %v3019 = vpack.c.b16 %v2523, %v2519
        %v3020 = vpack.c.b16 %v2524, %v2520
        %v3021 = vpack.c.b16 %v2529, %v2525
        %v3022 = vpack.c.b16 %v2530, %v2526
        %v3023 = vpack.c.b16 %v2531, %v2527
        %v3024 = vpack.c.b16 %v2532, %v2528
        %v3025 = vpack.c.b16 %v2537, %v2533
        %v3026 = vpack.c.b16 %v2538, %v2534
        %v3027 = vpack.c.b16 %v2539, %v2535
        %v3028 = vpack.c.b16 %v2540, %v2536
        %v3029 = vpack.c.b16 %v2545, %v2541
        %v3030 = vpack.c.b16 %v2546, %v2542
        %v3031 = vpack.c.b16 %v2547, %v2543
        %v3032 = vpack.c.b16 %v2548, %v2544
        %v3033 = vpack.c.b16 %v2553, %v2549
        %v3034 = vpack.c.b16 %v2554, %v2550
        %v3035 = vpack.c.b16 %v2555, %v2551
        %v3036 = vpack.c.b16 %v2556, %v2552
        %v3037 = vpack.c.b16 %v2561, %v2557
        %v3038 = vpack.c.b16 %v2562, %v2558
        %v3039 = vpack.c.b16 %v2563, %v2559
        %v3040 = vpack.c.b16 %v2564, %v2560
        %v3041 = vpack.c.b16 %v2569, %v2565
        %v3042 = vpack.c.b16 %v2570, %v2566
        %v3043 = vpack.c.b16 %v2571, %v2567
        %v3044 = vpack.c.b16 %v2572, %v2568
        %v3045 = vpack.c.b16 %v2577, %v2573
        %v3046 = vpack.c.b16 %v2578, %v2574
        %v3047 = vpack.c.b16 %v2579, %v2575
        %v3048 = vpack.c.b16 %v2580, %v2576
        %v3049 = vpack.c.b16 %v2585, %v2581
        %v3050 = vpack.c.b16 %v2586, %v2582
        %v3051 = vpack.c.b16 %v2587, %v2583
        %v3052 = vpack.c.b16 %v2588, %v2584
        %v3053 = vpack.c.b16 %v2593, %v2589
        %v3054 = vpack.c.b16 %v2594, %v2590
        %v3055 = vpack.c.b16 %v2595, %v2591
        %v3056 = vpack.c.b16 %v2596, %v2592
        %v3057 = vpack.c.b16 %v2601, %v2597
        %v3058 = vpack.c.b16 %v2602, %v2598
        %v3059 = vpack.c.b16 %v2603, %v2599
        %v3060 = vpack.c.b16 %v2604, %v2600
        %v3061 = vpack.c.b16 %v2609, %v2605
        %v3062 = vpack.c.b16 %v2610, %v2606
        %v3063 = vpack.c.b16 %v2611, %v2607
        %v3064 = vpack.c.b16 %v2612, %v2608
        %v3065 = vpack.c.b16 %v2617, %v2613
        %v3066 = vpack.c.b16 %v2618, %v2614
        %v3067 = vpack.c.b16 %v2619, %v2615
        %v3068 = vpack.c.b16 %v2620, %v2616
        %v3069 = vpack.c.b16 %v2625, %v2621
        %v3070 = vpack.c.b16 %v2626, %v2622
        %v3071 = vpack.c.b16 %v2627, %v2623
        %v3072 = vpack.c.b16 %v2628, %v2624
        %v3073 = vpack.c.b16 %v2633, %v2629
        %v3074 = vpack.c.b16 %v2634, %v2630
        %v3075 = vpack.c.b16 %v2635, %v2631
        %v3076 = vpack.c.b16 %v2636, %v2632
        %v3077 = vpack.c.b16 %v2641, %v2637
        %v3078 = vpack.c.b16 %v2642, %v2638
        %v3079 = vpack.c.b16 %v2643, %v2639
        %v3080 = vpack.c.b16 %v2644, %v2640
        %v3081 = vpack.c.b16 %v2649, %v2645
        %v3082 = vpack.c.b16 %v2650, %v2646
        %v3083 = vpack.c.b16 %v2651, %v2647
        %v3084 = vpack.c.b16 %v2652, %v2648
        %v3085 = vpack.c.b16 %v2657, %v2653
        %v3086 = vpack.c.b16 %v2658, %v2654
        %v3087 = vpack.c.b16 %v2659, %v2655
        %v3088 = vpack.c.b16 %v2660, %v2656
        %v3089 = vpack.c.b16 %v2665, %v2661
        %v3090 = vpack.c.b16 %v2666, %v2662
        %v3091 = vpack.c.b16 %v2667, %v2663
        %v3092 = vpack.c.b16 %v2668, %v2664
        %v3093 = vpack.c.b16 %v2673, %v2669
        %v3094 = vpack.c.b16 %v2674, %v2670
        %v3095 = vpack.c.b16 %v2675, %v2671
        %v3096 = vpack.c.b16 %v2676, %v2672
        %v3097 = vpack.c.b16 %v2681, %v2677
        %v3098 = vpack.c.b16 %v2682, %v2678
        %v3099 = vpack.c.b16 %v2683, %v2679
        %v3100 = vpack.c.b16 %v2684, %v2680
        %v3101 = vpack.c.b16 %v2689, %v2685
        %v3102 = vpack.c.b16 %v2690, %v2686
        %v3103 = vpack.c.b16 %v2691, %v2687
        %v3104 = vpack.c.b16 %v2692, %v2688
        %v3105 = vpack.c.b16 %v2697, %v2693
        %v3106 = vpack.c.b16 %v2698, %v2694
        %v3107 = vpack.c.b16 %v2699, %v2695
        %v3108 = vpack.c.b16 %v2700, %v2696
        %v3109 = vpack.c.b16 %v2705, %v2701
        %v3110 = vpack.c.b16 %v2706, %v2702
        %v3111 = vpack.c.b16 %v2707, %v2703
        %v3112 = vpack.c.b16 %v2708, %v2704
        %v3113 = vpack.c.b16 %v2713, %v2709
        %v3114 = vpack.c.b16 %v2714, %v2710
        %v3115 = vpack.c.b16 %v2715, %v2711
        %v3116 = vpack.c.b16 %v2716, %v2712
        %v3117 = vpack.c.b16 %v2721, %v2717
        %v3118 = vpack.c.b16 %v2722, %v2718
        %v3119 = vpack.c.b16 %v2723, %v2719
        %v3120 = vpack.c.b16 %v2724, %v2720
        %v3121 = vpack.c.b16 %v2729, %v2725
        %v3122 = vpack.c.b16 %v2730, %v2726
        %v3123 = vpack.c.b16 %v2731, %v2727
        %v3124 = vpack.c.b16 %v2732, %v2728
        %v3125 = vpack.c.b16 %v2737, %v2733
        %v3126 = vpack.c.b16 %v2738, %v2734
        %v3127 = vpack.c.b16 %v2739, %v2735
        %v3128 = vpack.c.b16 %v2740, %v2736
        %v3129 = vpack.c.b16 %v2745, %v2741
        %v3130 = vpack.c.b16 %v2746, %v2742
        %v3131 = vpack.c.b16 %v2747, %v2743
        %v3132 = vpack.c.b16 %v2748, %v2744
        %v3133 = vpack.c.b16 %v2753, %v2749
        %v3134 = vpack.c.b16 %v2754, %v2750
        %v3135 = vpack.c.b16 %v2755, %v2751
        %v3136 = vpack.c.b16 %v2756, %v2752
        %v3137 = vpack.c.b16 %v2761, %v2757
        %v3138 = vpack.c.b16 %v2762, %v2758
        %v3139 = vpack.c.b16 %v2763, %v2759
        %v3140 = vpack.c.b16 %v2764, %v2760
        %v3141 = vpack.c.b16 %v2769, %v2765
        %v3142 = vpack.c.b16 %v2770, %v2766
        %v3143 = vpack.c.b16 %v2771, %v2767
        %v3144 = vpack.c.b16 %v2772, %v2768
        %v3145 = vpack.c.b16 %v2777, %v2773
        %v3146 = vpack.c.b16 %v2778, %v2774
        %v3147 = vpack.c.b16 %v2779, %v2775
        %v3148 = vpack.c.b16 %v2780, %v2776
        %v3149 = vpack.c.b16 %v2785, %v2781
        %v3150 = vpack.c.b16 %v2786, %v2782
        %v3151 = vpack.c.b16 %v2787, %v2783
        %v3152 = vpack.c.b16 %v2788, %v2784
        %v3153 = vpack.c.b16 %v2793, %v2789
        %v3154 = vpack.c.b16 %v2794, %v2790
        %v3155 = vpack.c.b16 %v2795, %v2791
        %v3156 = vpack.c.b16 %v2796, %v2792
        %v3157 = vpack.c.b16 %v2801, %v2797
        %v3158 = vpack.c.b16 %v2802, %v2798
        %v3159 = vpack.c.b16 %v2803, %v2799
        %v3160 = vpack.c.b16 %v2804, %v2800
        %v3161 = vpack.c.b16 %v2809, %v2805
        %v3162 = vpack.c.b16 %v2810, %v2806
        %v3163 = vpack.c.b16 %v2811, %v2807
        %v3164 = vpack.c.b16 %v2812, %v2808
        %v3165 = vpack.c.b16 %v2817, %v2813
        %v3166 = vpack.c.b16 %v2818, %v2814
        %v3167 = vpack.c.b16 %v2819, %v2815
        %v3168 = vpack.c.b16 %v2820, %v2816
        %v3169 = vpack.c.b16 %v2825, %v2821
        %v3170 = vpack.c.b16 %v2826, %v2822
        %v3171 = vpack.c.b16 %v2827, %v2823
        %v3172 = vpack.c.b16 %v2828, %v2824
        %v3173 = vpack.c.b16 %v2833, %v2829
        %v3174 = vpack.c.b16 %v2834, %v2830
        %v3175 = vpack.c.b16 %v2835, %v2831
        %v3176 = vpack.c.b16 %v2836, %v2832
        %v3177 = vpack.c.b16 %v2841, %v2837
        %v3178 = vpack.c.b16 %v2842, %v2838
        %v3179 = vpack.c.b16 %v2843, %v2839
        %v3180 = vpack.c.b16 %v2844, %v2840
        %v3181 = vpack.c.b16 %v2849, %v2845
        %v3182 = vpack.c.b16 %v2850, %v2846
        %v3183 = vpack.c.b16 %v2851, %v2847
        %v3184 = vpack.c.b16 %v2852, %v2848
        %v3185 = vpack.c.b16 %v2857, %v2853
        %v3186 = vpack.c.b16 %v2858, %v2854
        %v3187 = vpack.c.b16 %v2859, %v2855
        %v3188 = vpack.c.b16 %v2860, %v2856
        %v3189 = vpack.c.b16 %v2865, %v2861
        %v3190 = vpack.c.b16 %v2866, %v2862
        %v3191 = vpack.c.b16 %v2867, %v2863
        %v3192 = vpack.c.b16 %v2868, %v2864
        %v3193 = vpack.c.b16 %v2873, %v2869
        %v3194 = vpack.c.b16 %v2874, %v2870
        %v3195 = vpack.c.b16 %v2875, %v2871
        %v3196 = vpack.c.b16 %v2876, %v2872
        %v3197 = vpack.c.b16 %v2881, %v2877
        %v3198 = vpack.c.b16 %v2882, %v2878
        %v3199 = vpack.c.b16 %v2883, %v2879
        %v3200 = vpack.c.b16 %v2884, %v2880
        %v3201 = vpack.c.b16 %v2889, %v2885
        %v3202 = vpack.c.b16 %v2890, %v2886
        %v3203 = vpack.c.b16 %v2891, %v2887
        %v3204 = vpack.c.b16 %v2892, %v2888
        %v3205 = vpack.c.b16 %v2897, %v2893
        %v3206 = vpack.c.b16 %v2898, %v2894
        %v3207 = vpack.c.b16 %v2899, %v2895
        %v3208 = vpack.c.b16 %v2900, %v2896
        %v3209 = vpack.c.b16 %v2905, %v2901
        %v3210 = vpack.c.b16 %v2906, %v2902
        %v3211 = vpack.c.b16 %v2907, %v2903
        %v3212 = vpack.c.b16 %v2908, %v2904
        %v3213 = vpack.c.b16 %v2913, %v2909
        %v3214 = vpack.c.b16 %v2914, %v2910
        %v3215 = vpack.c.b16 %v2915, %v2911
        %v3216 = vpack.c.b16 %v2916, %v2912
        %v3217 = vpack.c.b16 %v2921, %v2917
        %v3218 = vpack.c.b16 %v2922, %v2918
        %v3219 = vpack.c.b16 %v2923, %v2919
        %v3220 = vpack.c.b16 %v2924, %v2920
        %v3221 = vpack.c.b16 %v2929, %v2925
        %v3222 = vpack.c.b16 %v2930, %v2926
        %v3223 = vpack.c.b16 %v2931, %v2927
        %v3224 = vpack.c.b16 %v2932, %v2928
        %v3225 = vpack.c.b16 %v2937, %v2933
        %v3226 = vpack.c.b16 %v2938, %v2934
        %v3227 = vpack.c.b16 %v2939, %v2935
        %v3228 = vpack.c.b16 %v2940, %v2936
        %v3229 = vpack.c.b16 %v2945, %v2941
        %v3230 = vpack.c.b16 %v2946, %v2942
        %v3231 = vpack.c.b16 %v2947, %v2943
        %v3232 = vpack.c.b16 %v2948, %v2944
        %v3233 = vpack.c.b16 %v2953, %v2949
        %v3234 = vpack.c.b16 %v2954, %v2950
        %v3235 = vpack.c.b16 %v2955, %v2951
        %v3236 = vpack.c.b16 %v2956, %v2952
        %v3237 = vpack.c.b16 %v2961, %v2957
        %v3238 = vpack.c.b16 %v2962, %v2958
        %v3239 = vpack.c.b16 %v2963, %v2959
        %v3240 = vpack.c.b16 %v2964, %v2960
        %v3241 = vpack.c.b16 %v2969, %v2965
        %v3242 = vpack.c.b16 %v2970, %v2966
        %v3243 = vpack.c.b16 %v2971, %v2967
        %v3244 = vpack.c.b16 %v2972, %v2968
        %v3245 = vpack.c.b16 %v2977, %v2973
        %v3246 = vpack.c.b16 %v2978, %v2974
        %v3247 = vpack.c.b16 %v2979, %v2975
        %v3248 = vpack.c.b16 %v2980, %v2976
        %v3249 = vpack.c.b16 %v2985, %v2981
        %v3250 = vpack.c.b16 %v2986, %v2982
        %v3251 = vpack.c.b16 %v2987, %v2983
        %v3252 = vpack.c.b16 %v2988, %v2984
        %v3253 = vpack.c.b16 %v2993, %v2989
        %v3254 = vpack.c.b16 %v2994, %v2990
        %v3255 = vpack.c.b16 %v2995, %v2991
        %v3256 = vpack.c.b16 %v2996, %v2992
        %v3257 = vpack.c.b16 %v3001, %v2997
        %v3258 = vpack.c.b16 %v3002, %v2998
        %v3259 = vpack.c.b16 %v3003, %v2999
        %v3260 = vpack.c.b16 %v3004, %v3000
        %3517 = vmatprep.subr.bf16.mxu0 %v3034
        %3518 = vmatpush1.bf16.msra.mxu0 %v3033
        %3519 = vmatprep.subr.bf16.mxu0 %v3030
        %3520 = vmatpush1.bf16.msra.mxu0 %v3029
        %3521 = vmatprep.subr.bf16.mxu0 %v3026
        %3522 = vmatpush1.bf16.msra.mxu0 %v3025
        %3523 = vmatprep.subr.bf16.mxu0 %v3022
        %3524 = vmatpush1.bf16.msra.mxu0 %v3021
        %3525 = vmatprep.subr.bf16.mxu0 %v3018
        %3526 = vmatpush1.bf16.msra.mxu0 %v3017
        %3527 = vmatprep.subr.bf16.mxu0 %v3014
        %3528 = vmatpush1.bf16.msra.mxu0 %v3013
        %3529 = vmatprep.subr.bf16.mxu0 %v3010
        %3530 = vmatpush1.bf16.msra.mxu0 %v3009
        %3531 = vmatprep.subr.bf16.mxu0 %v3006
        %3532 = vmatpush1.bf16.msra.mxu0 %v3005
        %3533 = vmatprep.subr.bf16.mxu0 %v3066
        %3534 = vmatpush2.bf16.msra.mxu0 %v3065
        %3535 = vmatprep.subr.bf16.mxu0 %v3062
        %3536 = vmatpush2.bf16.msra.mxu0 %v3061
        %3537 = vmatprep.subr.bf16.mxu0 %v3058
        %3538 = vmatpush2.bf16.msra.mxu0 %v3057
        %3539 = vmatprep.subr.bf16.mxu0 %v3054
        %3540 = vmatpush2.bf16.msra.mxu0 %v3053
        %3541 = vmatprep.subr.bf16.mxu0 %v3050
        %3542 = vmatpush2.bf16.msra.mxu0 %v3049
        %3543 = vmatprep.subr.bf16.mxu0 %v3046
        %3544 = vmatpush2.bf16.msra.mxu0 %v3045
        %3545 = vmatprep.subr.bf16.mxu0 %v3042
        %3546 = vmatpush2.bf16.msra.mxu0 %v3041
        %3547 = vmatprep.subr.bf16.mxu0 %v3038
        %3548 = vmatpush2.bf16.msra.mxu0 %v3037
        %3549 = vmatprep.mubr.bf16.mxu0 %v1896
        %3550 = vmatmul.mubr.bf16.gmra.mxu0 %v1895
        %v3551 = vpop.f32.mrf.mxu0
        %v3552 = vadd.f32 %v2220, %v3551
        %v3553 = vpop.f32.mrf.mxu0
        %v3554 = vadd.f32 %v2224, %v3553
        %v3555 = vpop.f32.mrf.mxu0
        %v3556 = vadd.f32 %v2220, %v3555
        %v3557 = vpop.f32.mrf.mxu0
        %v3558 = vadd.f32 %v2224, %v3557
        %3559 = vmatprep.mubr.bf16.mxu0 %v1904
        %3560 = vmatmul.mubr.bf16.gmra.mxu0 %v1903
        %v3561 = vpop.f32.mrf.mxu0
        %v3562 = vadd.f32 %v2220, %v3561
        %v3563 = vpop.f32.mrf.mxu0
        %v3564 = vadd.f32 %v2224, %v3563
        %v3565 = vpop.f32.mrf.mxu0
        %v3566 = vadd.f32 %v2220, %v3565
        %v3567 = vpop.f32.mrf.mxu0
        %v3568 = vadd.f32 %v2224, %v3567
        %3569 = vmatprep.mubr.bf16.mxu0 %v1912
        %3570 = vmatmul.mubr.bf16.gmra.mxu0 %v1911
        %v3571 = vpop.f32.mrf.mxu0
        %v3572 = vadd.f32 %v2220, %v3571
        %v3573 = vpop.f32.mrf.mxu0
        %v3574 = vadd.f32 %v2224, %v3573
        %v3575 = vpop.f32.mrf.mxu0
        %v3576 = vadd.f32 %v2220, %v3575
        %v3577 = vpop.f32.mrf.mxu0
        %v3578 = vadd.f32 %v2224, %v3577
        %3579 = vmatprep.mubr.bf16.mxu0 %v1920
        %3580 = vmatmul.mubr.bf16.gmra.mxu0 %v1919
        %v3581 = vpop.f32.mrf.mxu0
        %v3582 = vadd.f32 %v2220, %v3581
        %v3583 = vpop.f32.mrf.mxu0
        %v3584 = vadd.f32 %v2224, %v3583
        %v3585 = vpop.f32.mrf.mxu0
        %v3586 = vadd.f32 %v2220, %v3585
        %v3587 = vpop.f32.mrf.mxu0
        %v3588 = vadd.f32 %v2224, %v3587
        %3589 = vmatprep.mubr.bf16.mxu0 %v1928
        %3590 = vmatmul.mubr.bf16.gmra.mxu0 %v1927
        %v3591 = vpop.f32.mrf.mxu0
        %v3592 = vadd.f32 %v2220, %v3591
        %v3593 = vpop.f32.mrf.mxu0
        %v3594 = vadd.f32 %v2224, %v3593
        %v3595 = vpop.f32.mrf.mxu0
        %v3596 = vadd.f32 %v2220, %v3595
        %v3597 = vpop.f32.mrf.mxu0
        %v3598 = vadd.f32 %v2224, %v3597
        %3599 = vmatprep.mubr.bf16.mxu0 %v1936
        %3600 = vmatmul.mubr.bf16.gmra.mxu0 %v1935
        %v3601 = vpop.f32.mrf.mxu0
        %v3602 = vadd.f32 %v2220, %v3601
        %v3603 = vpop.f32.mrf.mxu0
        %v3604 = vadd.f32 %v2224, %v3603
        %v3605 = vpop.f32.mrf.mxu0
        %v3606 = vadd.f32 %v2220, %v3605
        %v3607 = vpop.f32.mrf.mxu0
        %v3608 = vadd.f32 %v2224, %v3607
        %3609 = vmatprep.mubr.bf16.mxu0 %v1944
        %3610 = vmatmul.mubr.bf16.gmra.mxu0 %v1943
        %v3611 = vpop.f32.mrf.mxu0
        %v3612 = vadd.f32 %v2220, %v3611
        %v3613 = vpop.f32.mrf.mxu0
        %v3614 = vadd.f32 %v2224, %v3613
        %v3615 = vpop.f32.mrf.mxu0
        %v3616 = vadd.f32 %v2220, %v3615
        %v3617 = vpop.f32.mrf.mxu0
        %v3618 = vadd.f32 %v2224, %v3617
        %3619 = vmatprep.mubr.bf16.mxu0 %v1952
        %3620 = vmatmul.mubr.bf16.gmra.mxu0 %v1951
        %v3621 = vpop.f32.mrf.mxu0
        %v3622 = vadd.f32 %v2220, %v3621
        %v3623 = vpop.f32.mrf.mxu0
        %v3624 = vadd.f32 %v2224, %v3623
        %v3625 = vpop.f32.mrf.mxu0
        %v3626 = vadd.f32 %v2220, %v3625
        %v3627 = vpop.f32.mrf.mxu0
        %v3628 = vadd.f32 %v2224, %v3627
        %3629 = vdwg.mxu0
        %3630 = vmatprep.subr.bf16.mxu0 %v3098
        %3631 = vmatpush1.bf16.msra.mxu0 %v3097
        %3632 = vmatprep.subr.bf16.mxu0 %v3094
        %3633 = vmatpush1.bf16.msra.mxu0 %v3093
        %3634 = vmatprep.subr.bf16.mxu0 %v3090
        %3635 = vmatpush1.bf16.msra.mxu0 %v3089
        %3636 = vmatprep.subr.bf16.mxu0 %v3086
        %3637 = vmatpush1.bf16.msra.mxu0 %v3085
        %3638 = vmatprep.subr.bf16.mxu0 %v3082
        %3639 = vmatpush1.bf16.msra.mxu0 %v3081
        %3640 = vmatprep.subr.bf16.mxu0 %v3078
        %3641 = vmatpush1.bf16.msra.mxu0 %v3077
        %3642 = vmatprep.subr.bf16.mxu0 %v3074
        %3643 = vmatpush1.bf16.msra.mxu0 %v3073
        %3644 = vmatprep.subr.bf16.mxu0 %v3070
        %3645 = vmatpush1.bf16.msra.mxu0 %v3069
        %3646 = vmatprep.subr.bf16.mxu0 %v3130
        %3647 = vmatpush2.bf16.msra.mxu0 %v3129
        %3648 = vmatprep.subr.bf16.mxu0 %v3126
        %3649 = vmatpush2.bf16.msra.mxu0 %v3125
        %3650 = vmatprep.subr.bf16.mxu0 %v3122
        %3651 = vmatpush2.bf16.msra.mxu0 %v3121
        %3652 = vmatprep.subr.bf16.mxu0 %v3118
        %3653 = vmatpush2.bf16.msra.mxu0 %v3117
        %3654 = vmatprep.subr.bf16.mxu0 %v3114
        %3655 = vmatpush2.bf16.msra.mxu0 %v3113
        %3656 = vmatprep.subr.bf16.mxu0 %v3110
        %3657 = vmatpush2.bf16.msra.mxu0 %v3109
        %3658 = vmatprep.subr.bf16.mxu0 %v3106
        %3659 = vmatpush2.bf16.msra.mxu0 %v3105
        %3660 = vmatprep.subr.bf16.mxu0 %v3102
        %3661 = vmatpush2.bf16.msra.mxu0 %v3101
        %3662 = vmatprep.mubr.bf16.mxu0 %v1898
        %3663 = vmatmul.mubr.bf16.gmra.mxu0 %v1897
        %v3664 = vpop.f32.mrf.mxu0
        %v3665 = vadd.f32 %v3552, %v3664
        %v3666 = vpop.f32.mrf.mxu0
        %v3667 = vadd.f32 %v3554, %v3666
        %v3668 = vpop.f32.mrf.mxu0
        %v3669 = vadd.f32 %v3556, %v3668
        %v3670 = vpop.f32.mrf.mxu0
        %v3671 = vadd.f32 %v3558, %v3670
        %3672 = vmatprep.mubr.bf16.mxu0 %v1906
        %3673 = vmatmul.mubr.bf16.gmra.mxu0 %v1905
        %v3674 = vpop.f32.mrf.mxu0
        %v3675 = vadd.f32 %v3562, %v3674
        %v3676 = vpop.f32.mrf.mxu0
        %v3677 = vadd.f32 %v3564, %v3676
        %v3678 = vpop.f32.mrf.mxu0
        %v3679 = vadd.f32 %v3566, %v3678
        %v3680 = vpop.f32.mrf.mxu0
        %v3681 = vadd.f32 %v3568, %v3680
        %3682 = vmatprep.mubr.bf16.mxu0 %v1914
        %3683 = vmatmul.mubr.bf16.gmra.mxu0 %v1913
        %v3684 = vpop.f32.mrf.mxu0
        %v3685 = vadd.f32 %v3572, %v3684
        %v3686 = vpop.f32.mrf.mxu0
        %v3687 = vadd.f32 %v3574, %v3686
        %v3688 = vpop.f32.mrf.mxu0
        %v3689 = vadd.f32 %v3576, %v3688
        %v3690 = vpop.f32.mrf.mxu0
        %v3691 = vadd.f32 %v3578, %v3690
        %3692 = vmatprep.mubr.bf16.mxu0 %v1922
        %3693 = vmatmul.mubr.bf16.gmra.mxu0 %v1921
        %v3694 = vpop.f32.mrf.mxu0
        %v3695 = vadd.f32 %v3582, %v3694
        %v3696 = vpop.f32.mrf.mxu0
        %v3697 = vadd.f32 %v3584, %v3696
        %v3698 = vpop.f32.mrf.mxu0
        %v3699 = vadd.f32 %v3586, %v3698
        %v3700 = vpop.f32.mrf.mxu0
        %v3701 = vadd.f32 %v3588, %v3700
        %3702 = vmatprep.mubr.bf16.mxu0 %v1930
        %3703 = vmatmul.mubr.bf16.gmra.mxu0 %v1929
        %v3704 = vpop.f32.mrf.mxu0
        %v3705 = vadd.f32 %v3592, %v3704
        %v3706 = vpop.f32.mrf.mxu0
        %v3707 = vadd.f32 %v3594, %v3706
        %v3708 = vpop.f32.mrf.mxu0
        %v3709 = vadd.f32 %v3596, %v3708
        %v3710 = vpop.f32.mrf.mxu0
        %v3711 = vadd.f32 %v3598, %v3710
        %3712 = vmatprep.mubr.bf16.mxu0 %v1938
        %3713 = vmatmul.mubr.bf16.gmra.mxu0 %v1937
        %v3714 = vpop.f32.mrf.mxu0
        %v3715 = vadd.f32 %v3602, %v3714
        %v3716 = vpop.f32.mrf.mxu0
        %v3717 = vadd.f32 %v3604, %v3716
        %v3718 = vpop.f32.mrf.mxu0
        %v3719 = vadd.f32 %v3606, %v3718
        %v3720 = vpop.f32.mrf.mxu0
        %v3721 = vadd.f32 %v3608, %v3720
        %3722 = vmatprep.mubr.bf16.mxu0 %v1946
        %3723 = vmatmul.mubr.bf16.gmra.mxu0 %v1945
        %v3724 = vpop.f32.mrf.mxu0
        %v3725 = vadd.f32 %v3612, %v3724
        %v3726 = vpop.f32.mrf.mxu0
        %v3727 = vadd.f32 %v3614, %v3726
        %v3728 = vpop.f32.mrf.mxu0
        %v3729 = vadd.f32 %v3616, %v3728
        %v3730 = vpop.f32.mrf.mxu0
        %v3731 = vadd.f32 %v3618, %v3730
        %3732 = vmatprep.mubr.bf16.mxu0 %v1954
        %3733 = vmatmul.mubr.bf16.gmra.mxu0 %v1953
        %v3734 = vpop.f32.mrf.mxu0
        %v3735 = vadd.f32 %v3622, %v3734
        %v3736 = vpop.f32.mrf.mxu0
        %v3737 = vadd.f32 %v3624, %v3736
        %v3738 = vpop.f32.mrf.mxu0
        %v3739 = vadd.f32 %v3626, %v3738
        %v3740 = vpop.f32.mrf.mxu0
        %v3741 = vadd.f32 %v3628, %v3740
        %3742 = vdwg.mxu0
        %3743 = vmatprep.subr.bf16.mxu0 %v3162
        %3744 = vmatpush1.bf16.msra.mxu0 %v3161
        %3745 = vmatprep.subr.bf16.mxu0 %v3158
        %3746 = vmatpush1.bf16.msra.mxu0 %v3157
        %3747 = vmatprep.subr.bf16.mxu0 %v3154
        %3748 = vmatpush1.bf16.msra.mxu0 %v3153
        %3749 = vmatprep.subr.bf16.mxu0 %v3150
        %3750 = vmatpush1.bf16.msra.mxu0 %v3149
        %3751 = vmatprep.subr.bf16.mxu0 %v3146
        %3752 = vmatpush1.bf16.msra.mxu0 %v3145
        %3753 = vmatprep.subr.bf16.mxu0 %v3142
        %3754 = vmatpush1.bf16.msra.mxu0 %v3141
        %3755 = vmatprep.subr.bf16.mxu0 %v3138
        %3756 = vmatpush1.bf16.msra.mxu0 %v3137
        %3757 = vmatprep.subr.bf16.mxu0 %v3134
        %3758 = vmatpush1.bf16.msra.mxu0 %v3133
        %3759 = vmatprep.subr.bf16.mxu0 %v3194
        %3760 = vmatpush2.bf16.msra.mxu0 %v3193
        %3761 = vmatprep.subr.bf16.mxu0 %v3190
        %3762 = vmatpush2.bf16.msra.mxu0 %v3189
        %3763 = vmatprep.subr.bf16.mxu0 %v3186
        %3764 = vmatpush2.bf16.msra.mxu0 %v3185
        %3765 = vmatprep.subr.bf16.mxu0 %v3182
        %3766 = vmatpush2.bf16.msra.mxu0 %v3181
        %3767 = vmatprep.subr.bf16.mxu0 %v3178
        %3768 = vmatpush2.bf16.msra.mxu0 %v3177
        %3769 = vmatprep.subr.bf16.mxu0 %v3174
        %3770 = vmatpush2.bf16.msra.mxu0 %v3173
        %3771 = vmatprep.subr.bf16.mxu0 %v3170
        %3772 = vmatpush2.bf16.msra.mxu0 %v3169
        %3773 = vmatprep.subr.bf16.mxu0 %v3166
        %3774 = vmatpush2.bf16.msra.mxu0 %v3165
        %3775 = vmatprep.mubr.bf16.mxu0 %v1900
        %3776 = vmatmul.mubr.bf16.gmra.mxu0 %v1899
        %v3777 = vpop.f32.mrf.mxu0
        %v3778 = vadd.f32 %v3665, %v3777
        %v3779 = vpop.f32.mrf.mxu0
        %v3780 = vadd.f32 %v3667, %v3779
        %v3781 = vpop.f32.mrf.mxu0
        %v3782 = vadd.f32 %v3669, %v3781
        %v3783 = vpop.f32.mrf.mxu0
        %v3784 = vadd.f32 %v3671, %v3783
        %3785 = vmatprep.mubr.bf16.mxu0 %v1908
        %3786 = vmatmul.mubr.bf16.gmra.mxu0 %v1907
        %v3787 = vpop.f32.mrf.mxu0
        %v3788 = vadd.f32 %v3675, %v3787
        %v3789 = vpop.f32.mrf.mxu0
        %v3790 = vadd.f32 %v3677, %v3789
        %v3791 = vpop.f32.mrf.mxu0
        %v3792 = vadd.f32 %v3679, %v3791
        %v3793 = vpop.f32.mrf.mxu0
        %v3794 = vadd.f32 %v3681, %v3793
        %3795 = vmatprep.mubr.bf16.mxu0 %v1916
        %3796 = vmatmul.mubr.bf16.gmra.mxu0 %v1915
        %v3797 = vpop.f32.mrf.mxu0
        %v3798 = vadd.f32 %v3685, %v3797
        %v3799 = vpop.f32.mrf.mxu0
        %v3800 = vadd.f32 %v3687, %v3799
        %v3801 = vpop.f32.mrf.mxu0
        %v3802 = vadd.f32 %v3689, %v3801
        %v3803 = vpop.f32.mrf.mxu0
        %v3804 = vadd.f32 %v3691, %v3803
        %3805 = vmatprep.mubr.bf16.mxu0 %v1924
        %3806 = vmatmul.mubr.bf16.gmra.mxu0 %v1923
        %v3807 = vpop.f32.mrf.mxu0
        %v3808 = vadd.f32 %v3695, %v3807
        %v3809 = vpop.f32.mrf.mxu0
        %v3810 = vadd.f32 %v3697, %v3809
        %v3811 = vpop.f32.mrf.mxu0
        %v3812 = vadd.f32 %v3699, %v3811
        %v3813 = vpop.f32.mrf.mxu0
        %v3814 = vadd.f32 %v3701, %v3813
        %3815 = vmatprep.mubr.bf16.mxu0 %v1932
        %3816 = vmatmul.mubr.bf16.gmra.mxu0 %v1931
        %v3817 = vpop.f32.mrf.mxu0
        %v3818 = vadd.f32 %v3705, %v3817
        %v3819 = vpop.f32.mrf.mxu0
        %v3820 = vadd.f32 %v3707, %v3819
        %v3821 = vpop.f32.mrf.mxu0
        %v3822 = vadd.f32 %v3709, %v3821
        %v3823 = vpop.f32.mrf.mxu0
        %v3824 = vadd.f32 %v3711, %v3823
        %3825 = vmatprep.mubr.bf16.mxu0 %v1940
        %3826 = vmatmul.mubr.bf16.gmra.mxu0 %v1939
        %v3827 = vpop.f32.mrf.mxu0
        %v3828 = vadd.f32 %v3715, %v3827
        %v3829 = vpop.f32.mrf.mxu0
        %v3830 = vadd.f32 %v3717, %v3829
        %v3831 = vpop.f32.mrf.mxu0
        %v3832 = vadd.f32 %v3719, %v3831
        %v3833 = vpop.f32.mrf.mxu0
        %v3834 = vadd.f32 %v3721, %v3833
        %3835 = vmatprep.mubr.bf16.mxu0 %v1948
        %3836 = vmatmul.mubr.bf16.gmra.mxu0 %v1947
        %v3837 = vpop.f32.mrf.mxu0
        %v3838 = vadd.f32 %v3725, %v3837
        %v3839 = vpop.f32.mrf.mxu0
        %v3840 = vadd.f32 %v3727, %v3839
        %v3841 = vpop.f32.mrf.mxu0
        %v3842 = vadd.f32 %v3729, %v3841
        %v3843 = vpop.f32.mrf.mxu0
        %v3844 = vadd.f32 %v3731, %v3843
        %3845 = vmatprep.mubr.bf16.mxu0 %v1956
        %3846 = vmatmul.mubr.bf16.gmra.mxu0 %v1955
        %v3847 = vpop.f32.mrf.mxu0
        %v3848 = vadd.f32 %v3735, %v3847
        %v3849 = vpop.f32.mrf.mxu0
        %v3850 = vadd.f32 %v3737, %v3849
        %v3851 = vpop.f32.mrf.mxu0
        %v3852 = vadd.f32 %v3739, %v3851
        %v3853 = vpop.f32.mrf.mxu0
        %v3854 = vadd.f32 %v3741, %v3853
        %3855 = vdwg.mxu0
        %3856 = vmatprep.subr.bf16.mxu0 %v3226
        %3857 = vmatpush1.bf16.msra.mxu0 %v3225
        %3858 = vmatprep.subr.bf16.mxu0 %v3222
        %3859 = vmatpush1.bf16.msra.mxu0 %v3221
        %3860 = vmatprep.subr.bf16.mxu0 %v3218
        %3861 = vmatpush1.bf16.msra.mxu0 %v3217
        %3862 = vmatprep.subr.bf16.mxu0 %v3214
        %3863 = vmatpush1.bf16.msra.mxu0 %v3213
        %3864 = vmatprep.subr.bf16.mxu0 %v3210
        %3865 = vmatpush1.bf16.msra.mxu0 %v3209
        %3866 = vmatprep.subr.bf16.mxu0 %v3206
        %3867 = vmatpush1.bf16.msra.mxu0 %v3205
        %3868 = vmatprep.subr.bf16.mxu0 %v3202
        %3869 = vmatpush1.bf16.msra.mxu0 %v3201
        %3870 = vmatprep.subr.bf16.mxu0 %v3198
        %3871 = vmatpush1.bf16.msra.mxu0 %v3197
        %3872 = vmatprep.subr.bf16.mxu0 %v3258
        %3873 = vmatpush2.bf16.msra.mxu0 %v3257
        %3874 = vmatprep.subr.bf16.mxu0 %v3254
        %3875 = vmatpush2.bf16.msra.mxu0 %v3253
        %3876 = vmatprep.subr.bf16.mxu0 %v3250
        %3877 = vmatpush2.bf16.msra.mxu0 %v3249
        %3878 = vmatprep.subr.bf16.mxu0 %v3246
        %3879 = vmatpush2.bf16.msra.mxu0 %v3245
        %3880 = vmatprep.subr.bf16.mxu0 %v3242
        %3881 = vmatpush2.bf16.msra.mxu0 %v3241
        %3882 = vmatprep.subr.bf16.mxu0 %v3238
        %3883 = vmatpush2.bf16.msra.mxu0 %v3237
        %3884 = vmatprep.subr.bf16.mxu0 %v3234
        %3885 = vmatpush2.bf16.msra.mxu0 %v3233
        %3886 = vmatprep.subr.bf16.mxu0 %v3230
        %3887 = vmatpush2.bf16.msra.mxu0 %v3229
        %3888 = vmatprep.mubr.bf16.mxu0 %v1902
        %3889 = vmatmul.mubr.bf16.gmra.mxu0 %v1901
        %v3890 = vpop.f32.mrf.mxu0
        %v3891 = vadd.f32 %v3778, %v3890
        %v3892 = vpop.f32.mrf.mxu0
        %v3893 = vadd.f32 %v3780, %v3892
        %v3894 = vpop.f32.mrf.mxu0
        %v3895 = vadd.f32 %v3782, %v3894
        %v3896 = vpop.f32.mrf.mxu0
        %v3897 = vadd.f32 %v3784, %v3896
        %3898 = vmatprep.mubr.bf16.mxu0 %v1910
        %3899 = vmatmul.mubr.bf16.gmra.mxu0 %v1909
        %v3900 = vpop.f32.mrf.mxu0
        %v3901 = vadd.f32 %v3788, %v3900
        %v3902 = vpop.f32.mrf.mxu0
        %v3903 = vadd.f32 %v3790, %v3902
        %v3904 = vpop.f32.mrf.mxu0
        %v3905 = vadd.f32 %v3792, %v3904
        %v3906 = vpop.f32.mrf.mxu0
        %v3907 = vadd.f32 %v3794, %v3906
        %3908 = vmatprep.mubr.bf16.mxu0 %v1918
        %3909 = vmatmul.mubr.bf16.gmra.mxu0 %v1917
        %v3910 = vpop.f32.mrf.mxu0
        %v3911 = vadd.f32 %v3798, %v3910
        %v3912 = vpop.f32.mrf.mxu0
        %v3913 = vadd.f32 %v3800, %v3912
        %v3914 = vpop.f32.mrf.mxu0
        %v3915 = vadd.f32 %v3802, %v3914
        %v3916 = vpop.f32.mrf.mxu0
        %v3917 = vadd.f32 %v3804, %v3916
        %3918 = vmatprep.mubr.bf16.mxu0 %v1926
        %3919 = vmatmul.mubr.bf16.gmra.mxu0 %v1925
        %v3920 = vpop.f32.mrf.mxu0
        %v3921 = vadd.f32 %v3808, %v3920
        %v3922 = vpop.f32.mrf.mxu0
        %v3923 = vadd.f32 %v3810, %v3922
        %v3924 = vpop.f32.mrf.mxu0
        %v3925 = vadd.f32 %v3812, %v3924
        %v3926 = vpop.f32.mrf.mxu0
        %v3927 = vadd.f32 %v3814, %v3926
        %3928 = vmatprep.mubr.bf16.mxu0 %v1934
        %3929 = vmatmul.mubr.bf16.gmra.mxu0 %v1933
        %v3930 = vpop.f32.mrf.mxu0
        %v3931 = vadd.f32 %v3818, %v3930
        %v3932 = vpop.f32.mrf.mxu0
        %v3933 = vadd.f32 %v3820, %v3932
        %v3934 = vpop.f32.mrf.mxu0
        %v3935 = vadd.f32 %v3822, %v3934
        %v3936 = vpop.f32.mrf.mxu0
        %v3937 = vadd.f32 %v3824, %v3936
        %3938 = vmatprep.mubr.bf16.mxu0 %v1942
        %3939 = vmatmul.mubr.bf16.gmra.mxu0 %v1941
        %v3940 = vpop.f32.mrf.mxu0
        %v3941 = vadd.f32 %v3828, %v3940
        %v3942 = vpop.f32.mrf.mxu0
        %v3943 = vadd.f32 %v3830, %v3942
        %v3944 = vpop.f32.mrf.mxu0
        %v3945 = vadd.f32 %v3832, %v3944
        %v3946 = vpop.f32.mrf.mxu0
        %v3947 = vadd.f32 %v3834, %v3946
        %3948 = vmatprep.mubr.bf16.mxu0 %v1950
        %3949 = vmatmul.mubr.bf16.gmra.mxu0 %v1949
        %v3950 = vpop.f32.mrf.mxu0
        %v3951 = vadd.f32 %v3838, %v3950
        %v3952 = vpop.f32.mrf.mxu0
        %v3953 = vadd.f32 %v3840, %v3952
        %v3954 = vpop.f32.mrf.mxu0
        %v3955 = vadd.f32 %v3842, %v3954
        %v3956 = vpop.f32.mrf.mxu0
        %v3957 = vadd.f32 %v3844, %v3956
        %3958 = vmatprep.mubr.bf16.mxu0 %v1958
        %3959 = vmatmul.mubr.bf16.gmra.mxu0 %v1957
        %v3960 = vpop.f32.mrf.mxu0
        %v3961 = vadd.f32 %v3848, %v3960
        %v3962 = vpop.f32.mrf.mxu0
        %v3963 = vadd.f32 %v3850, %v3962
        %v3964 = vpop.f32.mrf.mxu0
        %v3965 = vadd.f32 %v3852, %v3964
        %v3966 = vpop.f32.mrf.mxu0
        %v3967 = vadd.f32 %v3854, %v3966
        %3968 = vdwg.mxu0
        %3969 = vmatprep.subr.bf16.mxu0 %v3036
        %3970 = vmatpush1.bf16.msra.mxu0 %v3035
        %3971 = vmatprep.subr.bf16.mxu0 %v3032
        %3972 = vmatpush1.bf16.msra.mxu0 %v3031
        %3973 = vmatprep.subr.bf16.mxu0 %v3028
        %3974 = vmatpush1.bf16.msra.mxu0 %v3027
        %3975 = vmatprep.subr.bf16.mxu0 %v3024
        %3976 = vmatpush1.bf16.msra.mxu0 %v3023
        %3977 = vmatprep.subr.bf16.mxu0 %v3020
        %3978 = vmatpush1.bf16.msra.mxu0 %v3019
        %3979 = vmatprep.subr.bf16.mxu0 %v3016
        %3980 = vmatpush1.bf16.msra.mxu0 %v3015
        %3981 = vmatprep.subr.bf16.mxu0 %v3012
        %3982 = vmatpush1.bf16.msra.mxu0 %v3011
        %3983 = vmatprep.subr.bf16.mxu0 %v3008
        %3984 = vmatpush1.bf16.msra.mxu0 %v3007
        %3985 = vmatprep.subr.bf16.mxu0 %v3068
        %3986 = vmatpush2.bf16.msra.mxu0 %v3067
        %3987 = vmatprep.subr.bf16.mxu0 %v3064
        %3988 = vmatpush2.bf16.msra.mxu0 %v3063
        %3989 = vmatprep.subr.bf16.mxu0 %v3060
        %3990 = vmatpush2.bf16.msra.mxu0 %v3059
        %3991 = vmatprep.subr.bf16.mxu0 %v3056
        %3992 = vmatpush2.bf16.msra.mxu0 %v3055
        %3993 = vmatprep.subr.bf16.mxu0 %v3052
        %3994 = vmatpush2.bf16.msra.mxu0 %v3051
        %3995 = vmatprep.subr.bf16.mxu0 %v3048
        %3996 = vmatpush2.bf16.msra.mxu0 %v3047
        %3997 = vmatprep.subr.bf16.mxu0 %v3044
        %3998 = vmatpush2.bf16.msra.mxu0 %v3043
        %3999 = vmatprep.subr.bf16.mxu0 %v3040
        %4000 = vmatpush2.bf16.msra.mxu0 %v3039
        %4001 = vmatprep.mubr.bf16.mxu0 %v1896
        %4002 = vmatmul.mubr.bf16.gmra.mxu0 %v1895
        %v4003 = vpop.f32.mrf.mxu0
        %v4004 = vadd.f32 %v2228, %v4003
        %v4005 = vpop.f32.mrf.mxu0
        %v4006 = vadd.f32 %v2232, %v4005
        %v4007 = vpop.f32.mrf.mxu0
        %v4008 = vadd.f32 %v2228, %v4007
        %v4009 = vpop.f32.mrf.mxu0
        %v4010 = vadd.f32 %v2232, %v4009
        %4011 = vmatprep.mubr.bf16.mxu0 %v1904
        %4012 = vmatmul.mubr.bf16.gmra.mxu0 %v1903
        %v4013 = vpop.f32.mrf.mxu0
        %v4014 = vadd.f32 %v2228, %v4013
        %v4015 = vpop.f32.mrf.mxu0
        %v4016 = vadd.f32 %v2232, %v4015
        %v4017 = vpop.f32.mrf.mxu0
        %v4018 = vadd.f32 %v2228, %v4017
        %v4019 = vpop.f32.mrf.mxu0
        %v4020 = vadd.f32 %v2232, %v4019
        %4021 = vmatprep.mubr.bf16.mxu0 %v1912
        %4022 = vmatmul.mubr.bf16.gmra.mxu0 %v1911
        %v4023 = vpop.f32.mrf.mxu0
        %v4024 = vadd.f32 %v2228, %v4023
        %v4025 = vpop.f32.mrf.mxu0
        %v4026 = vadd.f32 %v2232, %v4025
        %v4027 = vpop.f32.mrf.mxu0
        %v4028 = vadd.f32 %v2228, %v4027
        %v4029 = vpop.f32.mrf.mxu0
        %v4030 = vadd.f32 %v2232, %v4029
        %4031 = vmatprep.mubr.bf16.mxu0 %v1920
        %4032 = vmatmul.mubr.bf16.gmra.mxu0 %v1919
        %v4033 = vpop.f32.mrf.mxu0
        %v4034 = vadd.f32 %v2228, %v4033
        %v4035 = vpop.f32.mrf.mxu0
        %v4036 = vadd.f32 %v2232, %v4035
        %v4037 = vpop.f32.mrf.mxu0
        %v4038 = vadd.f32 %v2228, %v4037
        %v4039 = vpop.f32.mrf.mxu0
        %v4040 = vadd.f32 %v2232, %v4039
        %4041 = vmatprep.mubr.bf16.mxu0 %v1928
        %4042 = vmatmul.mubr.bf16.gmra.mxu0 %v1927
        %v4043 = vpop.f32.mrf.mxu0
        %v4044 = vadd.f32 %v2228, %v4043
        %v4045 = vpop.f32.mrf.mxu0
        %v4046 = vadd.f32 %v2232, %v4045
        %v4047 = vpop.f32.mrf.mxu0
        %v4048 = vadd.f32 %v2228, %v4047
        %v4049 = vpop.f32.mrf.mxu0
        %v4050 = vadd.f32 %v2232, %v4049
        %4051 = vmatprep.mubr.bf16.mxu0 %v1936
        %4052 = vmatmul.mubr.bf16.gmra.mxu0 %v1935
        %v4053 = vpop.f32.mrf.mxu0
        %v4054 = vadd.f32 %v2228, %v4053
        %v4055 = vpop.f32.mrf.mxu0
        %v4056 = vadd.f32 %v2232, %v4055
        %v4057 = vpop.f32.mrf.mxu0
        %v4058 = vadd.f32 %v2228, %v4057
        %v4059 = vpop.f32.mrf.mxu0
        %v4060 = vadd.f32 %v2232, %v4059
        %4061 = vmatprep.mubr.bf16.mxu0 %v1944
        %4062 = vmatmul.mubr.bf16.gmra.mxu0 %v1943
        %v4063 = vpop.f32.mrf.mxu0
        %v4064 = vadd.f32 %v2228, %v4063
        %v4065 = vpop.f32.mrf.mxu0
        %v4066 = vadd.f32 %v2232, %v4065
        %v4067 = vpop.f32.mrf.mxu0
        %v4068 = vadd.f32 %v2228, %v4067
        %v4069 = vpop.f32.mrf.mxu0
        %v4070 = vadd.f32 %v2232, %v4069
        %4071 = vmatprep.mubr.bf16.mxu0 %v1952
        %4072 = vmatmul.mubr.bf16.gmra.mxu0 %v1951
        %v4073 = vpop.f32.mrf.mxu0
        %v4074 = vadd.f32 %v2228, %v4073
        %v4075 = vpop.f32.mrf.mxu0
        %v4076 = vadd.f32 %v2232, %v4075
        %v4077 = vpop.f32.mrf.mxu0
        %v4078 = vadd.f32 %v2228, %v4077
        %v4079 = vpop.f32.mrf.mxu0
        %v4080 = vadd.f32 %v2232, %v4079
        %4081 = vdwg.mxu0
        %4082 = vmatprep.subr.bf16.mxu0 %v3100
        %4083 = vmatpush1.bf16.msra.mxu0 %v3099
        %4084 = vmatprep.subr.bf16.mxu0 %v3096
        %4085 = vmatpush1.bf16.msra.mxu0 %v3095
        %4086 = vmatprep.subr.bf16.mxu0 %v3092
        %4087 = vmatpush1.bf16.msra.mxu0 %v3091
        %4088 = vmatprep.subr.bf16.mxu0 %v3088
        %4089 = vmatpush1.bf16.msra.mxu0 %v3087
        %4090 = vmatprep.subr.bf16.mxu0 %v3084
        %4091 = vmatpush1.bf16.msra.mxu0 %v3083
        %4092 = vmatprep.subr.bf16.mxu0 %v3080
        %4093 = vmatpush1.bf16.msra.mxu0 %v3079
        %4094 = vmatprep.subr.bf16.mxu0 %v3076
        %4095 = vmatpush1.bf16.msra.mxu0 %v3075
        %4096 = vmatprep.subr.bf16.mxu0 %v3072
        %4097 = vmatpush1.bf16.msra.mxu0 %v3071
        %4098 = vmatprep.subr.bf16.mxu0 %v3132
        %4099 = vmatpush2.bf16.msra.mxu0 %v3131
        %4100 = vmatprep.subr.bf16.mxu0 %v3128
        %4101 = vmatpush2.bf16.msra.mxu0 %v3127
        %4102 = vmatprep.subr.bf16.mxu0 %v3124
        %4103 = vmatpush2.bf16.msra.mxu0 %v3123
        %4104 = vmatprep.subr.bf16.mxu0 %v3120
        %4105 = vmatpush2.bf16.msra.mxu0 %v3119
        %4106 = vmatprep.subr.bf16.mxu0 %v3116
        %4107 = vmatpush2.bf16.msra.mxu0 %v3115
        %4108 = vmatprep.subr.bf16.mxu0 %v3112
        %4109 = vmatpush2.bf16.msra.mxu0 %v3111
        %4110 = vmatprep.subr.bf16.mxu0 %v3108
        %4111 = vmatpush2.bf16.msra.mxu0 %v3107
        %4112 = vmatprep.subr.bf16.mxu0 %v3104
        %4113 = vmatpush2.bf16.msra.mxu0 %v3103
        %4114 = vmatprep.mubr.bf16.mxu0 %v1898
        %4115 = vmatmul.mubr.bf16.gmra.mxu0 %v1897
        %v4116 = vpop.f32.mrf.mxu0
        %v4117 = vadd.f32 %v4004, %v4116
        %v4118 = vpop.f32.mrf.mxu0
        %v4119 = vadd.f32 %v4006, %v4118
        %v4120 = vpop.f32.mrf.mxu0
        %v4121 = vadd.f32 %v4008, %v4120
        %v4122 = vpop.f32.mrf.mxu0
        %v4123 = vadd.f32 %v4010, %v4122
        %4124 = vmatprep.mubr.bf16.mxu0 %v1906
        %4125 = vmatmul.mubr.bf16.gmra.mxu0 %v1905
        %v4126 = vpop.f32.mrf.mxu0
        %v4127 = vadd.f32 %v4014, %v4126
        %v4128 = vpop.f32.mrf.mxu0
        %v4129 = vadd.f32 %v4016, %v4128
        %v4130 = vpop.f32.mrf.mxu0
        %v4131 = vadd.f32 %v4018, %v4130
        %v4132 = vpop.f32.mrf.mxu0
        %v4133 = vadd.f32 %v4020, %v4132
        %4134 = vmatprep.mubr.bf16.mxu0 %v1914
        %4135 = vmatmul.mubr.bf16.gmra.mxu0 %v1913
        %v4136 = vpop.f32.mrf.mxu0
        %v4137 = vadd.f32 %v4024, %v4136
        %v4138 = vpop.f32.mrf.mxu0
        %v4139 = vadd.f32 %v4026, %v4138
        %v4140 = vpop.f32.mrf.mxu0
        %v4141 = vadd.f32 %v4028, %v4140
        %v4142 = vpop.f32.mrf.mxu0
        %v4143 = vadd.f32 %v4030, %v4142
        %4144 = vmatprep.mubr.bf16.mxu0 %v1922
        %4145 = vmatmul.mubr.bf16.gmra.mxu0 %v1921
        %v4146 = vpop.f32.mrf.mxu0
        %v4147 = vadd.f32 %v4034, %v4146
        %v4148 = vpop.f32.mrf.mxu0
        %v4149 = vadd.f32 %v4036, %v4148
        %v4150 = vpop.f32.mrf.mxu0
        %v4151 = vadd.f32 %v4038, %v4150
        %v4152 = vpop.f32.mrf.mxu0
        %v4153 = vadd.f32 %v4040, %v4152
        %4154 = vmatprep.mubr.bf16.mxu0 %v1930
        %4155 = vmatmul.mubr.bf16.gmra.mxu0 %v1929
        %v4156 = vpop.f32.mrf.mxu0
        %v4157 = vadd.f32 %v4044, %v4156
        %v4158 = vpop.f32.mrf.mxu0
        %v4159 = vadd.f32 %v4046, %v4158
        %v4160 = vpop.f32.mrf.mxu0
        %v4161 = vadd.f32 %v4048, %v4160
        %v4162 = vpop.f32.mrf.mxu0
        %v4163 = vadd.f32 %v4050, %v4162
        %4164 = vmatprep.mubr.bf16.mxu0 %v1938
        %4165 = vmatmul.mubr.bf16.gmra.mxu0 %v1937
        %v4166 = vpop.f32.mrf.mxu0
        %v4167 = vadd.f32 %v4054, %v4166
        %v4168 = vpop.f32.mrf.mxu0
        %v4169 = vadd.f32 %v4056, %v4168
        %v4170 = vpop.f32.mrf.mxu0
        %v4171 = vadd.f32 %v4058, %v4170
        %v4172 = vpop.f32.mrf.mxu0
        %v4173 = vadd.f32 %v4060, %v4172
        %4174 = vmatprep.mubr.bf16.mxu0 %v1946
        %4175 = vmatmul.mubr.bf16.gmra.mxu0 %v1945
        %v4176 = vpop.f32.mrf.mxu0
        %v4177 = vadd.f32 %v4064, %v4176
        %v4178 = vpop.f32.mrf.mxu0
        %v4179 = vadd.f32 %v4066, %v4178
        %v4180 = vpop.f32.mrf.mxu0
        %v4181 = vadd.f32 %v4068, %v4180
        %v4182 = vpop.f32.mrf.mxu0
        %v4183 = vadd.f32 %v4070, %v4182
        %4184 = vmatprep.mubr.bf16.mxu0 %v1954
        %4185 = vmatmul.mubr.bf16.gmra.mxu0 %v1953
        %v4186 = vpop.f32.mrf.mxu0
        %v4187 = vadd.f32 %v4074, %v4186
        %v4188 = vpop.f32.mrf.mxu0
        %v4189 = vadd.f32 %v4076, %v4188
        %v4190 = vpop.f32.mrf.mxu0
        %v4191 = vadd.f32 %v4078, %v4190
        %v4192 = vpop.f32.mrf.mxu0
        %v4193 = vadd.f32 %v4080, %v4192
        %4194 = vdwg.mxu0
        %4195 = vmatprep.subr.bf16.mxu0 %v3164
        %4196 = vmatpush1.bf16.msra.mxu0 %v3163
        %4197 = vmatprep.subr.bf16.mxu0 %v3160
        %4198 = vmatpush1.bf16.msra.mxu0 %v3159
        %4199 = vmatprep.subr.bf16.mxu0 %v3156
        %4200 = vmatpush1.bf16.msra.mxu0 %v3155
        %4201 = vmatprep.subr.bf16.mxu0 %v3152
        %4202 = vmatpush1.bf16.msra.mxu0 %v3151
        %4203 = vmatprep.subr.bf16.mxu0 %v3148
        %4204 = vmatpush1.bf16.msra.mxu0 %v3147
        %4205 = vmatprep.subr.bf16.mxu0 %v3144
        %4206 = vmatpush1.bf16.msra.mxu0 %v3143
        %4207 = vmatprep.subr.bf16.mxu0 %v3140
        %4208 = vmatpush1.bf16.msra.mxu0 %v3139
        %4209 = vmatprep.subr.bf16.mxu0 %v3136
        %4210 = vmatpush1.bf16.msra.mxu0 %v3135
        %4211 = vmatprep.subr.bf16.mxu0 %v3196
        %4212 = vmatpush2.bf16.msra.mxu0 %v3195
        %4213 = vmatprep.subr.bf16.mxu0 %v3192
        %4214 = vmatpush2.bf16.msra.mxu0 %v3191
        %4215 = vmatprep.subr.bf16.mxu0 %v3188
        %4216 = vmatpush2.bf16.msra.mxu0 %v3187
        %4217 = vmatprep.subr.bf16.mxu0 %v3184
        %4218 = vmatpush2.bf16.msra.mxu0 %v3183
        %4219 = vmatprep.subr.bf16.mxu0 %v3180
        %4220 = vmatpush2.bf16.msra.mxu0 %v3179
        %4221 = vmatprep.subr.bf16.mxu0 %v3176
        %4222 = vmatpush2.bf16.msra.mxu0 %v3175
        %4223 = vmatprep.subr.bf16.mxu0 %v3172
        %4224 = vmatpush2.bf16.msra.mxu0 %v3171
        %4225 = vmatprep.subr.bf16.mxu0 %v3168
        %4226 = vmatpush2.bf16.msra.mxu0 %v3167
        %4227 = vmatprep.mubr.bf16.mxu0 %v1900
        %4228 = vmatmul.mubr.bf16.gmra.mxu0 %v1899
        %v4229 = vpop.f32.mrf.mxu0
        %v4230 = vadd.f32 %v4117, %v4229
        %v4231 = vpop.f32.mrf.mxu0
        %v4232 = vadd.f32 %v4119, %v4231
        %v4233 = vpop.f32.mrf.mxu0
        %v4234 = vadd.f32 %v4121, %v4233
        %v4235 = vpop.f32.mrf.mxu0
        %v4236 = vadd.f32 %v4123, %v4235
        %4237 = vmatprep.mubr.bf16.mxu0 %v1908
        %4238 = vmatmul.mubr.bf16.gmra.mxu0 %v1907
        %v4239 = vpop.f32.mrf.mxu0
        %v4240 = vadd.f32 %v4127, %v4239
        %v4241 = vpop.f32.mrf.mxu0
        %v4242 = vadd.f32 %v4129, %v4241
        %v4243 = vpop.f32.mrf.mxu0
        %v4244 = vadd.f32 %v4131, %v4243
        %v4245 = vpop.f32.mrf.mxu0
        %v4246 = vadd.f32 %v4133, %v4245
        %4247 = vmatprep.mubr.bf16.mxu0 %v1916
        %4248 = vmatmul.mubr.bf16.gmra.mxu0 %v1915
        %v4249 = vpop.f32.mrf.mxu0
        %v4250 = vadd.f32 %v4137, %v4249
        %v4251 = vpop.f32.mrf.mxu0
        %v4252 = vadd.f32 %v4139, %v4251
        %v4253 = vpop.f32.mrf.mxu0
        %v4254 = vadd.f32 %v4141, %v4253
        %v4255 = vpop.f32.mrf.mxu0
        %v4256 = vadd.f32 %v4143, %v4255
        %4257 = vmatprep.mubr.bf16.mxu0 %v1924
        %4258 = vmatmul.mubr.bf16.gmra.mxu0 %v1923
        %v4259 = vpop.f32.mrf.mxu0
        %v4260 = vadd.f32 %v4147, %v4259
        %v4261 = vpop.f32.mrf.mxu0
        %v4262 = vadd.f32 %v4149, %v4261
        %v4263 = vpop.f32.mrf.mxu0
        %v4264 = vadd.f32 %v4151, %v4263
        %v4265 = vpop.f32.mrf.mxu0
        %v4266 = vadd.f32 %v4153, %v4265
        %4267 = vmatprep.mubr.bf16.mxu0 %v1932
        %4268 = vmatmul.mubr.bf16.gmra.mxu0 %v1931
        %v4269 = vpop.f32.mrf.mxu0
        %v4270 = vadd.f32 %v4157, %v4269
        %v4271 = vpop.f32.mrf.mxu0
        %v4272 = vadd.f32 %v4159, %v4271
        %v4273 = vpop.f32.mrf.mxu0
        %v4274 = vadd.f32 %v4161, %v4273
        %v4275 = vpop.f32.mrf.mxu0
        %v4276 = vadd.f32 %v4163, %v4275
        %4277 = vmatprep.mubr.bf16.mxu0 %v1940
        %4278 = vmatmul.mubr.bf16.gmra.mxu0 %v1939
        %v4279 = vpop.f32.mrf.mxu0
        %v4280 = vadd.f32 %v4167, %v4279
        %v4281 = vpop.f32.mrf.mxu0
        %v4282 = vadd.f32 %v4169, %v4281
        %v4283 = vpop.f32.mrf.mxu0
        %v4284 = vadd.f32 %v4171, %v4283
        %v4285 = vpop.f32.mrf.mxu0
        %v4286 = vadd.f32 %v4173, %v4285
        %4287 = vmatprep.mubr.bf16.mxu0 %v1948
        %4288 = vmatmul.mubr.bf16.gmra.mxu0 %v1947
        %v4289 = vpop.f32.mrf.mxu0
        %v4290 = vadd.f32 %v4177, %v4289
        %v4291 = vpop.f32.mrf.mxu0
        %v4292 = vadd.f32 %v4179, %v4291
        %v4293 = vpop.f32.mrf.mxu0
        %v4294 = vadd.f32 %v4181, %v4293
        %v4295 = vpop.f32.mrf.mxu0
        %v4296 = vadd.f32 %v4183, %v4295
        %4297 = vmatprep.mubr.bf16.mxu0 %v1956
        %4298 = vmatmul.mubr.bf16.gmra.mxu0 %v1955
        %v4299 = vpop.f32.mrf.mxu0
        %v4300 = vadd.f32 %v4187, %v4299
        %v4301 = vpop.f32.mrf.mxu0
        %v4302 = vadd.f32 %v4189, %v4301
        %v4303 = vpop.f32.mrf.mxu0
        %v4304 = vadd.f32 %v4191, %v4303
        %v4305 = vpop.f32.mrf.mxu0
        %v4306 = vadd.f32 %v4193, %v4305
        %4307 = vdwg.mxu0
        %4308 = vmatprep.subr.bf16.mxu0 %v3228
        %4309 = vmatpush1.bf16.msra.mxu0 %v3227
        %4310 = vmatprep.subr.bf16.mxu0 %v3224
        %4311 = vmatpush1.bf16.msra.mxu0 %v3223
        %4312 = vmatprep.subr.bf16.mxu0 %v3220
        %4313 = vmatpush1.bf16.msra.mxu0 %v3219
        %4314 = vmatprep.subr.bf16.mxu0 %v3216
        %4315 = vmatpush1.bf16.msra.mxu0 %v3215
        %4316 = vmatprep.subr.bf16.mxu0 %v3212
        %4317 = vmatpush1.bf16.msra.mxu0 %v3211
        %4318 = vmatprep.subr.bf16.mxu0 %v3208
        %4319 = vmatpush1.bf16.msra.mxu0 %v3207
        %4320 = vmatprep.subr.bf16.mxu0 %v3204
        %4321 = vmatpush1.bf16.msra.mxu0 %v3203
        %4322 = vmatprep.subr.bf16.mxu0 %v3200
        %4323 = vmatpush1.bf16.msra.mxu0 %v3199
        %4324 = vmatprep.subr.bf16.mxu0 %v3260
        %4325 = vmatpush2.bf16.msra.mxu0 %v3259
        %4326 = vmatprep.subr.bf16.mxu0 %v3256
        %4327 = vmatpush2.bf16.msra.mxu0 %v3255
        %4328 = vmatprep.subr.bf16.mxu0 %v3252
        %4329 = vmatpush2.bf16.msra.mxu0 %v3251
        %4330 = vmatprep.subr.bf16.mxu0 %v3248
        %4331 = vmatpush2.bf16.msra.mxu0 %v3247
        %4332 = vmatprep.subr.bf16.mxu0 %v3244
        %4333 = vmatpush2.bf16.msra.mxu0 %v3243
        %4334 = vmatprep.subr.bf16.mxu0 %v3240
        %4335 = vmatpush2.bf16.msra.mxu0 %v3239
        %4336 = vmatprep.subr.bf16.mxu0 %v3236
        %4337 = vmatpush2.bf16.msra.mxu0 %v3235
        %4338 = vmatprep.subr.bf16.mxu0 %v3232
        %4339 = vmatpush2.bf16.msra.mxu0 %v3231
        %4340 = vmatprep.mubr.bf16.mxu0 %v1902
        %4341 = vmatmul.mubr.bf16.gmra.mxu0 %v1901
        %v4342 = vpop.f32.mrf.mxu0
        %v4343 = vadd.f32 %v4230, %v4342
        %v4344 = vpop.f32.mrf.mxu0
        %v4345 = vadd.f32 %v4232, %v4344
        %v4346 = vpop.f32.mrf.mxu0
        %v4347 = vadd.f32 %v4234, %v4346
        %v4348 = vpop.f32.mrf.mxu0
        %v4349 = vadd.f32 %v4236, %v4348
        %4350 = vmatprep.mubr.bf16.mxu0 %v1910
        %4351 = vmatmul.mubr.bf16.gmra.mxu0 %v1909
        %v4352 = vpop.f32.mrf.mxu0
        %v4353 = vadd.f32 %v4240, %v4352
        %v4354 = vpop.f32.mrf.mxu0
        %v4355 = vadd.f32 %v4242, %v4354
        %v4356 = vpop.f32.mrf.mxu0
        %v4357 = vadd.f32 %v4244, %v4356
        %v4358 = vpop.f32.mrf.mxu0
        %v4359 = vadd.f32 %v4246, %v4358
        %4360 = vmatprep.mubr.bf16.mxu0 %v1918
        %4361 = vmatmul.mubr.bf16.gmra.mxu0 %v1917
        %v4362 = vpop.f32.mrf.mxu0
        %v4363 = vadd.f32 %v4250, %v4362
        %v4364 = vpop.f32.mrf.mxu0
        %v4365 = vadd.f32 %v4252, %v4364
        %v4366 = vpop.f32.mrf.mxu0
        %v4367 = vadd.f32 %v4254, %v4366
        %v4368 = vpop.f32.mrf.mxu0
        %v4369 = vadd.f32 %v4256, %v4368
        %4370 = vmatprep.mubr.bf16.mxu0 %v1926
        %4371 = vmatmul.mubr.bf16.gmra.mxu0 %v1925
        %v4372 = vpop.f32.mrf.mxu0
        %v4373 = vadd.f32 %v4260, %v4372
        %v4374 = vpop.f32.mrf.mxu0
        %v4375 = vadd.f32 %v4262, %v4374
        %v4376 = vpop.f32.mrf.mxu0
        %v4377 = vadd.f32 %v4264, %v4376
        %v4378 = vpop.f32.mrf.mxu0
        %v4379 = vadd.f32 %v4266, %v4378
        %4380 = vmatprep.mubr.bf16.mxu0 %v1934
        %4381 = vmatmul.mubr.bf16.gmra.mxu0 %v1933
        %v4382 = vpop.f32.mrf.mxu0
        %v4383 = vadd.f32 %v4270, %v4382
        %v4384 = vpop.f32.mrf.mxu0
        %v4385 = vadd.f32 %v4272, %v4384
        %v4386 = vpop.f32.mrf.mxu0
        %v4387 = vadd.f32 %v4274, %v4386
        %v4388 = vpop.f32.mrf.mxu0
        %v4389 = vadd.f32 %v4276, %v4388
        %4390 = vmatprep.mubr.bf16.mxu0 %v1942
        %4391 = vmatmul.mubr.bf16.gmra.mxu0 %v1941
        %v4392 = vpop.f32.mrf.mxu0
        %v4393 = vadd.f32 %v4280, %v4392
        %v4394 = vpop.f32.mrf.mxu0
        %v4395 = vadd.f32 %v4282, %v4394
        %v4396 = vpop.f32.mrf.mxu0
        %v4397 = vadd.f32 %v4284, %v4396
        %v4398 = vpop.f32.mrf.mxu0
        %v4399 = vadd.f32 %v4286, %v4398
        %4400 = vmatprep.mubr.bf16.mxu0 %v1950
        %4401 = vmatmul.mubr.bf16.gmra.mxu0 %v1949
        %v4402 = vpop.f32.mrf.mxu0
        %v4403 = vadd.f32 %v4290, %v4402
        %v4404 = vpop.f32.mrf.mxu0
        %v4405 = vadd.f32 %v4292, %v4404
        %v4406 = vpop.f32.mrf.mxu0
        %v4407 = vadd.f32 %v4294, %v4406
        %v4408 = vpop.f32.mrf.mxu0
        %v4409 = vadd.f32 %v4296, %v4408
        %4410 = vmatprep.mubr.bf16.mxu0 %v1958
        %4411 = vmatmul.mubr.bf16.gmra.mxu0 %v1957
        %v4412 = vpop.f32.mrf.mxu0
        %v4413 = vadd.f32 %v4300, %v4412
        %v4414 = vpop.f32.mrf.mxu0
        %v4415 = vadd.f32 %v4302, %v4414
        %v4416 = vpop.f32.mrf.mxu0
        %v4417 = vadd.f32 %v4304, %v4416
        %v4418 = vpop.f32.mrf.mxu0
        %v4419 = vadd.f32 %v4306, %v4418
        %4420 = vdwg.mxu0
        %v4421 = vmax.f32 %v3891, 0.0
        %v4422 = vmax.f32 %v3893, 0.0
        %v4423 = vmax.f32 %v4343, 0.0
        %v4424 = vmax.f32 %v4345, 0.0
        %v4425 = vmax.f32 %v3895, 0.0
        %v4426 = vmax.f32 %v3897, 0.0
        %v4427 = vmax.f32 %v4347, 0.0
        %v4428 = vmax.f32 %v4349, 0.0
        %v4429 = vmax.f32 %v3901, 0.0
        %v4430 = vmax.f32 %v3903, 0.0
        %v4431 = vmax.f32 %v4353, 0.0
        %v4432 = vmax.f32 %v4355, 0.0
        %v4433 = vmax.f32 %v3905, 0.0
        %v4434 = vmax.f32 %v3907, 0.0
        %v4435 = vmax.f32 %v4357, 0.0
        %v4436 = vmax.f32 %v4359, 0.0
        %v4437 = vmax.f32 %v3911, 0.0
        %v4438 = vmax.f32 %v3913, 0.0
        %v4439 = vmax.f32 %v4363, 0.0
        %v4440 = vmax.f32 %v4365, 0.0
        %v4441 = vmax.f32 %v3915, 0.0
        %v4442 = vmax.f32 %v3917, 0.0
        %v4443 = vmax.f32 %v4367, 0.0
        %v4444 = vmax.f32 %v4369, 0.0
        %v4445 = vmax.f32 %v3921, 0.0
        %v4446 = vmax.f32 %v3923, 0.0
        %v4447 = vmax.f32 %v4373, 0.0
        %v4448 = vmax.f32 %v4375, 0.0
        %v4449 = vmax.f32 %v3925, 0.0
        %v4450 = vmax.f32 %v3927, 0.0
        %v4451 = vmax.f32 %v4377, 0.0
        %v4452 = vmax.f32 %v4379, 0.0
        %v4453 = vmax.f32 %v3931, 0.0
        %v4454 = vmax.f32 %v3933, 0.0
        %v4455 = vmax.f32 %v4383, 0.0
        %v4456 = vmax.f32 %v4385, 0.0
        %v4457 = vmax.f32 %v3935, 0.0
        %v4458 = vmax.f32 %v3937, 0.0
        %v4459 = vmax.f32 %v4387, 0.0
        %v4460 = vmax.f32 %v4389, 0.0
        %v4461 = vmax.f32 %v3941, 0.0
        %v4462 = vmax.f32 %v3943, 0.0
        %v4463 = vmax.f32 %v4393, 0.0
        %v4464 = vmax.f32 %v4395, 0.0
        %v4465 = vmax.f32 %v3945, 0.0
        %v4466 = vmax.f32 %v3947, 0.0
        %v4467 = vmax.f32 %v4397, 0.0
        %v4468 = vmax.f32 %v4399, 0.0
        %v4469 = vmax.f32 %v3951, 0.0
        %v4470 = vmax.f32 %v3953, 0.0
        %v4471 = vmax.f32 %v4403, 0.0
        %v4472 = vmax.f32 %v4405, 0.0
        %v4473 = vmax.f32 %v3955, 0.0
        %v4474 = vmax.f32 %v3957, 0.0
        %v4475 = vmax.f32 %v4407, 0.0
        %v4476 = vmax.f32 %v4409, 0.0
        %v4477 = vmax.f32 %v3961, 0.0
        %v4478 = vmax.f32 %v3963, 0.0
        %v4479 = vmax.f32 %v4413, 0.0
        %v4480 = vmax.f32 %v4415, 0.0
        %v4481 = vmax.f32 %v3965, 0.0
        %v4482 = vmax.f32 %v3967, 0.0
        %v4483 = vmax.f32 %v4417, 0.0
        %v4484 = vmax.f32 %v4419, 0.0
        %v4485 = vpack.c.bf16 %v4425, %v4421
        %v4486 = vpack.c.bf16 %v4426, %v4422
        %v4487 = vpack.c.bf16 %v4427, %v4423
        %v4488 = vpack.c.bf16 %v4428, %v4424
        %v4489 = vpack.c.bf16 %v4433, %v4429
        %v4490 = vpack.c.bf16 %v4434, %v4430
        %v4491 = vpack.c.bf16 %v4435, %v4431
        %v4492 = vpack.c.bf16 %v4436, %v4432
        %v4493 = vpack.c.bf16 %v4441, %v4437
        %v4494 = vpack.c.bf16 %v4442, %v4438
        %v4495 = vpack.c.bf16 %v4443, %v4439
        %v4496 = vpack.c.bf16 %v4444, %v4440
        %v4497 = vpack.c.bf16 %v4449, %v4445
        %v4498 = vpack.c.bf16 %v4450, %v4446
        %v4499 = vpack.c.bf16 %v4451, %v4447
        %v4500 = vpack.c.bf16 %v4452, %v4448
        %v4501 = vpack.c.bf16 %v4457, %v4453
        %v4502 = vpack.c.bf16 %v4458, %v4454
        %v4503 = vpack.c.bf16 %v4459, %v4455
        %v4504 = vpack.c.bf16 %v4460, %v4456
        %v4505 = vpack.c.bf16 %v4465, %v4461
        %v4506 = vpack.c.bf16 %v4466, %v4462
        %v4507 = vpack.c.bf16 %v4467, %v4463
        %v4508 = vpack.c.bf16 %v4468, %v4464
        %v4509 = vpack.c.bf16 %v4473, %v4469
        %v4510 = vpack.c.bf16 %v4474, %v4470
        %v4511 = vpack.c.bf16 %v4475, %v4471
        %v4512 = vpack.c.bf16 %v4476, %v4472
        %v4513 = vpack.c.bf16 %v4481, %v4477
        %v4514 = vpack.c.bf16 %v4482, %v4478
        %v4515 = vpack.c.bf16 %v4483, %v4479
        %v4516 = vpack.c.bf16 %v4484, %v4480
        %v4517 = vld [vmem:[#allocation8] sm:$0xf]
        %v4518 = vld [vmem:[#allocation8 + $0x4] sm:$0xf]
        %v4519 = vld [vmem:[#allocation8 + $0x8] sm:$0xf]
        %v4520 = vld [vmem:[#allocation8 + $0xc] sm:$0xf]
        %v4521 = vld [vmem:[#allocation8 + $0x10] sm:$0xf]
        %v4522 = vld [vmem:[#allocation8 + $0x14] sm:$0xf]
        %v4523 = vld [vmem:[#allocation8 + $0x18] sm:$0xf]
        %v4524 = vld [vmem:[#allocation8 + $0x1c] sm:$0xf]
        %v4525 = vld [vmem:[#allocation8 + $0x20] sm:$0xf]
        %v4526 = vld [vmem:[#allocation8 + $0x24] sm:$0xf]
        %v4527 = vld [vmem:[#allocation8 + $0x28] sm:$0xf]
        %v4528 = vld [vmem:[#allocation8 + $0x2c] sm:$0xf]
        %v4529 = vld [vmem:[#allocation8 + $0x30] sm:$0xf]
        %v4530 = vld [vmem:[#allocation8 + $0x34] sm:$0xf]
        %v4531 = vld [vmem:[#allocation8 + $0x38] sm:$0xf]
        %v4532 = vld [vmem:[#allocation8 + $0x3c] sm:$0xf]
        %v4533 = vld [vmem:[#allocation8 + $0x40] sm:$0xf]
        %v4534 = vld [vmem:[#allocation8 + $0x44] sm:$0xf]
        %v4535 = vld [vmem:[#allocation8 + $0x48] sm:$0xf]
        %v4536 = vld [vmem:[#allocation8 + $0x4c] sm:$0xf]
        %v4537 = vld [vmem:[#allocation8 + $0x50] sm:$0xf]
        %v4538 = vld [vmem:[#allocation8 + $0x54] sm:$0xf]
        %v4539 = vld [vmem:[#allocation8 + $0x58] sm:$0xf]
        %v4540 = vld [vmem:[#allocation8 + $0x5c] sm:$0xf]
        %v4541 = vld [vmem:[#allocation8 + $0x60] sm:$0xf]
        %v4542 = vld [vmem:[#allocation8 + $0x64] sm:$0xf]
        %v4543 = vld [vmem:[#allocation8 + $0x68] sm:$0xf]
        %v4544 = vld [vmem:[#allocation8 + $0x6c] sm:$0xf]
        %v4545 = vld [vmem:[#allocation8 + $0x70] sm:$0xf]
        %v4546 = vld [vmem:[#allocation8 + $0x74] sm:$0xf]
        %v4547 = vld [vmem:[#allocation8 + $0x78] sm:$0xf]
        %v4548 = vld [vmem:[#allocation8 + $0x7c] sm:$0xf]
        %v4549 = vld [vmem:[#allocation8 + $0x80] sm:$0xf]
        %v4550 = vld [vmem:[#allocation8 + $0x84] sm:$0xf]
        %v4551 = vld [vmem:[#allocation8 + $0x88] sm:$0xf]
        %v4552 = vld [vmem:[#allocation8 + $0x8c] sm:$0xf]
        %v4553 = vld [vmem:[#allocation8 + $0x90] sm:$0xf]
        %v4554 = vld [vmem:[#allocation8 + $0x94] sm:$0xf]
        %v4555 = vld [vmem:[#allocation8 + $0x98] sm:$0xf]
        %v4556 = vld [vmem:[#allocation8 + $0x9c] sm:$0xf]
        %v4557 = vld [vmem:[#allocation8 + $0xa0] sm:$0xf]
        %v4558 = vld [vmem:[#allocation8 + $0xa4] sm:$0xf]
        %v4559 = vld [vmem:[#allocation8 + $0xa8] sm:$0xf]
        %v4560 = vld [vmem:[#allocation8 + $0xac] sm:$0xf]
        %v4561 = vld [vmem:[#allocation8 + $0xb0] sm:$0xf]
        %v4562 = vld [vmem:[#allocation8 + $0xb4] sm:$0xf]
        %v4563 = vld [vmem:[#allocation8 + $0xb8] sm:$0xf]
        %v4564 = vld [vmem:[#allocation8 + $0xbc] sm:$0xf]
        %v4565 = vld [vmem:[#allocation8 + $0xc0] sm:$0xf]
        %v4566 = vld [vmem:[#allocation8 + $0xc4] sm:$0xf]
        %v4567 = vld [vmem:[#allocation8 + $0xc8] sm:$0xf]
        %v4568 = vld [vmem:[#allocation8 + $0xcc] sm:$0xf]
        %v4569 = vld [vmem:[#allocation8 + $0xd0] sm:$0xf]
        %v4570 = vld [vmem:[#allocation8 + $0xd4] sm:$0xf]
        %v4571 = vld [vmem:[#allocation8 + $0xd8] sm:$0xf]
        %v4572 = vld [vmem:[#allocation8 + $0xdc] sm:$0xf]
        %v4573 = vld [vmem:[#allocation8 + $0xe0] sm:$0xf]
        %v4574 = vld [vmem:[#allocation8 + $0xe4] sm:$0xf]
        %v4575 = vld [vmem:[#allocation8 + $0xe8] sm:$0xf]
        %v4576 = vld [vmem:[#allocation8 + $0xec] sm:$0xf]
        %v4577 = vld [vmem:[#allocation8 + $0xf0] sm:$0xf]
        %v4578 = vld [vmem:[#allocation8 + $0xf4] sm:$0xf]
        %v4579 = vld [vmem:[#allocation8 + $0xf8] sm:$0xf]
        %v4580 = vld [vmem:[#allocation8 + $0xfc] sm:$0xf]
        %v4581 = vld [vmem:[%s6] sm:$0x1]
        %v4583 = vlaneseq
        %v4584 = vshrl.u32 %v4583, 7
        %v4585 = vsub.s32 0, %v4584
        %v4586 = vrot.slane %v4581, %v4585
        %v4652 = vunpack.c.l.b16 %v4517
        %v4653 = vunpack.c.l.b16 %v4518
        %v4654 = vunpack.c.l.b16 %v4519
        %v4655 = vunpack.c.l.b16 %v4520
        %v4656 = vunpack.c.l.b16 %v4521
        %v4657 = vunpack.c.l.b16 %v4522
        %v4658 = vunpack.c.l.b16 %v4523
        %v4659 = vunpack.c.l.b16 %v4524
        %v4660 = vunpack.c.l.b16 %v4525
        %v4661 = vunpack.c.l.b16 %v4526
        %v4662 = vunpack.c.l.b16 %v4527
        %v4663 = vunpack.c.l.b16 %v4528
        %v4664 = vunpack.c.l.b16 %v4529
        %v4665 = vunpack.c.l.b16 %v4530
        %v4666 = vunpack.c.l.b16 %v4531
        %v4667 = vunpack.c.l.b16 %v4532
        %v4668 = vunpack.c.l.b16 %v4533
        %v4669 = vunpack.c.l.b16 %v4534
        %v4670 = vunpack.c.l.b16 %v4535
        %v4671 = vunpack.c.l.b16 %v4536
        %v4672 = vunpack.c.l.b16 %v4537
        %v4673 = vunpack.c.l.b16 %v4538
        %v4674 = vunpack.c.l.b16 %v4539
        %v4675 = vunpack.c.l.b16 %v4540
        %v4676 = vunpack.c.l.b16 %v4541
        %v4677 = vunpack.c.l.b16 %v4542
        %v4678 = vunpack.c.l.b16 %v4543
        %v4679 = vunpack.c.l.b16 %v4544
        %v4680 = vunpack.c.l.b16 %v4545
        %v4681 = vunpack.c.l.b16 %v4546
        %v4682 = vunpack.c.l.b16 %v4547
        %v4683 = vunpack.c.l.b16 %v4548
        %v4684 = vunpack.c.l.b16 %v4549
        %v4685 = vunpack.c.l.b16 %v4550
        %v4686 = vunpack.c.l.b16 %v4551
        %v4687 = vunpack.c.l.b16 %v4552
        %v4688 = vunpack.c.l.b16 %v4553
        %v4689 = vunpack.c.l.b16 %v4554
        %v4690 = vunpack.c.l.b16 %v4555
        %v4691 = vunpack.c.l.b16 %v4556
        %v4692 = vunpack.c.l.b16 %v4557
        %v4693 = vunpack.c.l.b16 %v4558
        %v4694 = vunpack.c.l.b16 %v4559
        %v4695 = vunpack.c.l.b16 %v4560
        %v4696 = vunpack.c.l.b16 %v4561
        %v4697 = vunpack.c.l.b16 %v4562
        %v4698 = vunpack.c.l.b16 %v4563
        %v4699 = vunpack.c.l.b16 %v4564
        %v4700 = vunpack.c.l.b16 %v4565
        %v4701 = vunpack.c.l.b16 %v4566
        %v4702 = vunpack.c.l.b16 %v4567
        %v4703 = vunpack.c.l.b16 %v4568
        %v4704 = vunpack.c.l.b16 %v4569
        %v4705 = vunpack.c.l.b16 %v4570
        %v4706 = vunpack.c.l.b16 %v4571
        %v4707 = vunpack.c.l.b16 %v4572
        %v4708 = vunpack.c.l.b16 %v4573
        %v4709 = vunpack.c.l.b16 %v4574
        %v4710 = vunpack.c.l.b16 %v4575
        %v4711 = vunpack.c.l.b16 %v4576
        %v4712 = vunpack.c.l.b16 %v4577
        %v4713 = vunpack.c.l.b16 %v4578
        %v4714 = vunpack.c.l.b16 %v4579
        %v4715 = vunpack.c.l.b16 %v4580
        %v4716 = vpack.c.b16 %v4653, %v4652
        %v4717 = vpack.c.b16 %v4655, %v4654
        %v4718 = vpack.c.b16 %v4657, %v4656
        %v4719 = vpack.c.b16 %v4659, %v4658
        %v4720 = vpack.c.b16 %v4661, %v4660
        %v4721 = vpack.c.b16 %v4663, %v4662
        %v4722 = vpack.c.b16 %v4665, %v4664
        %v4723 = vpack.c.b16 %v4667, %v4666
        %v4724 = vpack.c.b16 %v4669, %v4668
        %v4725 = vpack.c.b16 %v4671, %v4670
        %v4726 = vpack.c.b16 %v4673, %v4672
        %v4727 = vpack.c.b16 %v4675, %v4674
        %v4728 = vpack.c.b16 %v4677, %v4676
        %v4729 = vpack.c.b16 %v4679, %v4678
        %v4730 = vpack.c.b16 %v4681, %v4680
        %v4731 = vpack.c.b16 %v4683, %v4682
        %v4732 = vpack.c.b16 %v4685, %v4684
        %v4733 = vpack.c.b16 %v4687, %v4686
        %v4734 = vpack.c.b16 %v4689, %v4688
        %v4735 = vpack.c.b16 %v4691, %v4690
        %v4736 = vpack.c.b16 %v4693, %v4692
        %v4737 = vpack.c.b16 %v4695, %v4694
        %v4738 = vpack.c.b16 %v4697, %v4696
        %v4739 = vpack.c.b16 %v4699, %v4698
        %v4740 = vpack.c.b16 %v4701, %v4700
        %v4741 = vpack.c.b16 %v4703, %v4702
        %v4742 = vpack.c.b16 %v4705, %v4704
        %v4743 = vpack.c.b16 %v4707, %v4706
        %v4744 = vpack.c.b16 %v4709, %v4708
        %v4745 = vpack.c.b16 %v4711, %v4710
        %v4746 = vpack.c.b16 %v4713, %v4712
        %v4747 = vpack.c.b16 %v4715, %v4714
        %4780 = vmatprep.subr.bf16.mxu0 0
        %4781 = vmatpush1.bf16.msra.mxu0 %v4723
        %4782 = vmatprep.subr.bf16.mxu0 0
        %4783 = vmatpush1.bf16.msra.mxu0 %v4722
        %4784 = vmatprep.subr.bf16.mxu0 0
        %4785 = vmatpush1.bf16.msra.mxu0 %v4721
        %4786 = vmatprep.subr.bf16.mxu0 0
        %4787 = vmatpush1.bf16.msra.mxu0 %v4720
        %4788 = vmatprep.subr.bf16.mxu0 0
        %4789 = vmatpush1.bf16.msra.mxu0 %v4719
        %4790 = vmatprep.subr.bf16.mxu0 0
        %4791 = vmatpush1.bf16.msra.mxu0 %v4718
        %4792 = vmatprep.subr.bf16.mxu0 0
        %4793 = vmatpush1.bf16.msra.mxu0 %v4717
        %4794 = vmatprep.subr.bf16.mxu0 0
        %4795 = vmatpush1.bf16.msra.mxu0 %v4716
        %4796 = vmatprep.subr.bf16.mxu0 0
        %4797 = vmatpush2.bf16.msra.mxu0 %v4731
        %4798 = vmatprep.subr.bf16.mxu0 0
        %4799 = vmatpush2.bf16.msra.mxu0 %v4730
        %4800 = vmatprep.subr.bf16.mxu0 0
        %4801 = vmatpush2.bf16.msra.mxu0 %v4729
        %4802 = vmatprep.subr.bf16.mxu0 0
        %4803 = vmatpush2.bf16.msra.mxu0 %v4728
        %4804 = vmatprep.subr.bf16.mxu0 0
        %4805 = vmatpush2.bf16.msra.mxu0 %v4727
        %4806 = vmatprep.subr.bf16.mxu0 0
        %4807 = vmatpush2.bf16.msra.mxu0 %v4726
        %4808 = vmatprep.subr.bf16.mxu0 0
        %4809 = vmatpush2.bf16.msra.mxu0 %v4725
        %4810 = vmatprep.subr.bf16.mxu0 0
        %4811 = vmatpush2.bf16.msra.mxu0 %v4724
        %4812 = vmatprep.mubr.bf16.mxu0 %v4486
        %4813 = vmatmul.mubr.bf16.gmra.mxu0 %v4485
        %v4814 = vpop.f32.mrf.mxu0
        %v4815 = vadd.f32 %v4586, %v4814
        %v4816 = vpop.f32.mrf.mxu0
        %v4817 = vpop.f32.mrf.mxu0
        %v4818 = vadd.f32 %v4586, %v4817
        %v4819 = vpop.f32.mrf.mxu0
        %4820 = vmatprep.mubr.bf16.mxu0 %v4490
        %4821 = vmatmul.mubr.bf16.gmra.mxu0 %v4489
        %v4822 = vpop.f32.mrf.mxu0
        %v4823 = vadd.f32 %v4586, %v4822
        %v4824 = vpop.f32.mrf.mxu0
        %v4825 = vpop.f32.mrf.mxu0
        %v4826 = vadd.f32 %v4586, %v4825
        %v4827 = vpop.f32.mrf.mxu0
        %4828 = vmatprep.mubr.bf16.mxu0 %v4494
        %4829 = vmatmul.mubr.bf16.gmra.mxu0 %v4493
        %v4830 = vpop.f32.mrf.mxu0
        %v4831 = vadd.f32 %v4586, %v4830
        %v4832 = vpop.f32.mrf.mxu0
        %v4833 = vpop.f32.mrf.mxu0
        %v4834 = vadd.f32 %v4586, %v4833
        %v4835 = vpop.f32.mrf.mxu0
        %4836 = vmatprep.mubr.bf16.mxu0 %v4498
        %4837 = vmatmul.mubr.bf16.gmra.mxu0 %v4497
        %v4838 = vpop.f32.mrf.mxu0
        %v4839 = vadd.f32 %v4586, %v4838
        %v4840 = vpop.f32.mrf.mxu0
        %v4841 = vpop.f32.mrf.mxu0
        %v4842 = vadd.f32 %v4586, %v4841
        %v4843 = vpop.f32.mrf.mxu0
        %4844 = vmatprep.mubr.bf16.mxu0 %v4502
        %4845 = vmatmul.mubr.bf16.gmra.mxu0 %v4501
        %v4846 = vpop.f32.mrf.mxu0
        %v4847 = vadd.f32 %v4586, %v4846
        %v4848 = vpop.f32.mrf.mxu0
        %v4849 = vpop.f32.mrf.mxu0
        %v4850 = vadd.f32 %v4586, %v4849
        %v4851 = vpop.f32.mrf.mxu0
        %4852 = vmatprep.mubr.bf16.mxu0 %v4506
        %4853 = vmatmul.mubr.bf16.gmra.mxu0 %v4505
        %v4854 = vpop.f32.mrf.mxu0
        %v4855 = vadd.f32 %v4586, %v4854
        %v4856 = vpop.f32.mrf.mxu0
        %v4857 = vpop.f32.mrf.mxu0
        %v4858 = vadd.f32 %v4586, %v4857
        %v4859 = vpop.f32.mrf.mxu0
        %4860 = vmatprep.mubr.bf16.mxu0 %v4510
        %4861 = vmatmul.mubr.bf16.gmra.mxu0 %v4509
        %v4862 = vpop.f32.mrf.mxu0
        %v4863 = vadd.f32 %v4586, %v4862
        %v4864 = vpop.f32.mrf.mxu0
        %v4865 = vpop.f32.mrf.mxu0
        %v4866 = vadd.f32 %v4586, %v4865
        %v4867 = vpop.f32.mrf.mxu0
        %4868 = vmatprep.mubr.bf16.mxu0 %v4514
        %4869 = vmatmul.mubr.bf16.gmra.mxu0 %v4513
        %v4870 = vpop.f32.mrf.mxu0
        %v4871 = vadd.f32 %v4586, %v4870
        %v4872 = vpop.f32.mrf.mxu0
        %v4873 = vpop.f32.mrf.mxu0
        %v4874 = vadd.f32 %v4586, %v4873
        %v4875 = vpop.f32.mrf.mxu0
        %4876 = vdwg.mxu0
        %4877 = vmatprep.subr.bf16.mxu0 0
        %4878 = vmatpush1.bf16.msra.mxu0 %v4739
        %4879 = vmatprep.subr.bf16.mxu0 0
        %4880 = vmatpush1.bf16.msra.mxu0 %v4738
        %4881 = vmatprep.subr.bf16.mxu0 0
        %4882 = vmatpush1.bf16.msra.mxu0 %v4737
        %4883 = vmatprep.subr.bf16.mxu0 0
        %4884 = vmatpush1.bf16.msra.mxu0 %v4736
        %4885 = vmatprep.subr.bf16.mxu0 0
        %4886 = vmatpush1.bf16.msra.mxu0 %v4735
        %4887 = vmatprep.subr.bf16.mxu0 0
        %4888 = vmatpush1.bf16.msra.mxu0 %v4734
        %4889 = vmatprep.subr.bf16.mxu0 0
        %4890 = vmatpush1.bf16.msra.mxu0 %v4733
        %4891 = vmatprep.subr.bf16.mxu0 0
        %4892 = vmatpush1.bf16.msra.mxu0 %v4732
        %4893 = vmatprep.subr.bf16.mxu0 0
        %4894 = vmatpush2.bf16.msra.mxu0 %v4747
        %4895 = vmatprep.subr.bf16.mxu0 0
        %4896 = vmatpush2.bf16.msra.mxu0 %v4746
        %4897 = vmatprep.subr.bf16.mxu0 0
        %4898 = vmatpush2.bf16.msra.mxu0 %v4745
        %4899 = vmatprep.subr.bf16.mxu0 0
        %4900 = vmatpush2.bf16.msra.mxu0 %v4744
        %4901 = vmatprep.subr.bf16.mxu0 0
        %4902 = vmatpush2.bf16.msra.mxu0 %v4743
        %4903 = vmatprep.subr.bf16.mxu0 0
        %4904 = vmatpush2.bf16.msra.mxu0 %v4742
        %4905 = vmatprep.subr.bf16.mxu0 0
        %4906 = vmatpush2.bf16.msra.mxu0 %v4741
        %4907 = vmatprep.subr.bf16.mxu0 0
        %4908 = vmatpush2.bf16.msra.mxu0 %v4740
        %4909 = vmatprep.mubr.bf16.mxu0 %v4488
        %4910 = vmatmul.mubr.bf16.gmra.mxu0 %v4487
        %v4911 = vpop.f32.mrf.mxu0
        %v4912 = vadd.f32 %v4815, %v4911
        %v4913 = vpop.f32.mrf.mxu0
        %v4914 = vpop.f32.mrf.mxu0
        %v4915 = vadd.f32 %v4818, %v4914
        %v4916 = vpop.f32.mrf.mxu0
        %4917 = vmatprep.mubr.bf16.mxu0 %v4492
        %4918 = vmatmul.mubr.bf16.gmra.mxu0 %v4491
        %v4919 = vpop.f32.mrf.mxu0
        %v4920 = vadd.f32 %v4823, %v4919
        %v4921 = vpop.f32.mrf.mxu0
        %v4922 = vpop.f32.mrf.mxu0
        %v4923 = vadd.f32 %v4826, %v4922
        %v4924 = vpop.f32.mrf.mxu0
        %4925 = vmatprep.mubr.bf16.mxu0 %v4496
        %4926 = vmatmul.mubr.bf16.gmra.mxu0 %v4495
        %v4927 = vpop.f32.mrf.mxu0
        %v4928 = vadd.f32 %v4831, %v4927
        %v4929 = vpop.f32.mrf.mxu0
        %v4930 = vpop.f32.mrf.mxu0
        %v4931 = vadd.f32 %v4834, %v4930
        %v4932 = vpop.f32.mrf.mxu0
        %4933 = vmatprep.mubr.bf16.mxu0 %v4500
        %4934 = vmatmul.mubr.bf16.gmra.mxu0 %v4499
        %v4935 = vpop.f32.mrf.mxu0
        %v4936 = vadd.f32 %v4839, %v4935
        %v4937 = vpop.f32.mrf.mxu0
        %v4938 = vpop.f32.mrf.mxu0
        %v4939 = vadd.f32 %v4842, %v4938
        %v4940 = vpop.f32.mrf.mxu0
        %4941 = vmatprep.mubr.bf16.mxu0 %v4504
        %4942 = vmatmul.mubr.bf16.gmra.mxu0 %v4503
        %v4943 = vpop.f32.mrf.mxu0
        %v4944 = vadd.f32 %v4847, %v4943
        %v4945 = vpop.f32.mrf.mxu0
        %v4946 = vpop.f32.mrf.mxu0
        %v4947 = vadd.f32 %v4850, %v4946
        %v4948 = vpop.f32.mrf.mxu0
        %4949 = vmatprep.mubr.bf16.mxu0 %v4508
        %4950 = vmatmul.mubr.bf16.gmra.mxu0 %v4507
        %v4951 = vpop.f32.mrf.mxu0
        %v4952 = vadd.f32 %v4855, %v4951
        %v4953 = vpop.f32.mrf.mxu0
        %v4954 = vpop.f32.mrf.mxu0
        %v4955 = vadd.f32 %v4858, %v4954
        %v4956 = vpop.f32.mrf.mxu0
        %4957 = vmatprep.mubr.bf16.mxu0 %v4512
        %4958 = vmatmul.mubr.bf16.gmra.mxu0 %v4511
        %v4959 = vpop.f32.mrf.mxu0
        %v4960 = vadd.f32 %v4863, %v4959
        %v4961 = vpop.f32.mrf.mxu0
        %v4962 = vpop.f32.mrf.mxu0
        %v4963 = vadd.f32 %v4866, %v4962
        %v4964 = vpop.f32.mrf.mxu0
        %4965 = vmatprep.mubr.bf16.mxu0 %v4516
        %4966 = vmatmul.mubr.bf16.gmra.mxu0 %v4515
        %v4967 = vpop.f32.mrf.mxu0
        %v4968 = vadd.f32 %v4871, %v4967
        %v4969 = vpop.f32.mrf.mxu0
        %v4970 = vpop.f32.mrf.mxu0
        %v4971 = vadd.f32 %v4874, %v4970
        %v4972 = vpop.f32.mrf.mxu0
        %4973 = vdwg.mxu0
        %v4974 = vmax.f32 %v4912, 0.0
        %v4975 = vmax.f32 %v4915, 0.0
        %v4976 = vmax.f32 %v4920, 0.0
        %v4977 = vmax.f32 %v4923, 0.0
        %v4978 = vmax.f32 %v4928, 0.0
        %v4979 = vmax.f32 %v4931, 0.0
        %v4980 = vmax.f32 %v4936, 0.0
        %v4981 = vmax.f32 %v4939, 0.0
        %v4982 = vmax.f32 %v4944, 0.0
        %v4983 = vmax.f32 %v4947, 0.0
        %v4984 = vmax.f32 %v4952, 0.0
        %v4985 = vmax.f32 %v4955, 0.0
        %v4986 = vmax.f32 %v4960, 0.0
        %v4987 = vmax.f32 %v4963, 0.0
        %v4988 = vmax.f32 %v4968, 0.0
        %v4989 = vmax.f32 %v4971, 0.0
        %v4990 = vpack.c.bf16 %v4975, %v4974
        %v4991 = vpack.c.bf16 %v4977, %v4976
        %v4992 = vpack.c.bf16 %v4979, %v4978
        %v4993 = vpack.c.bf16 %v4981, %v4980
        %v4994 = vpack.c.bf16 %v4983, %v4982
        %v4995 = vpack.c.bf16 %v4985, %v4984
        %v4996 = vpack.c.bf16 %v4987, %v4986
        %v4997 = vpack.c.bf16 %v4989, %v4988
        %v4998 = vld [vmem:[%s7] sm:$0xf]
        %v4999 = vld [vmem:[%s7 + $0x4] sm:$0xf]
        %v5000 = vld [vmem:[%s7 + $0x8] sm:$0xf]
        %v5001 = vld [vmem:[%s7 + $0xc] sm:$0xf]
        %v5002 = vld [vmem:[%s7 + $0x10] sm:$0xf]
        %v5003 = vld [vmem:[%s7 + $0x14] sm:$0xf]
        %v5004 = vld [vmem:[%s7 + $0x18] sm:$0xf]
        %v5005 = vld [vmem:[%s7 + $0x1c] sm:$0xf]
        %v5006 = vld [vmem:[%s7 + $0x20] sm:$0xf]
        %v5007 = vld [vmem:[%s7 + $0x24] sm:$0xf]
        %v5008 = vld [vmem:[%s7 + $0x28] sm:$0xf]
        %v5009 = vld [vmem:[%s7 + $0x2c] sm:$0xf]
        %v5010 = vld [vmem:[%s7 + $0x30] sm:$0xf]
        %v5011 = vld [vmem:[%s7 + $0x34] sm:$0xf]
        %v5012 = vld [vmem:[%s7 + $0x38] sm:$0xf]
        %v5013 = vld [vmem:[%s7 + $0x3c] sm:$0xf]
        %v5014 = vld [vmem:[%s8] sm:$0x1]
        %v5016 = vlaneseq
        %v5017 = vshrl.u32 %v5016, 7
        %v5018 = vsub.s32 0, %v5017
        %v5019 = vrot.slane %v5014, %v5018
        %v5037 = vunpack.c.l.b16 %v4998
        %v5038 = vunpack.c.l.b16 %v4999
        %v5039 = vunpack.c.l.b16 %v5000
        %v5040 = vunpack.c.l.b16 %v5001
        %v5041 = vunpack.c.l.b16 %v5002
        %v5042 = vunpack.c.l.b16 %v5003
        %v5043 = vunpack.c.l.b16 %v5004
        %v5044 = vunpack.c.l.b16 %v5005
        %v5045 = vunpack.c.l.b16 %v5006
        %v5046 = vunpack.c.l.b16 %v5007
        %v5047 = vunpack.c.l.b16 %v5008
        %v5048 = vunpack.c.l.b16 %v5009
        %v5049 = vunpack.c.l.b16 %v5010
        %v5050 = vunpack.c.l.b16 %v5011
        %v5051 = vunpack.c.l.b16 %v5012
        %v5052 = vunpack.c.l.b16 %v5013
        %v5053 = vpack.c.b16 %v5038, %v5037
        %v5054 = vpack.c.b16 %v5040, %v5039
        %v5055 = vpack.c.b16 %v5042, %v5041
        %v5056 = vpack.c.b16 %v5044, %v5043
        %v5057 = vpack.c.b16 %v5046, %v5045
        %v5058 = vpack.c.b16 %v5048, %v5047
        %v5059 = vpack.c.b16 %v5050, %v5049
        %v5060 = vpack.c.b16 %v5052, %v5051
        %5069 = vmatprep.subr.bf16.mxu0 0
        %5070 = vmatpush1.bf16.msra.mxu0 %v5060
        %5071 = vmatprep.subr.bf16.mxu0 0
        %5072 = vmatpush1.bf16.msra.mxu0 %v5059
        %5073 = vmatprep.subr.bf16.mxu0 0
        %5074 = vmatpush1.bf16.msra.mxu0 %v5058
        %5075 = vmatprep.subr.bf16.mxu0 0
        %5076 = vmatpush1.bf16.msra.mxu0 %v5057
        %5077 = vmatprep.subr.bf16.mxu0 0
        %5078 = vmatpush1.bf16.msra.mxu0 %v5056
        %5079 = vmatprep.subr.bf16.mxu0 0
        %5080 = vmatpush1.bf16.msra.mxu0 %v5055
        %5081 = vmatprep.subr.bf16.mxu0 0
        %5082 = vmatpush1.bf16.msra.mxu0 %v5054
        %5083 = vmatprep.subr.bf16.mxu0 0
        %5084 = vmatpush1.bf16.msra.mxu0 %v5053
        %5085 = vmatprep.subr.bf16.mxu0 0
        %5086 = vmatpush2.bf16.msra.mxu0 0
        %5087 = vmatprep.subr.bf16.mxu0 0
        %5088 = vmatpush2.bf16.msra.mxu0 0
        %5089 = vmatprep.subr.bf16.mxu0 0
        %5090 = vmatpush2.bf16.msra.mxu0 0
        %5091 = vmatprep.subr.bf16.mxu0 0
        %5092 = vmatpush2.bf16.msra.mxu0 0
        %5093 = vmatprep.subr.bf16.mxu0 0
        %5094 = vmatpush2.bf16.msra.mxu0 0
        %5095 = vmatprep.subr.bf16.mxu0 0
        %5096 = vmatpush2.bf16.msra.mxu0 0
        %5097 = vmatprep.subr.bf16.mxu0 0
        %5098 = vmatpush2.bf16.msra.mxu0 0
        %5099 = vmatprep.subr.bf16.mxu0 0
        %5100 = vmatpush2.bf16.msra.mxu0 0
        %5101 = vmatprep.mubr.bf16.mxu0 0
        %5102 = vmatmul.mubr.bf16.gmra.mxu0 %v4990
        %v5103 = vpop.f32.mrf.mxu0
        %v5104 = vadd.f32 %v5019, %v5103
        %v5105 = vpop.f32.mrf.mxu0
        %v5106 = vpop.f32.mrf.mxu0
        %v5107 = vadd.f32 %v5019, %v5106
        %v5108 = vpop.f32.mrf.mxu0
        %5109 = vmatprep.mubr.bf16.mxu0 0
        %5110 = vmatmul.mubr.bf16.gmra.mxu0 %v4991
        %v5111 = vpop.f32.mrf.mxu0
        %v5112 = vadd.f32 %v5019, %v5111
        %v5113 = vpop.f32.mrf.mxu0
        %v5114 = vpop.f32.mrf.mxu0
        %v5115 = vadd.f32 %v5019, %v5114
        %v5116 = vpop.f32.mrf.mxu0
        %5117 = vmatprep.mubr.bf16.mxu0 0
        %5118 = vmatmul.mubr.bf16.gmra.mxu0 %v4992
        %v5119 = vpop.f32.mrf.mxu0
        %v5120 = vadd.f32 %v5019, %v5119
        %v5121 = vpop.f32.mrf.mxu0
        %v5122 = vpop.f32.mrf.mxu0
        %v5123 = vadd.f32 %v5019, %v5122
        %v5124 = vpop.f32.mrf.mxu0
        %5125 = vmatprep.mubr.bf16.mxu0 0
        %5126 = vmatmul.mubr.bf16.gmra.mxu0 %v4993
        %v5127 = vpop.f32.mrf.mxu0
        %v5128 = vadd.f32 %v5019, %v5127
        %v5129 = vpop.f32.mrf.mxu0
        %v5130 = vpop.f32.mrf.mxu0
        %v5131 = vadd.f32 %v5019, %v5130
        %v5132 = vpop.f32.mrf.mxu0
        %5133 = vmatprep.mubr.bf16.mxu0 0
        %5134 = vmatmul.mubr.bf16.gmra.mxu0 %v4994
        %v5135 = vpop.f32.mrf.mxu0
        %v5136 = vadd.f32 %v5019, %v5135
        %v5137 = vpop.f32.mrf.mxu0
        %v5138 = vpop.f32.mrf.mxu0
        %v5139 = vadd.f32 %v5019, %v5138
        %v5140 = vpop.f32.mrf.mxu0
        %5141 = vmatprep.mubr.bf16.mxu0 0
        %5142 = vmatmul.mubr.bf16.gmra.mxu0 %v4995
        %v5143 = vpop.f32.mrf.mxu0
        %v5144 = vadd.f32 %v5019, %v5143
        %v5145 = vpop.f32.mrf.mxu0
        %v5146 = vpop.f32.mrf.mxu0
        %v5147 = vadd.f32 %v5019, %v5146
        %v5148 = vpop.f32.mrf.mxu0
        %5149 = vmatprep.mubr.bf16.mxu0 0
        %5150 = vmatmul.mubr.bf16.gmra.mxu0 %v4996
        %v5151 = vpop.f32.mrf.mxu0
        %v5152 = vadd.f32 %v5019, %v5151
        %v5153 = vpop.f32.mrf.mxu0
        %v5154 = vpop.f32.mrf.mxu0
        %v5155 = vadd.f32 %v5019, %v5154
        %v5156 = vpop.f32.mrf.mxu0
        %5157 = vmatprep.mubr.bf16.mxu0 0
        %5158 = vmatmul.mubr.bf16.gmra.mxu0 %v4997
        %v5159 = vpop.f32.mrf.mxu0
        %v5160 = vadd.f32 %v5019, %v5159
        %v5161 = vpop.f32.mrf.mxu0
        %v5162 = vpop.f32.mrf.mxu0
        %v5163 = vadd.f32 %v5019, %v5162
        %v5164 = vpop.f32.mrf.mxu0
        %5165 = vdwg.mxu0
        %v5166 = vmax.f32 %v5104, 0.0
        %v5167 = vmax.f32 %v5107, 0.0
        %v5168 = vmax.f32 %v5112, 0.0
        %v5169 = vmax.f32 %v5115, 0.0
        %v5170 = vmax.f32 %v5120, 0.0
        %v5171 = vmax.f32 %v5123, 0.0
        %v5172 = vmax.f32 %v5128, 0.0
        %v5173 = vmax.f32 %v5131, 0.0
        %v5174 = vmax.f32 %v5136, 0.0
        %v5175 = vmax.f32 %v5139, 0.0
        %v5176 = vmax.f32 %v5144, 0.0
        %v5177 = vmax.f32 %v5147, 0.0
        %v5178 = vmax.f32 %v5152, 0.0
        %v5179 = vmax.f32 %v5155, 0.0
        %v5180 = vmax.f32 %v5160, 0.0
        %v5181 = vmax.f32 %v5163, 0.0
        %v5182 = vld [vmem:[%s9] sm:$0x1]
        %v5184 = vlaneseq
        %v5185 = vshrl.u32 %v5184, 7
        %v5186 = vsub.s32 0, %v5185
        %v5187 = vrot.slane %v5182, %v5186
        %v5189 = vmul.f32 %v5166, %v5187
        %v5190 = vmul.f32 %v5167, %v5187
        %v5191 = vmul.f32 %v5168, %v5187
        %v5192 = vmul.f32 %v5169, %v5187
        %v5193 = vmul.f32 %v5170, %v5187
        %v5194 = vmul.f32 %v5171, %v5187
        %v5195 = vmul.f32 %v5172, %v5187
        %v5196 = vmul.f32 %v5173, %v5187
        %v5197 = vmul.f32 %v5174, %v5187
        %v5198 = vmul.f32 %v5175, %v5187
        %v5199 = vmul.f32 %v5176, %v5187
        %v5200 = vmul.f32 %v5177, %v5187
        %v5201 = vmul.f32 %v5178, %v5187
        %v5202 = vmul.f32 %v5179, %v5187
        %v5203 = vmul.f32 %v5180, %v5187
        %v5204 = vmul.f32 %v5181, %v5187
        %vm5205 = vcmask 261120
        %v5206 = vsel %vm5205, %v5189, 0.0
        %5207 = vadd.xlane.f32.xlu0 %v5206
        %v5208 = vpop.xlane.xlu0 %5207
        %v5209 = vsel %vm5205, %v5190, 0.0
        %5210 = vadd.xlane.f32.xlu0 %v5209
        %v5211 = vpop.xlane.xlu0 %5210
        %v5212 = vsel %vm5205, %v5191, 0.0
        %5213 = vadd.xlane.f32.xlu0 %v5212
        %v5214 = vpop.xlane.xlu0 %5213
        %v5215 = vsel %vm5205, %v5192, 0.0
        %5216 = vadd.xlane.f32.xlu0 %v5215
        %v5217 = vpop.xlane.xlu0 %5216
        %v5218 = vsel %vm5205, %v5193, 0.0
        %5219 = vadd.xlane.f32.xlu0 %v5218
        %v5220 = vpop.xlane.xlu0 %5219
        %v5221 = vsel %vm5205, %v5194, 0.0
        %5222 = vadd.xlane.f32.xlu0 %v5221
        %v5223 = vpop.xlane.xlu0 %5222
        %v5224 = vsel %vm5205, %v5195, 0.0
        %5225 = vadd.xlane.f32.xlu0 %v5224
        %v5226 = vpop.xlane.xlu0 %5225
        %v5227 = vsel %vm5205, %v5196, 0.0
        %5228 = vadd.xlane.f32.xlu0 %v5227
        %v5229 = vpop.xlane.xlu0 %5228
        %v5230 = vsel %vm5205, %v5197, 0.0
        %5231 = vadd.xlane.f32.xlu0 %v5230
        %v5232 = vpop.xlane.xlu0 %5231
        %v5233 = vsel %vm5205, %v5198, 0.0
        %5234 = vadd.xlane.f32.xlu0 %v5233
        %v5235 = vpop.xlane.xlu0 %5234
        %v5236 = vsel %vm5205, %v5199, 0.0
        %5237 = vadd.xlane.f32.xlu0 %v5236
        %v5238 = vpop.xlane.xlu0 %5237
        %v5239 = vsel %vm5205, %v5200, 0.0
        %5240 = vadd.xlane.f32.xlu0 %v5239
        %v5241 = vpop.xlane.xlu0 %5240
        %v5242 = vsel %vm5205, %v5201, 0.0
        %5243 = vadd.xlane.f32.xlu0 %v5242
        %v5244 = vpop.xlane.xlu0 %5243
        %v5245 = vsel %vm5205, %v5202, 0.0
        %5246 = vadd.xlane.f32.xlu0 %v5245
        %v5247 = vpop.xlane.xlu0 %5246
        %v5248 = vsel %vm5205, %v5203, 0.0
        %5249 = vadd.xlane.f32.xlu0 %v5248
        %v5250 = vpop.xlane.xlu0 %5249
        %v5251 = vsel %vm5205, %v5204, 0.0
        %5252 = vadd.xlane.f32.xlu0 %v5251
        %v5253 = vpop.xlane.xlu0 %5252
        %v5254 = vld [vmem:[#allocation2] sm:$0x1]
        %v5256 = vlaneseq
        %v5257 = vshrl.u32 %v5256, 7
        %v5258 = vsub.s32 0, %v5257
        %v5259 = vrot.slane %v5254, %v5258
        %v5261 = vadd.f32 %v5208, %v5259
        %v5262 = vadd.f32 %v5211, %v5259
        %v5263 = vadd.f32 %v5214, %v5259
        %v5264 = vadd.f32 %v5217, %v5259
        %v5265 = vadd.f32 %v5220, %v5259
        %v5266 = vadd.f32 %v5223, %v5259
        %v5267 = vadd.f32 %v5226, %v5259
        %v5268 = vadd.f32 %v5229, %v5259
        %v5269 = vadd.f32 %v5232, %v5259
        %v5270 = vadd.f32 %v5235, %v5259
        %v5271 = vadd.f32 %v5238, %v5259
        %v5272 = vadd.f32 %v5241, %v5259
        %v5273 = vadd.f32 %v5244, %v5259
        %v5274 = vadd.f32 %v5247, %v5259
        %v5275 = vadd.f32 %v5250, %v5259
        %v5276 = vadd.f32 %v5253, %v5259
        %vm5277 = vcmask 7168
        %5278 = vst.msk [vmem:[%s454] sm:$0xff] %vm5277, %v5261
        %5279 = vst.msk [vmem:[%s454 + $0x8] sm:$0xff] %vm5277, %v5262
        %5280 = vst.msk [vmem:[%s454 + $0x10] sm:$0xff] %vm5277, %v5263
        %5281 = vst.msk [vmem:[%s454 + $0x18] sm:$0xff] %vm5277, %v5264
        %5282 = vst.msk [vmem:[%s454 + $0x20] sm:$0xff] %vm5277, %v5265
        %5283 = vst.msk [vmem:[%s454 + $0x28] sm:$0xff] %vm5277, %v5266
        %5284 = vst.msk [vmem:[%s454 + $0x30] sm:$0xff] %vm5277, %v5267
        %5285 = vst.msk [vmem:[%s454 + $0x38] sm:$0xff] %vm5277, %v5268
        %5286 = vst.msk [vmem:[%s454 + $0x40] sm:$0xff] %vm5277, %v5269
        %5287 = vst.msk [vmem:[%s454 + $0x48] sm:$0xff] %vm5277, %v5270
        %5288 = vst.msk [vmem:[%s454 + $0x50] sm:$0xff] %vm5277, %v5271
        %5289 = vst.msk [vmem:[%s454 + $0x58] sm:$0xff] %vm5277, %v5272
        %5290 = vst.msk [vmem:[%s454 + $0x60] sm:$0xff] %vm5277, %v5273
        %5291 = vst.msk [vmem:[%s454 + $0x68] sm:$0xff] %vm5277, %v5274
        %5292 = vst.msk [vmem:[%s454 + $0x70] sm:$0xff] %vm5277, %v5275
        %5293 = vst.msk [vmem:[%s454 + $0x78] sm:$0xff] %vm5277, %v5276
        %s5294 = smul.u32 16, %s29
        %p5295 = scmp.lt.s32.totalorder %s5294, 31
        %s5296 = scalar_select %p5295, %s5294, 31
        %s5297 = smul.addr %s5296, 8
        %s5298 = scalar_lea.vmem %s11, %s5297
        // Predicated region
        $region81: #{tpu_custom_call.1} parent=63 // pred_check
          %p5299 = pneg %p283
        $region82: #{tpu_custom_call.1} parent=63 // pred_check_branch
          %5301 = sbr.rel (%p5299) target = $region84
        $region83: #{tpu_custom_call.1} parent=63 // pred_region
          %s5302 = smul.u32 16, %s29
        $region84: #{tpu_custom_call.1} parent=63 // pred_fallthru
          _
      $region64: #{tpu_custom_call.1} parent=5 // pred_fallthru
        _
      %p5303 = scmp.le.s32.totalorder 2, %s24
      // Predicated region
      $region85: #{tpu_custom_call.1} parent=5 // pred_check
        %p5304 = pneg %p5303
      $region86: #{tpu_custom_call.1} parent=5 // pred_check_branch
        %5306 = sbr.rel (%p5304) target = $region88
      $region87: #{tpu_custom_call.1} parent=5 // pred_region
        %s5307 = ssub.s32 %s24, 2
        // Predicated region
        $region89: #{tpu_custom_call.1} parent=87 // pred_check
          %p5308 = pneg %p289
        $region90: #{tpu_custom_call.1} parent=87 // pred_check_branch
          %5310 = sbr.rel (%p5308) target = $region92
        $region91: #{tpu_custom_call.1} parent=87 // pred_region
          %s5311 = smul.u32 16, %s30
          %p5312 = scmp.lt.s32.totalorder %s5311, 31
          %s5313 = scalar_select %p5312, %s5311, 31
          %s5314 = smul.addr %s5313, 8
          %s5315 = scalar_lea.vmem %s11, %s5314
        $region92: #{tpu_custom_call.1} parent=87 // pred_fallthru
          _
      $region88: #{tpu_custom_call.1} parent=5 // pred_fallthru
        _
    $region6: #{tpu_custom_call.1} parent=1 // loop_footer
      %s28 = sadd.s32 1, %s24
    $region7: #{tpu_custom_call.1} parent=1 // loop_footer_branch
      %23 = sbr.rel target = $region3
    $region8: #{tpu_custom_call.1} parent=1 // loop_exit
      _
    %5316 = vsyncpa [#allocation4], 1
    %s5317 = scalar_lea.sflag [#allocation4], 1
    %5318 = vsyncpa %s5317, 1
    %5319 = vsyncpa [#allocation6], 1
    %5320 = vsyncpa [#allocation9], 1

</llo_original>
